<compile_context>
chip_gen: v7x
topology: tpu7x:2x2x1
jax: 0.10.0
libtpu: 0.0.40
codegen_flags: <defaults>
</compile_context>

<pallas_src>
import jax
import jax.numpy as jnp
from jax.experimental import pallas as pl
from jax.experimental.pallas import tpu as pltpu


def _round_up(x, m):
    return (x + m - 1) // m * m


def _make_conv_bn_relu_kernel(KH, KW, stride, th_out, OW, C_pad, tn):
    """Kernel closure: implicit-im2col conv + BN (eval) + ReLU for one strip."""
    mt = th_out * OW

    def kernel(x_ref, w_ref, scale_ref, bias_ref, o_ref):
        # x_ref:     (th_in, Wp, C_pad)   bf16/f32 haloed input row strip
        # w_ref:     (KH, KW, C_pad, tn)  conv weights (BN scale NOT folded in)
        # scale_ref: (1, tn) f32          gamma / sqrt(var + eps)
        # bias_ref:  (1, tn) f32          beta - mean * scale
        # o_ref:     (mt, tn)             output tile (th_out*OW rows)
        acc = jnp.zeros((mt, tn), jnp.float32)
        for kh in range(KH):                     # static unroll over offsets
            for kw in range(KW):
                if stride == 1:
                    rows = pl.ds(kh, th_out)
                    cols = pl.ds(kw, OW)
                else:
                    rows = pl.ds(kh, th_out, stride)
                    cols = pl.ds(kw, OW, stride)
                a = x_ref[rows, cols, :]         # (th_out, OW, C_pad)
                a = a.reshape(mt, C_pad)
                acc = acc + jnp.dot(a, w_ref[kh, kw, :, :],
                                    preferred_element_type=jnp.float32)
        y = acc * scale_ref[...] + bias_ref[...]           # BN (f32 epilogue)
        o_ref[...] = jnp.maximum(y, 0.0).astype(o_ref.dtype)   # ReLU

    return kernel


def bn_conv2d_forward(x_nchw, weight_oihw, gamma, beta, running_mean,
                      running_var, *, stride, padding, eps=1e-5,
                      compute_dtype=jnp.bfloat16, out_layout="NCHW",
                      target_rows=512):
    """Conv2d(bias=False) + BatchNorm2d(eval) + ReLU; hot path in Pallas."""
    N, C, H, W = x_nchw.shape
    OC, IC, KH, KW = weight_oihw.shape
    assert IC == C, "groups != 1 not supported"   # TODO(synk): grouped conv
    s, p = stride, padding

    OH = (H + 2 * p - KH) // s + 1
    OW = (W + 2 * p - KW) // s + 1

    # ---- tile selection ----------------------------------------------------
    C_pad = _round_up(C, 8)                       # sublane-friendly contraction
    if OC > 128:                                  # 256-align for the 256-wide MXU
        OC_pad = _round_up(OC, 256)
        tn = 256
    else:
        OC_pad = 128
        tn = 128

    # output rows per strip: target ~target_rows matmul rows, keep sublane-friendly
    th_out = max(1, min(OH, max(1, target_rows // OW)))
    while (th_out * OW) % 8 != 0 and th_out < OH:
        th_out += 1
    nT = -(-OH // th_out)                         # ceil(OH / th_out)
    th_in = (th_out - 1) * s + KH                 # input rows needed per strip
    mt = th_out * OW

    # ---- glue: NHWC, bf16-first, zero pad ----------------------------------
    x = jnp.transpose(x_nchw, (0, 2, 3, 1)).astype(compute_dtype)   # NHWC
    Hp_needed = (nT * th_out - 1) * s + KH
    extra_h = max(0, Hp_needed - (H + 2 * p))
    x = jnp.pad(x, ((0, 0), (p, p + extra_h), (p, p), (0, C_pad - C)))
    Wp = W + 2 * p

    # haloed row strips [N*nT, th_in, Wp, C_pad] — ~th_in/th_out x the input,
    # instead of the KH*KW x blow-up of a materialized im2col matrix.
    strips = jnp.stack(
        [jax.lax.slice_in_dim(x, t * th_out * s, t * th_out * s + th_in, axis=1)
         for t in range(nT)], axis=1)
    strips = strips.reshape(N * nT, th_in, Wp, C_pad)

    # weight [OC, IC, KH, KW] -> [KH, KW, C_pad, OC_pad]  (raw conv weights,
    # bf16; BN scale stays in the f32 epilogue to avoid bf16 error blow-up)
    w = jnp.transpose(weight_oihw, (2, 3, 1, 0))
    w = jnp.pad(w, ((0, 0), (0, 0), (0, C_pad - C), (0, OC_pad - OC)))
    w = w.astype(compute_dtype)

    scale = (gamma / jnp.sqrt(running_var + eps)).astype(jnp.float32)   # (OC,)
    bias = beta.astype(jnp.float32) - running_mean.astype(jnp.float32) * scale
    scale = jnp.pad(scale, (0, OC_pad - OC)).reshape(1, OC_pad)
    bias = jnp.pad(bias, (0, OC_pad - OC)).reshape(1, OC_pad)

    kernel = _make_conv_bn_relu_kernel(KH, KW, s, th_out, OW, C_pad, tn)
    out_dtype = compute_dtype                     # bf16 output on the fast path

    B = N * nT
    grid = (B, OC_pad // tn)

    flops = 2 * N * OH * OW * KH * KW * C * OC
    bytes_accessed = (strips.size * strips.dtype.itemsize
                      + w.size * w.dtype.itemsize
                      + (scale.size + bias.size) * 4
                      + B * mt * OC_pad * jnp.dtype(out_dtype).itemsize)

    # rough double-buffered VMEM footprint; raise the scoped limit only if
    # needed (keep under v7x's 64 MiB physical VMEM)
    itemsize = jnp.dtype(compute_dtype).itemsize
    est_vmem = 2 * (th_in * Wp * max(C_pad, 128) * itemsize
                    + KH * KW * C_pad * tn * itemsize
                    + mt * tn * (itemsize + 4)) + 4 * tn * 4
    cp_kwargs = dict(dimension_semantics=("parallel", "parallel"))
    if est_vmem > 24 * 2**20:
        cp_kwargs["vmem_limit_bytes"] = min(int(1.5 * est_vmem), 56 * 2**20)

    out = pl.pallas_call(
        kernel,
        out_shape=jax.ShapeDtypeStruct((B, mt, OC_pad), out_dtype),
        grid=grid,
        in_specs=[
            pl.BlockSpec((None, th_in, Wp, C_pad), lambda b, j: (b, 0, 0, 0)),
            pl.BlockSpec((KH, KW, C_pad, tn), lambda b, j: (0, 0, 0, j)),
            pl.BlockSpec((1, tn), lambda b, j: (0, j)),
            pl.BlockSpec((1, tn), lambda b, j: (0, j)),
        ],
        out_specs=pl.BlockSpec((None, mt, tn), lambda b, j: (b, 0, j)),
        compiler_params=pltpu.CompilerParams(**cp_kwargs),
        cost_estimate=pl.CostEstimate(flops=flops, transcendentals=0,
                                      bytes_accessed=bytes_accessed),
    )(strips, w, scale, bias)

    # [B, mt, OC_pad] -> [N, nT*th_out, OW, OC_pad] -> drop garbage rows / pads
    out = out.reshape(N, nT * th_out, OW, OC_pad)[:, :OH, :, :OC]
    if out_layout == "NHWC":
        return out
    return jnp.transpose(out, (0, 3, 1, 2))                          # NCHW


def _reference(x, w, gamma, beta, mean, var, *, stride, padding, eps=1e-5):
    y = jax.lax.conv_general_dilated(
        x, w, window_strides=(stride, stride),
        padding=((padding, padding), (padding, padding)),
        dimension_numbers=("NCHW", "OIHW", "NCHW"))
    s = (gamma / jnp.sqrt(var + eps)).reshape(1, -1, 1, 1)
    b = (beta - mean * gamma / jnp.sqrt(var + eps)).reshape(1, -1, 1, 1)
    return jnp.maximum(y * s + b, 0.0)


if __name__ == "__main__":
    key = jax.random.PRNGKey(0)
    k1, k2, k3, k4, k5, k6 = jax.random.split(key, 6)

    # small shapes consistent with BN_Conv2d(in=4, out=8, k=3, stride=1, pad=1)
    N, C, H, W = 2, 4, 16, 16
    OC, KH, KW = 8, 3, 3
    stride, padding = 1, 1

    x = jax.random.normal(k1, (N, C, H, W), dtype=jnp.float32)
    weight = jax.random.normal(k2, (OC, C, KH, KW), dtype=jnp.float32) * 0.1
    gamma = jax.random.uniform(k3, (OC,), minval=0.5, maxval=1.5)
    beta = jax.random.normal(k4, (OC,)) * 0.1
    running_mean = jax.random.normal(k5, (OC,)) * 0.05
    running_var = jax.random.uniform(k6, (OC,), minval=0.5, maxval=1.5)

    ref = _reference(x, weight, gamma, beta, running_mean, running_var,
                     stride=stride, padding=padding)

    # 1) exact-semantics check: f32 operands / f32 output vs XLA reference
    out_f32 = bn_conv2d_forward(x, weight, gamma, beta, running_mean,
                                running_var, stride=stride, padding=padding,
                                compute_dtype=jnp.float32)
    out_f32 = jax.block_until_ready(out_f32)
    assert out_f32.shape == (N, OC, H, W)
    assert jnp.allclose(out_f32, ref, atol=1e-4, rtol=1e-4), "f32 mismatch"

    # 2) fast path: bf16 operands + bf16 output, f32 accumulate / BN epilogue
    out_bf16 = bn_conv2d_forward(x, weight, gamma, beta, running_mean,
                                 running_var, stride=stride, padding=padding)
    out_bf16 = jax.block_until_ready(out_bf16)
    assert out_bf16.shape == (N, OC, H, W)
    assert jnp.allclose(out_bf16.astype(jnp.float32), ref,
                        atol=1e-1, rtol=1e-1), "bf16 mismatch"

    print("KERNEL_OK")
</pallas_src>

<mosaic_0001>
module attributes {stable_mosaic.version = 11 : i64} {
  func.func @kernel(%arg0: i32, %arg1: i32, %arg2: memref<1x18x18x8xf32, #tpu.memory_space<vmem>>, %arg3: memref<3x3x8x128xf32, #tpu.memory_space<vmem>>, %arg4: memref<1x128xf32, #tpu.memory_space<vmem>>, %arg5: memref<1x128xf32, #tpu.memory_space<vmem>>, %arg6: memref<1x256x128xf32, #tpu.memory_space<vmem>>) attributes {dimension_semantics = [#tpu.dimension_semantics<parallel>, #tpu.dimension_semantics<parallel>], iteration_bounds = array<i64: 2, 1>, scalar_prefetch = 0 : i64, scratch_operands = 0 : i64, tpu.core_type = #tpu.core_type<tc>, window_params = [{transform_indices = @transform_0, window_bounds = array<i64: 1, 18, 18, 8>}, {transform_indices = @transform_1, window_bounds = array<i64: 3, 3, 8, 128>}, {transform_indices = @transform_2, window_bounds = array<i64: 1, 128>}, {transform_indices = @transform_3, window_bounds = array<i64: 1, 128>}, {transform_indices = @transform_4, window_bounds = array<i64: 1, 256, 128>}]} {
    %cst = arith.constant 0.000000e+00 : f32
    %0 = vector.broadcast %cst : f32 to vector<256x128xf32>
    %c0 = arith.constant 0 : index
    %c0_0 = arith.constant 0 : index
    %c0_1 = arith.constant 0 : index
    %c0_2 = arith.constant 0 : index
    %1 = vector.load %arg2[%c0, %c0_0, %c0_1, %c0_2] : memref<1x18x18x8xf32, #tpu.memory_space<vmem>>, vector<1x16x16x8xf32>
    %2 = vector.shape_cast %1 : vector<1x16x16x8xf32> to vector<16x16x8xf32>
    %3 = vector.shape_cast %2 : vector<16x16x8xf32> to vector<256x8xf32>
    %c0_3 = arith.constant 0 : index
    %c0_4 = arith.constant 0 : index
    %c0_5 = arith.constant 0 : index
    %c0_6 = arith.constant 0 : index
    %4 = vector.load %arg3[%c0_3, %c0_4, %c0_5, %c0_6] : memref<3x3x8x128xf32, #tpu.memory_space<vmem>>, vector<1x1x8x128xf32>
    %5 = vector.shape_cast %4 : vector<1x1x8x128xf32> to vector<8x128xf32>
    %cst_7 = arith.constant dense<0.000000e+00> : vector<256x128xf32>
    %6 = tpu.matmul %3, %5, %cst_7 {dimension_numbers = #tpu.dot_dimension_numbers<[1], [0], [0], [1], [0, 0, 1, 1], [], []>} : vector<256x8xf32>, vector<8x128xf32>, vector<256x128xf32> -> vector<256x128xf32>
    %7 = arith.addf %0, %6 : vector<256x128xf32>
    %c0_8 = arith.constant 0 : index
    %c0_9 = arith.constant 0 : index
    %c1 = arith.constant 1 : index
    %c0_10 = arith.constant 0 : index
    %8 = vector.load %arg2[%c0_8, %c0_9, %c1, %c0_10] : memref<1x18x18x8xf32, #tpu.memory_space<vmem>>, vector<1x16x16x8xf32>
    %9 = vector.shape_cast %8 : vector<1x16x16x8xf32> to vector<16x16x8xf32>
    %10 = vector.shape_cast %9 : vector<16x16x8xf32> to vector<256x8xf32>
    %c0_11 = arith.constant 0 : index
    %c1_12 = arith.constant 1 : index
    %c0_13 = arith.constant 0 : index
    %c0_14 = arith.constant 0 : index
    %11 = vector.load %arg3[%c0_11, %c1_12, %c0_13, %c0_14] : memref<3x3x8x128xf32, #tpu.memory_space<vmem>>, vector<1x1x8x128xf32>
    %12 = vector.shape_cast %11 : vector<1x1x8x128xf32> to vector<8x128xf32>
    %cst_15 = arith.constant dense<0.000000e+00> : vector<256x128xf32>
    %13 = tpu.matmul %10, %12, %cst_15 {dimension_numbers = #tpu.dot_dimension_numbers<[1], [0], [0], [1], [0, 0, 1, 1], [], []>} : vector<256x8xf32>, vector<8x128xf32>, vector<256x128xf32> -> vector<256x128xf32>
    %14 = arith.addf %7, %13 : vector<256x128xf32>
    %c0_16 = arith.constant 0 : index
    %c0_17 = arith.constant 0 : index
    %c2 = arith.constant 2 : index
    %c0_18 = arith.constant 0 : index
    %15 = vector.load %arg2[%c0_16, %c0_17, %c2, %c0_18] : memref<1x18x18x8xf32, #tpu.memory_space<vmem>>, vector<1x16x16x8xf32>
    %16 = vector.shape_cast %15 : vector<1x16x16x8xf32> to vector<16x16x8xf32>
    %17 = vector.shape_cast %16 : vector<16x16x8xf32> to vector<256x8xf32>
    %c0_19 = arith.constant 0 : index
    %c2_20 = arith.constant 2 : index
    %c0_21 = arith.constant 0 : index
    %c0_22 = arith.constant 0 : index
    %18 = vector.load %arg3[%c0_19, %c2_20, %c0_21, %c0_22] : memref<3x3x8x128xf32, #tpu.memory_space<vmem>>, vector<1x1x8x128xf32>
    %19 = vector.shape_cast %18 : vector<1x1x8x128xf32> to vector<8x128xf32>
    %cst_23 = arith.constant dense<0.000000e+00> : vector<256x128xf32>
    %20 = tpu.matmul %17, %19, %cst_23 {dimension_numbers = #tpu.dot_dimension_numbers<[1], [0], [0], [1], [0, 0, 1, 1], [], []>} : vector<256x8xf32>, vector<8x128xf32>, vector<256x128xf32> -> vector<256x128xf32>
    %21 = arith.addf %14, %20 : vector<256x128xf32>
    %c0_24 = arith.constant 0 : index
    %c1_25 = arith.constant 1 : index
    %c0_26 = arith.constant 0 : index
    %c0_27 = arith.constant 0 : index
    %22 = vector.load %arg2[%c0_24, %c1_25, %c0_26, %c0_27] : memref<1x18x18x8xf32, #tpu.memory_space<vmem>>, vector<1x16x16x8xf32>
    %23 = vector.shape_cast %22 : vector<1x16x16x8xf32> to vector<16x16x8xf32>
    %24 = vector.shape_cast %23 : vector<16x16x8xf32> to vector<256x8xf32>
    %c1_28 = arith.constant 1 : index
    %c0_29 = arith.constant 0 : index
    %c0_30 = arith.constant 0 : index
    %c0_31 = arith.constant 0 : index
    %25 = vector.load %arg3[%c1_28, %c0_29, %c0_30, %c0_31] : memref<3x3x8x128xf32, #tpu.memory_space<vmem>>, vector<1x1x8x128xf32>
    %26 = vector.shape_cast %25 : vector<1x1x8x128xf32> to vector<8x128xf32>
    %cst_32 = arith.constant dense<0.000000e+00> : vector<256x128xf32>
    %27 = tpu.matmul %24, %26, %cst_32 {dimension_numbers = #tpu.dot_dimension_numbers<[1], [0], [0], [1], [0, 0, 1, 1], [], []>} : vector<256x8xf32>, vector<8x128xf32>, vector<256x128xf32> -> vector<256x128xf32>
    %28 = arith.addf %21, %27 : vector<256x128xf32>
    %c0_33 = arith.constant 0 : index
    %c1_34 = arith.constant 1 : index
    %c1_35 = arith.constant 1 : index
    %c0_36 = arith.constant 0 : index
    %29 = vector.load %arg2[%c0_33, %c1_34, %c1_35, %c0_36] : memref<1x18x18x8xf32, #tpu.memory_space<vmem>>, vector<1x16x16x8xf32>
    %30 = vector.shape_cast %29 : vector<1x16x16x8xf32> to vector<16x16x8xf32>
    %31 = vector.shape_cast %30 : vector<16x16x8xf32> to vector<256x8xf32>
    %c1_37 = arith.constant 1 : index
    %c1_38 = arith.constant 1 : index
    %c0_39 = arith.constant 0 : index
    %c0_40 = arith.constant 0 : index
    %32 = vector.load %arg3[%c1_37, %c1_38, %c0_39, %c0_40] : memref<3x3x8x128xf32, #tpu.memory_space<vmem>>, vector<1x1x8x128xf32>
    %33 = vector.shape_cast %32 : vector<1x1x8x128xf32> to vector<8x128xf32>
    %cst_41 = arith.constant dense<0.000000e+00> : vector<256x128xf32>
    %34 = tpu.matmul %31, %33, %cst_41 {dimension_numbers = #tpu.dot_dimension_numbers<[1], [0], [0], [1], [0, 0, 1, 1], [], []>} : vector<256x8xf32>, vector<8x128xf32>, vector<256x128xf32> -> vector<256x128xf32>
    %35 = arith.addf %28, %34 : vector<256x128xf32>
    %c0_42 = arith.constant 0 : index
    %c1_43 = arith.constant 1 : index
    %c2_44 = arith.constant 2 : index
    %c0_45 = arith.constant 0 : index
    %36 = vector.load %arg2[%c0_42, %c1_43, %c2_44, %c0_45] : memref<1x18x18x8xf32, #tpu.memory_space<vmem>>, vector<1x16x16x8xf32>
    %37 = vector.shape_cast %36 : vector<1x16x16x8xf32> to vector<16x16x8xf32>
    %38 = vector.shape_cast %37 : vector<16x16x8xf32> to vector<256x8xf32>
    %c1_46 = arith.constant 1 : index
    %c2_47 = arith.constant 2 : index
    %c0_48 = arith.constant 0 : index
    %c0_49 = arith.constant 0 : index
    %39 = vector.load %arg3[%c1_46, %c2_47, %c0_48, %c0_49] : memref<3x3x8x128xf32, #tpu.memory_space<vmem>>, vector<1x1x8x128xf32>
    %40 = vector.shape_cast %39 : vector<1x1x8x128xf32> to vector<8x128xf32>
    %cst_50 = arith.constant dense<0.000000e+00> : vector<256x128xf32>
    %41 = tpu.matmul %38, %40, %cst_50 {dimension_numbers = #tpu.dot_dimension_numbers<[1], [0], [0], [1], [0, 0, 1, 1], [], []>} : vector<256x8xf32>, vector<8x128xf32>, vector<256x128xf32> -> vector<256x128xf32>
    %42 = arith.addf %35, %41 : vector<256x128xf32>
    %c0_51 = arith.constant 0 : index
    %c2_52 = arith.constant 2 : index
    %c0_53 = arith.constant 0 : index
    %c0_54 = arith.constant 0 : index
    %43 = vector.load %arg2[%c0_51, %c2_52, %c0_53, %c0_54] : memref<1x18x18x8xf32, #tpu.memory_space<vmem>>, vector<1x16x16x8xf32>
    %44 = vector.shape_cast %43 : vector<1x16x16x8xf32> to vector<16x16x8xf32>
    %45 = vector.shape_cast %44 : vector<16x16x8xf32> to vector<256x8xf32>
    %c2_55 = arith.constant 2 : index
    %c0_56 = arith.constant 0 : index
    %c0_57 = arith.constant 0 : index
    %c0_58 = arith.constant 0 : index
    %46 = vector.load %arg3[%c2_55, %c0_56, %c0_57, %c0_58] : memref<3x3x8x128xf32, #tpu.memory_space<vmem>>, vector<1x1x8x128xf32>
    %47 = vector.shape_cast %46 : vector<1x1x8x128xf32> to vector<8x128xf32>
    %cst_59 = arith.constant dense<0.000000e+00> : vector<256x128xf32>
    %48 = tpu.matmul %45, %47, %cst_59 {dimension_numbers = #tpu.dot_dimension_numbers<[1], [0], [0], [1], [0, 0, 1, 1], [], []>} : vector<256x8xf32>, vector<8x128xf32>, vector<256x128xf32> -> vector<256x128xf32>
    %49 = arith.addf %42, %48 : vector<256x128xf32>
    %c0_60 = arith.constant 0 : index
    %c2_61 = arith.constant 2 : index
    %c1_62 = arith.constant 1 : index
    %c0_63 = arith.constant 0 : index
    %50 = vector.load %arg2[%c0_60, %c2_61, %c1_62, %c0_63] : memref<1x18x18x8xf32, #tpu.memory_space<vmem>>, vector<1x16x16x8xf32>
    %51 = vector.shape_cast %50 : vector<1x16x16x8xf32> to vector<16x16x8xf32>
    %52 = vector.shape_cast %51 : vector<16x16x8xf32> to vector<256x8xf32>
    %c2_64 = arith.constant 2 : index
    %c1_65 = arith.constant 1 : index
    %c0_66 = arith.constant 0 : index
    %c0_67 = arith.constant 0 : index
    %53 = vector.load %arg3[%c2_64, %c1_65, %c0_66, %c0_67] : memref<3x3x8x128xf32, #tpu.memory_space<vmem>>, vector<1x1x8x128xf32>
    %54 = vector.shape_cast %53 : vector<1x1x8x128xf32> to vector<8x128xf32>
    %cst_68 = arith.constant dense<0.000000e+00> : vector<256x128xf32>
    %55 = tpu.matmul %52, %54, %cst_68 {dimension_numbers = #tpu.dot_dimension_numbers<[1], [0], [0], [1], [0, 0, 1, 1], [], []>} : vector<256x8xf32>, vector<8x128xf32>, vector<256x128xf32> -> vector<256x128xf32>
    %56 = arith.addf %49, %55 : vector<256x128xf32>
    %c0_69 = arith.constant 0 : index
    %c2_70 = arith.constant 2 : index
    %c2_71 = arith.constant 2 : index
    %c0_72 = arith.constant 0 : index
    %57 = vector.load %arg2[%c0_69, %c2_70, %c2_71, %c0_72] : memref<1x18x18x8xf32, #tpu.memory_space<vmem>>, vector<1x16x16x8xf32>
    %58 = vector.shape_cast %57 : vector<1x16x16x8xf32> to vector<16x16x8xf32>
    %59 = vector.shape_cast %58 : vector<16x16x8xf32> to vector<256x8xf32>
    %c2_73 = arith.constant 2 : index
    %c2_74 = arith.constant 2 : index
    %c0_75 = arith.constant 0 : index
    %c0_76 = arith.constant 0 : index
    %60 = vector.load %arg3[%c2_73, %c2_74, %c0_75, %c0_76] : memref<3x3x8x128xf32, #tpu.memory_space<vmem>>, vector<1x1x8x128xf32>
    %61 = vector.shape_cast %60 : vector<1x1x8x128xf32> to vector<8x128xf32>
    %cst_77 = arith.constant dense<0.000000e+00> : vector<256x128xf32>
    %62 = tpu.matmul %59, %61, %cst_77 {dimension_numbers = #tpu.dot_dimension_numbers<[1], [0], [0], [1], [0, 0, 1, 1], [], []>} : vector<256x8xf32>, vector<8x128xf32>, vector<256x128xf32> -> vector<256x128xf32>
    %63 = arith.addf %56, %62 : vector<256x128xf32>
    %c0_78 = arith.constant 0 : index
    %c0_79 = arith.constant 0 : index
    %64 = vector.load %arg4[%c0_78, %c0_79] : memref<1x128xf32, #tpu.memory_space<vmem>>, vector<1x128xf32>
    %65 = vector.broadcast %64 : vector<1x128xf32> to vector<256x128xf32>
    %66 = arith.mulf %63, %65 : vector<256x128xf32>
    %c0_80 = arith.constant 0 : index
    %c0_81 = arith.constant 0 : index
    %67 = vector.load %arg5[%c0_80, %c0_81] : memref<1x128xf32, #tpu.memory_space<vmem>>, vector<1x128xf32>
    %68 = vector.broadcast %67 : vector<1x128xf32> to vector<256x128xf32>
    %69 = arith.addf %66, %68 : vector<256x128xf32>
    %cst_82 = arith.constant 0.000000e+00 : f32
    %70 = vector.broadcast %cst_82 : f32 to vector<256x128xf32>
    %71 = arith.maximumf %69, %70 : vector<256x128xf32>
    %c0_83 = arith.constant 0 : index
    %c0_84 = arith.constant 0 : index
    %c0_85 = arith.constant 0 : index
    %72 = vector.load %arg6[%c0_83, %c0_84, %c0_85] : memref<1x256x128xf32, #tpu.memory_space<vmem>>, vector<1x256x128xf32>
    %73 = vector.shape_cast %72 : vector<1x256x128xf32> to vector<256x128xf32>
    %74 = vector.shape_cast %71 : vector<256x128xf32> to vector<1x256x128xf32>
    tpu.vector_store %arg6[%c0_83, %c0_84, %c0_85], %74 {strides = array<i32>} : memref<1x256x128xf32, #tpu.memory_space<vmem>>, vector<1x256x128xf32>,
    return
  }
  func.func @transform_0(%arg0: i32, %arg1: i32) -> (i32, i32, i32, i32) {
    %c0_i32 = arith.constant 0 : i32
    %c0_i32_0 = arith.constant 0 : i32
    %c0_i32_1 = arith.constant 0 : i32
    %c0_i32_2 = arith.constant 0 : i32
    return %arg0, %c0_i32, %c0_i32_0, %c0_i32_1 : i32, i32, i32, i32
  }
  func.func @transform_1(%arg0: i32, %arg1: i32) -> (i32, i32, i32, i32) {
    %c0_i32 = arith.constant 0 : i32
    %c0_i32_0 = arith.constant 0 : i32
    %c0_i32_1 = arith.constant 0 : i32
    %c0_i32_2 = arith.constant 0 : i32
    return %c0_i32, %c0_i32_0, %c0_i32_1, %arg1 : i32, i32, i32, i32
  }
  func.func @transform_2(%arg0: i32, %arg1: i32) -> (i32, i32) {
    %c0_i32 = arith.constant 0 : i32
    %c0_i32_0 = arith.constant 0 : i32
    return %c0_i32, %arg1 : i32, i32
  }
  func.func @transform_3(%arg0: i32, %arg1: i32) -> (i32, i32) {
    %c0_i32 = arith.constant 0 : i32
    %c0_i32_0 = arith.constant 0 : i32
    return %c0_i32, %arg1 : i32, i32
  }
  func.func @transform_4(%arg0: i32, %arg1: i32) -> (i32, i32, i32) {
    %c0_i32 = arith.constant 0 : i32
    %c0_i32_0 = arith.constant 0 : i32
    return %arg0, %c0_i32, %arg1 : i32, i32, i32
  }
}

</mosaic_0001>

<llo_original>
// kernel: tpu_custom_call.1
$region0: #{tpu_custom_call.1}
  #allocation0 [shape = 'u32[]', space=smem, size = 0x4, offset = 0x4, fixed_abs, tag = 'smem constant byte address 0x4 - core index']
  #allocation1 [shape = 'u32[144,128]{1,0:T(1,128)}', space=vmem, size = 0x12000, scoped, tag = 'internal scratch']
  %s0 = inlined_call_operand.vmem [shape: f32[2,18,18,8], index: 0, kind: input, shape index: {}]
  %s1 = inlined_call_operand.vmem [shape: f32[3,3,8,128], index: 1, kind: input, shape index: {}]
  %s2 = inlined_call_operand.vmem [shape: f32[1,128], index: 2, kind: input, shape index: {}]
  %s3 = inlined_call_operand.vmem [shape: f32[1,128], index: 3, kind: input, shape index: {}]
  %s4 = inlined_call_operand.hbm [shape: f32[2,256,128], index: 4, kind: output, shape index: {}]
  %s5 = sld [smem:[#allocation0]]
  $region49: #{tpu_custom_call.1} parent=0
    _
  %s7 = ssub.s32 1, %s5
  %s8 = scalar_select 0, %s7, %s5
  $region1: #{tpu_custom_call.1} parent=0
    #allocation2 [shape = 'u8[262144]{0}', space=vmem, size = 0x40000, scoped, tag = 'output window, operand 0']
    #allocation3 [shape = 's32[2]{0}', space=sflag, size = 0x8, scoped, tag = 'scoped memory for tpu_custom_call.1']
    %9 = vsyncpa [#allocation3], 0
    %s10 = scalar_lea.sflag [#allocation3], 1
    %11 = vsyncpa %s10, 0
    loop: start=0, step=1, limit=4
    $region2: #{tpu_custom_call.1} parent=1 // loop_pre_header
      _
    $region3: #{tpu_custom_call.1} parent=1 // loop_header
      %s13 = sphi 0, %s17
      %p14 = scmp.ge.s32.totalorder %s13, 4
      %s20 = sphi 0, %s32
      %s21 = sphi 0, %s28
      %s22 = sphi 0, %s20
      %s23 = sphi 0, %s21
      %s24 = sphi 0, %s22
      %s25 = sphi 0, %s23
      %s35 = sphi 0, %s37
      %s38 = sphi 0, %s35
      %s39 = sphi 0, %s38
      %s55 = sphi 0, %s39
      %s61 = sphi 0, %s63
      %s64 = sphi 0, %s61
      %s65 = sphi 0, %s64
      %s81 = sphi 0, %s65
      %s87 = sphi 0, %s89
      %s90 = sphi 0, %s87
      %s91 = sphi 0, %s90
      %s107 = sphi 0, %s91
      %s113 = sphi 0, %s115
      %s116 = sphi 0, %s113
      %s117 = sphi 0, %s116
      %s133 = sphi 0, %s117
      %s141 = sphi 0, %s143
      %s144 = sphi 0, %s141
      %s145 = sphi 0, %s144
      %s161 = sphi 0, %s145
    $region4: #{tpu_custom_call.1} parent=1 // loop_header_branch
      %16 = sbr.rel (%p14) target = $region8
    $region5: #{tpu_custom_call.1} parent=1 // loop_body
      %s18 = ssub.s32 %s13, 1
      %s19 = ssub.s32 %s13, 2
      %s26 = sadd.s32 1, %s21
      %p27 = scmp.ge.s32.totalorder %s26, 1
      %s28 = scalar_select %p27, 0, %s26
      %s29 = sadd.s32 1, %s20
      %s30 = scalar_select %p27, %s29, %s20
      %p31 = scmp.ge.s32.totalorder %s30, 2
      %s32 = scalar_select %p31, 0, %s30
      %s33 = ssub.s32 %s20, %s32
      %p34 = scmp.eq.s32.totalorder %s33, 0
      %s36 = sadd.s32 %s35, 1
      %s37 = scalar_select %p34, %s35, %s36
      %p40 = pneg %p34
      %p41 = scmp.eq.s32.totalorder %s13, 1
      %p42 = por %p40, %p41
      %p43 = scmp.ne.s32.totalorder %s35, %s38
      %p44 = scmp.eq.s32.totalorder %s13, 0
      %p45 = por %p43, %p44
      %p46 = scmp.ne.s32.totalorder %s35, %s38
      %p47 = scmp.eq.s32.totalorder %s18, 1
      %p48 = por %p46, %p47
      %p49 = scmp.ne.s32.totalorder %s38, %s39
      %p50 = scmp.eq.s32.totalorder %s18, 0
      %p51 = por %p49, %p50
      %p52 = scmp.ne.s32.totalorder %s38, %s39
      %p53 = scmp.eq.s32.totalorder %s19, 1
      %p54 = por %p52, %p53
      %p56 = scmp.ne.s32.totalorder %s39, %s55
      %p57 = scmp.eq.s32.totalorder %s19, 0
      %p58 = por %p56, %p57
      %s59 = ssub.s32 %s21, %s28
      %p60 = scmp.eq.s32.totalorder %s59, 0
      %s62 = sadd.s32 %s61, 1
      %s63 = scalar_select %p60, %s61, %s62
      %p66 = pneg %p60
      %p67 = scmp.eq.s32.totalorder %s13, 1
      %p68 = por %p66, %p67
      %p69 = scmp.ne.s32.totalorder %s61, %s64
      %p70 = scmp.eq.s32.totalorder %s13, 0
      %p71 = por %p69, %p70
      %p72 = scmp.ne.s32.totalorder %s61, %s64
      %p73 = scmp.eq.s32.totalorder %s18, 1
      %p74 = por %p72, %p73
      %p75 = scmp.ne.s32.totalorder %s64, %s65
      %p76 = scmp.eq.s32.totalorder %s18, 0
      %p77 = por %p75, %p76
      %p78 = scmp.ne.s32.totalorder %s64, %s65
      %p79 = scmp.eq.s32.totalorder %s19, 1
      %p80 = por %p78, %p79
      %p82 = scmp.ne.s32.totalorder %s65, %s81
      %p83 = scmp.eq.s32.totalorder %s19, 0
      %p84 = por %p82, %p83
      %s85 = ssub.s32 %s21, %s28
      %p86 = scmp.eq.s32.totalorder %s85, 0
      %s88 = sadd.s32 %s87, 1
      %s89 = scalar_select %p86, %s87, %s88
      %p92 = pneg %p86
      %p93 = scmp.eq.s32.totalorder %s13, 1
      %p94 = por %p92, %p93
      %p95 = scmp.ne.s32.totalorder %s87, %s90
      %p96 = scmp.eq.s32.totalorder %s13, 0
      %p97 = por %p95, %p96
      %p98 = scmp.ne.s32.totalorder %s87, %s90
      %p99 = scmp.eq.s32.totalorder %s18, 1
      %p100 = por %p98, %p99
      %p101 = scmp.ne.s32.totalorder %s90, %s91
      %p102 = scmp.eq.s32.totalorder %s18, 0
      %p103 = por %p101, %p102
      %p104 = scmp.ne.s32.totalorder %s90, %s91
      %p105 = scmp.eq.s32.totalorder %s19, 1
      %p106 = por %p104, %p105
      %p108 = scmp.ne.s32.totalorder %s91, %s107
      %p109 = scmp.eq.s32.totalorder %s19, 0
      %p110 = por %p108, %p109
      %s111 = ssub.s32 %s21, %s28
      %p112 = scmp.eq.s32.totalorder %s111, 0
      %s114 = sadd.s32 %s113, 1
      %s115 = scalar_select %p112, %s113, %s114
      %p118 = pneg %p112
      %p119 = scmp.eq.s32.totalorder %s13, 1
      %p120 = por %p118, %p119
      %p121 = scmp.ne.s32.totalorder %s113, %s116
      %p122 = scmp.eq.s32.totalorder %s13, 0
      %p123 = por %p121, %p122
      %p124 = scmp.ne.s32.totalorder %s113, %s116
      %p125 = scmp.eq.s32.totalorder %s18, 1
      %p126 = por %p124, %p125
      %p127 = scmp.ne.s32.totalorder %s116, %s117
      %p128 = scmp.eq.s32.totalorder %s18, 0
      %p129 = por %p127, %p128
      %p130 = scmp.ne.s32.totalorder %s116, %s117
      %p131 = scmp.eq.s32.totalorder %s19, 1
      %p132 = por %p130, %p131
      %p134 = scmp.ne.s32.totalorder %s117, %s133
      %p135 = scmp.eq.s32.totalorder %s19, 0
      %p136 = por %p134, %p135
      %s137 = ssub.s32 %s20, %s32
      %s138 = ssub.s32 %s21, %s28
      %s139 = sor.u32 %s137, %s138
      %p140 = scmp.eq.s32.totalorder %s139, 0
      %s142 = sadd.s32 %s141, 1
      %s143 = scalar_select %p140, %s141, %s142
      %p146 = pneg %p140
      %p147 = scmp.eq.s32.totalorder %s13, 1
      %p148 = por %p146, %p147
      %p149 = scmp.ne.s32.totalorder %s141, %s144
      %p150 = scmp.eq.s32.totalorder %s13, 0
      %p151 = por %p149, %p150
      %p152 = scmp.ne.s32.totalorder %s141, %s144
      %p153 = scmp.eq.s32.totalorder %s18, 1
      %p154 = por %p152, %p153
      %p155 = scmp.ne.s32.totalorder %s144, %s145
      %p156 = scmp.eq.s32.totalorder %s18, 0
      %p157 = por %p155, %p156
      %p158 = scmp.ne.s32.totalorder %s144, %s145
      %p159 = scmp.eq.s32.totalorder %s19, 1
      %p160 = por %p158, %p159
      %p162 = scmp.ne.s32.totalorder %s145, %s161
      %p163 = scmp.eq.s32.totalorder %s19, 0
      %p164 = por %p162, %p163
      %p165 = scmp.le.s32.totalorder 1, %s13
      %p166 = scmp.lt.s32.totalorder %s13, 3
      %p167 = pnand %p165, %p166
      %p168 = pneg %p167
      // Predicated region
      $region9: #{tpu_custom_call.1} parent=5 // pred_check
        _
      $region10: #{tpu_custom_call.1} parent=5 // pred_check_branch
        %170 = sbr.rel (%p167) target = $region12
      $region11: #{tpu_custom_call.1} parent=5 // pred_region
        %s171 = ssub.s32 %s13, 1
        // Predicated region
        $region13: #{tpu_custom_call.1} parent=11 // pred_check
          %p172 = pneg %p77
        $region14: #{tpu_custom_call.1} parent=11 // pred_check_branch
          %174 = sbr.rel (%p172) target = $region16
        $region15: #{tpu_custom_call.1} parent=11 // pred_region
          %p175 = scmp.lt.s32.totalorder %s23, 0
          %s176 = scalar_select %p175, %s23, 0
          %s177 = smul.addr %s176, 8
          %s178 = scalar_lea.vmem %s1, %s177
        $region16: #{tpu_custom_call.1} parent=11 // pred_fallthru
          _
        // Predicated region
        $region17: #{tpu_custom_call.1} parent=11 // pred_check
          %p179 = pneg %p103
        $region18: #{tpu_custom_call.1} parent=11 // pred_check_branch
          %181 = sbr.rel (%p179) target = $region20
        $region19: #{tpu_custom_call.1} parent=11 // pred_region
          %p182 = scmp.lt.s32.totalorder %s23, 0
          %s183 = scalar_select %p182, %s23, 0
          %s184 = scalar_lea.vmem %s2, %s183
        $region20: #{tpu_custom_call.1} parent=11 // pred_fallthru
          _
        // Predicated region
        $region21: #{tpu_custom_call.1} parent=11 // pred_check
          %p185 = pneg %p129
        $region22: #{tpu_custom_call.1} parent=11 // pred_check_branch
          %187 = sbr.rel (%p185) target = $region24
        $region23: #{tpu_custom_call.1} parent=11 // pred_region
          %p188 = scmp.lt.s32.totalorder %s23, 0
          %s189 = scalar_select %p188, %s23, 0
          %s190 = scalar_lea.vmem %s3, %s189
        $region24: #{tpu_custom_call.1} parent=11 // pred_fallthru
          _
      $region12: #{tpu_custom_call.1} parent=5 // pred_fallthru
        _
      %p191 = scmp.lt.s32.totalorder %s13, 2
      // Predicated region
      $region25: #{tpu_custom_call.1} parent=5 // pred_check
        %p192 = pneg %p191
      $region26: #{tpu_custom_call.1} parent=5 // pred_check_branch
        %194 = sbr.rel (%p192) target = $region28
      $region27: #{tpu_custom_call.1} parent=5 // pred_region
        // Predicated region
        $region29: #{tpu_custom_call.1} parent=27 // pred_check
          %p195 = pneg %p45
        $region30: #{tpu_custom_call.1} parent=27 // pred_check_branch
          %197 = sbr.rel (%p195) target = $region32
        $region31: #{tpu_custom_call.1} parent=27 // pred_region
          %p198 = scmp.lt.s32.totalorder %s20, 1
          %s199 = scalar_select %p198, %s20, 1
          %s200 = smul.addr %s199, 54
          %s201 = smul.addr %s200, 8
          %s202 = scalar_lea.vmem %s0, %s201
        $region32: #{tpu_custom_call.1} parent=27 // pred_fallthru
          _
      $region28: #{tpu_custom_call.1} parent=5 // pred_fallthru
        _
      %p203 = scmp.le.s32.totalorder 1, %s13
      %p204 = scmp.lt.s32.totalorder %s13, 3
      %p205 = pnand %p203, %p204
      %p206 = pneg %p205
      // Predicated region
      $region33: #{tpu_custom_call.1} parent=5 // pred_check
        _
      $region34: #{tpu_custom_call.1} parent=5 // pred_check_branch
        %208 = sbr.rel (%p205) target = $region36
      $region35: #{tpu_custom_call.1} parent=5 // pred_region
        %s209 = ssub.s32 %s13, 1
        %p210 = scmp.lt.s32.totalorder %s22, 1
        %s211 = scalar_select %p210, %s22, 1
        %s212 = smul.addr %s211, 54
        %s213 = smul.addr %s212, 8
        %s214 = scalar_lea.vmem %s0, %s213
        %p215 = pneg %p51
        %p216 = pneg %p48
        %p217 = scmp.lt.s32.totalorder %s23, 0
        %s218 = scalar_select %p217, %s23, 0
        %s219 = smul.addr %s218, 8
        %s220 = scalar_lea.vmem %s1, %s219
        %p221 = pneg %p77
        %p222 = pneg %p74
        %p223 = scmp.lt.s32.totalorder %s23, 0
        %s224 = scalar_select %p223, %s23, 0
        %s225 = scalar_lea.vmem %s2, %s224
        %p226 = pneg %p103
        %p227 = pneg %p100
        %p228 = scmp.lt.s32.totalorder %s23, 0
        %s229 = scalar_select %p228, %s23, 0
        %s230 = scalar_lea.vmem %s3, %s229
        %p231 = pneg %p129
        %p232 = pneg %p126
        %p233 = pneg %p157
        %p234 = pneg %p154
        %s235 = sand.u32 %s144, 1
        %s236 = scalar_lea.sflag [#allocation3], %s235
        %s237 = sand.u32 %s144, 1
        %s238 = smul.addr %s237, 256
        %s239 = scalar_lea.vmem [#allocation2], %s238
        %p240 = scmp.lt.s32.totalorder %s22, 1
        %s241 = scalar_select %p240, %s22, 1
        %s242 = smul.addr %s241, 54
        %s243 = smul.addr %s242, 8
        %s244 = scalar_lea.vmem %s0, %s243
        %p245 = scmp.lt.s32.totalorder %s23, 0
        %s246 = scalar_select %p245, %s23, 0
        %s247 = smul.addr %s246, 8
        %s248 = scalar_lea.vmem %s1, %s247
        %p249 = scmp.lt.s32.totalorder %s23, 0
        %s250 = scalar_select %p249, %s23, 0
        %s251 = scalar_lea.vmem %s2, %s250
        %p252 = scmp.lt.s32.totalorder %s23, 0
        %s253 = scalar_select %p252, %s23, 0
        %s254 = scalar_lea.vmem %s3, %s253
        %v255 = vld [vmem:[%s244] sm:$0xff]
        %v256 = vld [vmem:[%s244 + $0x8] sm:$0xff]
        %v257 = vld [vmem:[%s244 + $0x18] sm:$0xff]
        %v258 = vld [vmem:[%s244 + $0x20] sm:$0xff]
        %v259 = vld [vmem:[%s244 + $0x30] sm:$0xff]
        %v260 = vld [vmem:[%s244 + $0x38] sm:$0xff]
        %v261 = vld [vmem:[%s244 + $0x48] sm:$0xff]
        %v262 = vld [vmem:[%s244 + $0x50] sm:$0xff]
        %v263 = vld [vmem:[%s244 + $0x60] sm:$0xff]
        %v264 = vld [vmem:[%s244 + $0x68] sm:$0xff]
        %v265 = vld [vmem:[%s244 + $0x78] sm:$0xff]
        %v266 = vld [vmem:[%s244 + $0x80] sm:$0xff]
        %v267 = vld [vmem:[%s244 + $0x90] sm:$0xff]
        %v268 = vld [vmem:[%s244 + $0x98] sm:$0xff]
        %v269 = vld [vmem:[%s244 + $0xa8] sm:$0xff]
        %v270 = vld [vmem:[%s244 + $0xb0] sm:$0xff]
        %v271 = vld [vmem:[%s244 + $0xc0] sm:$0xff]
        %v272 = vld [vmem:[%s244 + $0xc8] sm:$0xff]
        %v273 = vld [vmem:[%s244 + $0xd8] sm:$0xff]
        %v274 = vld [vmem:[%s244 + $0xe0] sm:$0xff]
        %v275 = vld [vmem:[%s244 + $0xf0] sm:$0xff]
        %v276 = vld [vmem:[%s244 + $0xf8] sm:$0xff]
        %v277 = vld [vmem:[%s244 + $0x108] sm:$0xff]
        %v278 = vld [vmem:[%s244 + $0x110] sm:$0xff]
        %v279 = vld [vmem:[%s244 + $0x120] sm:$0xff]
        %v280 = vld [vmem:[%s244 + $0x128] sm:$0xff]
        %v281 = vld [vmem:[%s244 + $0x138] sm:$0xff]
        %v282 = vld [vmem:[%s244 + $0x140] sm:$0xff]
        %v283 = vld [vmem:[%s244 + $0x150] sm:$0xff]
        %v284 = vld [vmem:[%s244 + $0x158] sm:$0xff]
        %v285 = vld [vmem:[%s244 + $0x168] sm:$0xff]
        %v286 = vld [vmem:[%s244 + $0x170] sm:$0xff]
        %v287 = vld [vmem:[%s248] sm:$0xff]
        %v288 = vld [vmem:[%s244 + $0x1] sm:$0xff]
        %v289 = vld [vmem:[%s244 + $0x9] sm:$0xff]
        %v290 = vld [vmem:[%s244 + $0x19] sm:$0xff]
        %v291 = vld [vmem:[%s244 + $0x21] sm:$0xff]
        %v292 = vld [vmem:[%s244 + $0x31] sm:$0xff]
        %v293 = vld [vmem:[%s244 + $0x39] sm:$0xff]
        %v294 = vld [vmem:[%s244 + $0x49] sm:$0xff]
        %v295 = vld [vmem:[%s244 + $0x51] sm:$0xff]
        %v296 = vld [vmem:[%s244 + $0x61] sm:$0xff]
        %v297 = vld [vmem:[%s244 + $0x69] sm:$0xff]
        %v298 = vld [vmem:[%s244 + $0x79] sm:$0xff]
        %v299 = vld [vmem:[%s244 + $0x81] sm:$0xff]
        %v300 = vld [vmem:[%s244 + $0x91] sm:$0xff]
        %v301 = vld [vmem:[%s244 + $0x99] sm:$0xff]
        %v302 = vld [vmem:[%s244 + $0xa9] sm:$0xff]
        %v303 = vld [vmem:[%s244 + $0xb1] sm:$0xff]
        %v304 = vld [vmem:[%s244 + $0xc1] sm:$0xff]
        %v305 = vld [vmem:[%s244 + $0xc9] sm:$0xff]
        %v306 = vld [vmem:[%s244 + $0xd9] sm:$0xff]
        %v307 = vld [vmem:[%s244 + $0xe1] sm:$0xff]
        %v308 = vld [vmem:[%s244 + $0xf1] sm:$0xff]
        %v309 = vld [vmem:[%s244 + $0xf9] sm:$0xff]
        %v310 = vld [vmem:[%s244 + $0x109] sm:$0xff]
        %v311 = vld [vmem:[%s244 + $0x111] sm:$0xff]
        %v312 = vld [vmem:[%s244 + $0x121] sm:$0xff]
        %v313 = vld [vmem:[%s244 + $0x129] sm:$0xff]
        %v314 = vld [vmem:[%s244 + $0x139] sm:$0xff]
        %v315 = vld [vmem:[%s244 + $0x141] sm:$0xff]
        %v316 = vld [vmem:[%s244 + $0x151] sm:$0xff]
        %v317 = vld [vmem:[%s244 + $0x159] sm:$0xff]
        %v318 = vld [vmem:[%s244 + $0x169] sm:$0xff]
        %v319 = vld [vmem:[%s244 + $0x171] sm:$0xff]
        %s320 = scalar_lea.vmem %s248, 8
        %v321 = vld [vmem:[%s320] sm:$0xff]
        %vm322 = vcmask 64512
        %v324 = vsel %vm322, %v288, 0
        %v327 = vsel %vm322, %v289, 0
        %v330 = vsel %vm322, %v290, 0
        %v333 = vsel %vm322, %v291, 0
        %v336 = vsel %vm322, %v292, 0
        %v339 = vsel %vm322, %v293, 0
        %v342 = vsel %vm322, %v294, 0
        %v345 = vsel %vm322, %v295, 0
        %v348 = vsel %vm322, %v296, 0
        %v351 = vsel %vm322, %v297, 0
        %v354 = vsel %vm322, %v298, 0
        %v357 = vsel %vm322, %v299, 0
        %v360 = vsel %vm322, %v300, 0
        %v363 = vsel %vm322, %v301, 0
        %v366 = vsel %vm322, %v302, 0
        %v369 = vsel %vm322, %v303, 0
        %v372 = vsel %vm322, %v304, 0
        %v375 = vsel %vm322, %v305, 0
        %v378 = vsel %vm322, %v306, 0
        %v381 = vsel %vm322, %v307, 0
        %v384 = vsel %vm322, %v308, 0
        %v387 = vsel %vm322, %v309, 0
        %v390 = vsel %vm322, %v310, 0
        %v393 = vsel %vm322, %v311, 0
        %v396 = vsel %vm322, %v312, 0
        %v399 = vsel %vm322, %v313, 0
        %v402 = vsel %vm322, %v314, 0
        %v405 = vsel %vm322, %v315, 0
        %v408 = vsel %vm322, %v316, 0
        %v411 = vsel %vm322, %v317, 0
        %v414 = vsel %vm322, %v318, 0
        %v417 = vsel %vm322, %v319, 0
        %419 = vmatprep.subr.mxu0 0.0
        %420 = vmatpush1.msra.mxu0 %v321
        %421 = vmatprep.subr.mxu0 0.0
        %422 = vmatpush1.msra.mxu0 0.0
        %423 = vmatprep.subr.mxu0 0.0
        %424 = vmatpush1.msra.mxu0 0.0
        %425 = vmatprep.subr.mxu0 0.0
        %426 = vmatpush1.msra.mxu0 0.0
        %427 = vmatprep.subr.mxu0 0.0
        %428 = vmatpush1.msra.mxu0 0.0
        %429 = vmatprep.subr.mxu0 0.0
        %430 = vmatpush1.msra.mxu0 0.0
        %431 = vmatprep.subr.mxu0 0.0
        %432 = vmatpush1.msra.mxu0 0.0
        %433 = vmatprep.subr.mxu0 0.0
        %434 = vmatpush1.msra.mxu0 0.0
        %435 = vmatprep.subr.mxu0 0.0
        %436 = vmatpush1.msra.mxu0 0.0
        %437 = vmatprep.subr.mxu0 0.0
        %438 = vmatpush1.msra.mxu0 0.0
        %439 = vmatprep.subr.mxu0 0.0
        %440 = vmatpush1.msra.mxu0 0.0
        %441 = vmatprep.subr.mxu0 0.0
        %442 = vmatpush1.msra.mxu0 0.0
        %443 = vmatprep.subr.mxu0 0.0
        %444 = vmatpush1.msra.mxu0 0.0
        %445 = vmatprep.subr.mxu0 0.0
        %446 = vmatpush1.msra.mxu0 0.0
        %447 = vmatprep.subr.mxu0 0.0
        %448 = vmatpush1.msra.mxu0 0.0
        %449 = vmatprep.subr.mxu0 0.0
        %450 = vmatpush1.msra.mxu0 0.0
        %451 = vmatprep.subr.mxu0 0.0
        %452 = vmatpush1.msra.mxu0 0.0
        %453 = vmatprep.subr.mxu0 0.0
        %454 = vmatpush1.msra.mxu0 0.0
        %455 = vmatprep.subr.mxu0 0.0
        %456 = vmatpush1.msra.mxu0 0.0
        %457 = vmatprep.subr.mxu0 0.0
        %458 = vmatpush1.msra.mxu0 0.0
        %459 = vmatprep.subr.mxu0 0.0
        %460 = vmatpush1.msra.mxu0 0.0
        %461 = vmatprep.subr.mxu0 0.0
        %462 = vmatpush1.msra.mxu0 0.0
        %463 = vmatprep.subr.mxu0 0.0
        %464 = vmatpush1.msra.mxu0 0.0
        %465 = vmatprep.subr.mxu0 0.0
        %466 = vmatpush1.msra.mxu0 0.0
        %467 = vmatprep.subr.mxu0 0.0
        %468 = vmatpush1.msra.mxu0 0.0
        %469 = vmatprep.subr.mxu0 0.0
        %470 = vmatpush1.msra.mxu0 0.0
        %471 = vmatprep.subr.mxu0 0.0
        %472 = vmatpush1.msra.mxu0 0.0
        %473 = vmatprep.subr.mxu0 0.0
        %474 = vmatpush1.msra.mxu0 0.0
        %475 = vmatprep.subr.mxu0 0.0
        %476 = vmatpush1.msra.mxu0 0.0
        %477 = vmatprep.subr.mxu0 0.0
        %478 = vmatpush1.msra.mxu0 0.0
        %479 = vmatprep.subr.mxu0 0.0
        %480 = vmatpush1.msra.mxu0 0.0
        %481 = vmatprep.subr.mxu0 0.0
        %482 = vmatpush1.msra.mxu0 0.0
        %483 = vmatprep.mubr.f32.mxu0 0.0
        %484 = vmatmul.mubr.f32.gmra.mrb[0].mxu0 %v324
        %v485 = vpop.f32.mrb[0].mxu0
        %v486 = vadd.f32 0.0, %v485
        %v487 = vpop.f32.mrb[0].mxu0
        %488 = vmatprep.mubr.f32.mxu0 0.0
        %489 = vmatmul.mubr.f32.gmra.mrb[0].mxu0 %v327
        %v490 = vpop.f32.mrb[0].mxu0
        %v491 = vadd.f32 0.0, %v490
        %v492 = vpop.f32.mrb[0].mxu0
        %493 = vmatprep.mubr.f32.mxu0 0.0
        %494 = vmatmul.mubr.f32.gmra.mrb[0].mxu0 %v330
        %v495 = vpop.f32.mrb[0].mxu0
        %v496 = vadd.f32 0.0, %v495
        %v497 = vpop.f32.mrb[0].mxu0
        %498 = vmatprep.mubr.f32.mxu0 0.0
        %499 = vmatmul.mubr.f32.gmra.mrb[0].mxu0 %v333
        %v500 = vpop.f32.mrb[0].mxu0
        %v501 = vadd.f32 0.0, %v500
        %v502 = vpop.f32.mrb[0].mxu0
        %503 = vmatprep.mubr.f32.mxu0 0.0
        %504 = vmatmul.mubr.f32.gmra.mrb[0].mxu0 %v336
        %v505 = vpop.f32.mrb[0].mxu0
        %v506 = vadd.f32 0.0, %v505
        %v507 = vpop.f32.mrb[0].mxu0
        %508 = vmatprep.mubr.f32.mxu0 0.0
        %509 = vmatmul.mubr.f32.gmra.mrb[0].mxu0 %v339
        %v510 = vpop.f32.mrb[0].mxu0
        %v511 = vadd.f32 0.0, %v510
        %v512 = vpop.f32.mrb[0].mxu0
        %513 = vmatprep.mubr.f32.mxu0 0.0
        %514 = vmatmul.mubr.f32.gmra.mrb[0].mxu0 %v342
        %v515 = vpop.f32.mrb[0].mxu0
        %v516 = vadd.f32 0.0, %v515
        %v517 = vpop.f32.mrb[0].mxu0
        %518 = vmatprep.mubr.f32.mxu0 0.0
        %519 = vmatmul.mubr.f32.gmra.mrb[0].mxu0 %v345
        %v520 = vpop.f32.mrb[0].mxu0
        %v521 = vadd.f32 0.0, %v520
        %v522 = vpop.f32.mrb[0].mxu0
        %523 = vmatprep.mubr.f32.mxu0 0.0
        %524 = vmatmul.mubr.f32.gmra.mrb[0].mxu0 %v348
        %v525 = vpop.f32.mrb[0].mxu0
        %v526 = vadd.f32 0.0, %v525
        %v527 = vpop.f32.mrb[0].mxu0
        %528 = vmatprep.mubr.f32.mxu0 0.0
        %529 = vmatmul.mubr.f32.gmra.mrb[0].mxu0 %v351
        %v530 = vpop.f32.mrb[0].mxu0
        %v531 = vadd.f32 0.0, %v530
        %v532 = vpop.f32.mrb[0].mxu0
        %533 = vmatprep.mubr.f32.mxu0 0.0
        %534 = vmatmul.mubr.f32.gmra.mrb[0].mxu0 %v354
        %v535 = vpop.f32.mrb[0].mxu0
        %v536 = vadd.f32 0.0, %v535
        %v537 = vpop.f32.mrb[0].mxu0
        %538 = vmatprep.mubr.f32.mxu0 0.0
        %539 = vmatmul.mubr.f32.gmra.mrb[0].mxu0 %v357
        %v540 = vpop.f32.mrb[0].mxu0
        %v541 = vadd.f32 0.0, %v540
        %v542 = vpop.f32.mrb[0].mxu0
        %543 = vmatprep.mubr.f32.mxu0 0.0
        %544 = vmatmul.mubr.f32.gmra.mrb[0].mxu0 %v360
        %v545 = vpop.f32.mrb[0].mxu0
        %v546 = vadd.f32 0.0, %v545
        %v547 = vpop.f32.mrb[0].mxu0
        %548 = vmatprep.mubr.f32.mxu0 0.0
        %549 = vmatmul.mubr.f32.gmra.mrb[0].mxu0 %v363
        %v550 = vpop.f32.mrb[0].mxu0
        %v551 = vadd.f32 0.0, %v550
        %v552 = vpop.f32.mrb[0].mxu0
        %553 = vmatprep.mubr.f32.mxu0 0.0
        %554 = vmatmul.mubr.f32.gmra.mrb[0].mxu0 %v366
        %v555 = vpop.f32.mrb[0].mxu0
        %v556 = vadd.f32 0.0, %v555
        %v557 = vpop.f32.mrb[0].mxu0
        %558 = vmatprep.mubr.f32.mxu0 0.0
        %559 = vmatmul.mubr.f32.gmra.mrb[0].mxu0 %v369
        %v560 = vpop.f32.mrb[0].mxu0
        %v561 = vadd.f32 0.0, %v560
        %v562 = vpop.f32.mrb[0].mxu0
        %563 = vmatprep.mubr.f32.mxu0 0.0
        %564 = vmatmul.mubr.f32.gmra.mrb[0].mxu0 %v372
        %v565 = vpop.f32.mrb[0].mxu0
        %v566 = vadd.f32 0.0, %v565
        %v567 = vpop.f32.mrb[0].mxu0
        %568 = vmatprep.mubr.f32.mxu0 0.0
        %569 = vmatmul.mubr.f32.gmra.mrb[0].mxu0 %v375
        %v570 = vpop.f32.mrb[0].mxu0
        %v571 = vadd.f32 0.0, %v570
        %v572 = vpop.f32.mrb[0].mxu0
        %573 = vmatprep.mubr.f32.mxu0 0.0
        %574 = vmatmul.mubr.f32.gmra.mrb[0].mxu0 %v378
        %v575 = vpop.f32.mrb[0].mxu0
        %v576 = vadd.f32 0.0, %v575
        %v577 = vpop.f32.mrb[0].mxu0
        %578 = vmatprep.mubr.f32.mxu0 0.0
        %579 = vmatmul.mubr.f32.gmra.mrb[0].mxu0 %v381
        %v580 = vpop.f32.mrb[0].mxu0
        %v581 = vadd.f32 0.0, %v580
        %v582 = vpop.f32.mrb[0].mxu0
        %583 = vmatprep.mubr.f32.mxu0 0.0
        %584 = vmatmul.mubr.f32.gmra.mrb[0].mxu0 %v384
        %v585 = vpop.f32.mrb[0].mxu0
        %v586 = vadd.f32 0.0, %v585
        %v587 = vpop.f32.mrb[0].mxu0
        %588 = vmatprep.mubr.f32.mxu0 0.0
        %589 = vmatmul.mubr.f32.gmra.mrb[0].mxu0 %v387
        %v590 = vpop.f32.mrb[0].mxu0
        %v591 = vadd.f32 0.0, %v590
        %v592 = vpop.f32.mrb[0].mxu0
        %593 = vmatprep.mubr.f32.mxu0 0.0
        %594 = vmatmul.mubr.f32.gmra.mrb[0].mxu0 %v390
        %v595 = vpop.f32.mrb[0].mxu0
        %v596 = vadd.f32 0.0, %v595
        %v597 = vpop.f32.mrb[0].mxu0
        %598 = vmatprep.mubr.f32.mxu0 0.0
        %599 = vmatmul.mubr.f32.gmra.mrb[0].mxu0 %v393
        %v600 = vpop.f32.mrb[0].mxu0
        %v601 = vadd.f32 0.0, %v600
        %v602 = vpop.f32.mrb[0].mxu0
        %603 = vmatprep.mubr.f32.mxu0 0.0
        %604 = vmatmul.mubr.f32.gmra.mrb[0].mxu0 %v396
        %v605 = vpop.f32.mrb[0].mxu0
        %v606 = vadd.f32 0.0, %v605
        %v607 = vpop.f32.mrb[0].mxu0
        %608 = vmatprep.mubr.f32.mxu0 0.0
        %609 = vmatmul.mubr.f32.gmra.mrb[0].mxu0 %v399
        %v610 = vpop.f32.mrb[0].mxu0
        %v611 = vadd.f32 0.0, %v610
        %v612 = vpop.f32.mrb[0].mxu0
        %613 = vmatprep.mubr.f32.mxu0 0.0
        %614 = vmatmul.mubr.f32.gmra.mrb[0].mxu0 %v402
        %v615 = vpop.f32.mrb[0].mxu0
        %v616 = vadd.f32 0.0, %v615
        %v617 = vpop.f32.mrb[0].mxu0
        %618 = vmatprep.mubr.f32.mxu0 0.0
        %619 = vmatmul.mubr.f32.gmra.mrb[0].mxu0 %v405
        %v620 = vpop.f32.mrb[0].mxu0
        %v621 = vadd.f32 0.0, %v620
        %v622 = vpop.f32.mrb[0].mxu0
        %623 = vmatprep.mubr.f32.mxu0 0.0
        %624 = vmatmul.mubr.f32.gmra.mrb[0].mxu0 %v408
        %v625 = vpop.f32.mrb[0].mxu0
        %v626 = vadd.f32 0.0, %v625
        %v627 = vpop.f32.mrb[0].mxu0
        %628 = vmatprep.mubr.f32.mxu0 0.0
        %629 = vmatmul.mubr.f32.gmra.mrb[0].mxu0 %v411
        %v630 = vpop.f32.mrb[0].mxu0
        %v631 = vadd.f32 0.0, %v630
        %v632 = vpop.f32.mrb[0].mxu0
        %633 = vmatprep.mubr.f32.mxu0 0.0
        %634 = vmatmul.mubr.f32.gmra.mrb[0].mxu0 %v414
        %v635 = vpop.f32.mrb[0].mxu0
        %v636 = vadd.f32 0.0, %v635
        %v637 = vpop.f32.mrb[0].mxu0
        %638 = vmatprep.mubr.f32.mxu0 0.0
        %639 = vmatmul.mubr.f32.gmra.mrb[0].mxu0 %v417
        %v640 = vpop.f32.mrb[0].mxu0
        %v641 = vadd.f32 0.0, %v640
        %v642 = vpop.f32.mrb[0].mxu0
        %643 = vdwg.mxu0
        %v645 = vsel %vm322, %v255, 0
        %v648 = vsel %vm322, %v256, 0
        %v651 = vsel %vm322, %v257, 0
        %v654 = vsel %vm322, %v258, 0
        %v657 = vsel %vm322, %v259, 0
        %v660 = vsel %vm322, %v260, 0
        %v663 = vsel %vm322, %v261, 0
        %v666 = vsel %vm322, %v262, 0
        %v669 = vsel %vm322, %v263, 0
        %v672 = vsel %vm322, %v264, 0
        %v675 = vsel %vm322, %v265, 0
        %v678 = vsel %vm322, %v266, 0
        %v681 = vsel %vm322, %v267, 0
        %v684 = vsel %vm322, %v268, 0
        %v687 = vsel %vm322, %v269, 0
        %v690 = vsel %vm322, %v270, 0
        %v693 = vsel %vm322, %v271, 0
        %v696 = vsel %vm322, %v272, 0
        %v699 = vsel %vm322, %v273, 0
        %v702 = vsel %vm322, %v274, 0
        %v705 = vsel %vm322, %v275, 0
        %v708 = vsel %vm322, %v276, 0
        %v711 = vsel %vm322, %v277, 0
        %v714 = vsel %vm322, %v278, 0
        %v717 = vsel %vm322, %v279, 0
        %v720 = vsel %vm322, %v280, 0
        %v723 = vsel %vm322, %v281, 0
        %v726 = vsel %vm322, %v282, 0
        %v729 = vsel %vm322, %v283, 0
        %v732 = vsel %vm322, %v284, 0
        %v735 = vsel %vm322, %v285, 0
        %v738 = vsel %vm322, %v286, 0
        %740 = vmatprep.subr.mxu0 0.0
        %741 = vmatpush1.msra.mxu0 %v287
        %742 = vmatprep.subr.mxu0 0.0
        %743 = vmatpush1.msra.mxu0 0.0
        %744 = vmatprep.subr.mxu0 0.0
        %745 = vmatpush1.msra.mxu0 0.0
        %746 = vmatprep.subr.mxu0 0.0
        %747 = vmatpush1.msra.mxu0 0.0
        %748 = vmatprep.subr.mxu0 0.0
        %749 = vmatpush1.msra.mxu0 0.0
        %750 = vmatprep.subr.mxu0 0.0
        %751 = vmatpush1.msra.mxu0 0.0
        %752 = vmatprep.subr.mxu0 0.0
        %753 = vmatpush1.msra.mxu0 0.0
        %754 = vmatprep.subr.mxu0 0.0
        %755 = vmatpush1.msra.mxu0 0.0
        %756 = vmatprep.subr.mxu0 0.0
        %757 = vmatpush1.msra.mxu0 0.0
        %758 = vmatprep.subr.mxu0 0.0
        %759 = vmatpush1.msra.mxu0 0.0
        %760 = vmatprep.subr.mxu0 0.0
        %761 = vmatpush1.msra.mxu0 0.0
        %762 = vmatprep.subr.mxu0 0.0
        %763 = vmatpush1.msra.mxu0 0.0
        %764 = vmatprep.subr.mxu0 0.0
        %765 = vmatpush1.msra.mxu0 0.0
        %766 = vmatprep.subr.mxu0 0.0
        %767 = vmatpush1.msra.mxu0 0.0
        %768 = vmatprep.subr.mxu0 0.0
        %769 = vmatpush1.msra.mxu0 0.0
        %770 = vmatprep.subr.mxu0 0.0
        %771 = vmatpush1.msra.mxu0 0.0
        %772 = vmatprep.subr.mxu0 0.0
        %773 = vmatpush1.msra.mxu0 0.0
        %774 = vmatprep.subr.mxu0 0.0
        %775 = vmatpush1.msra.mxu0 0.0
        %776 = vmatprep.subr.mxu0 0.0
        %777 = vmatpush1.msra.mxu0 0.0
        %778 = vmatprep.subr.mxu0 0.0
        %779 = vmatpush1.msra.mxu0 0.0
        %780 = vmatprep.subr.mxu0 0.0
        %781 = vmatpush1.msra.mxu0 0.0
        %782 = vmatprep.subr.mxu0 0.0
        %783 = vmatpush1.msra.mxu0 0.0
        %784 = vmatprep.subr.mxu0 0.0
        %785 = vmatpush1.msra.mxu0 0.0
        %786 = vmatprep.subr.mxu0 0.0
        %787 = vmatpush1.msra.mxu0 0.0
        %788 = vmatprep.subr.mxu0 0.0
        %789 = vmatpush1.msra.mxu0 0.0
        %790 = vmatprep.subr.mxu0 0.0
        %791 = vmatpush1.msra.mxu0 0.0
        %792 = vmatprep.subr.mxu0 0.0
        %793 = vmatpush1.msra.mxu0 0.0
        %794 = vmatprep.subr.mxu0 0.0
        %795 = vmatpush1.msra.mxu0 0.0
        %796 = vmatprep.subr.mxu0 0.0
        %797 = vmatpush1.msra.mxu0 0.0
        %798 = vmatprep.subr.mxu0 0.0
        %799 = vmatpush1.msra.mxu0 0.0
        %800 = vmatprep.subr.mxu0 0.0
        %801 = vmatpush1.msra.mxu0 0.0
        %802 = vmatprep.subr.mxu0 0.0
        %803 = vmatpush1.msra.mxu0 0.0
        %804 = vmatprep.mubr.f32.mxu0 0.0
        %805 = vmatmul.mubr.f32.gmra.mrb[0].mxu0 %v645
        %v806 = vpop.f32.mrb[0].mxu0
        %v807 = vadd.f32 %v486, %v806
        %v808 = vpop.f32.mrb[0].mxu0
        %809 = vmatprep.mubr.f32.mxu0 0.0
        %810 = vmatmul.mubr.f32.gmra.mrb[0].mxu0 %v648
        %v811 = vpop.f32.mrb[0].mxu0
        %v812 = vadd.f32 %v491, %v811
        %v813 = vpop.f32.mrb[0].mxu0
        %814 = vmatprep.mubr.f32.mxu0 0.0
        %815 = vmatmul.mubr.f32.gmra.mrb[0].mxu0 %v651
        %v816 = vpop.f32.mrb[0].mxu0
        %v817 = vadd.f32 %v496, %v816
        %v818 = vpop.f32.mrb[0].mxu0
        %819 = vmatprep.mubr.f32.mxu0 0.0
        %820 = vmatmul.mubr.f32.gmra.mrb[0].mxu0 %v654
        %v821 = vpop.f32.mrb[0].mxu0
        %v822 = vadd.f32 %v501, %v821
        %v823 = vpop.f32.mrb[0].mxu0
        %824 = vmatprep.mubr.f32.mxu0 0.0
        %825 = vmatmul.mubr.f32.gmra.mrb[0].mxu0 %v657
        %v826 = vpop.f32.mrb[0].mxu0
        %v827 = vadd.f32 %v506, %v826
        %v828 = vpop.f32.mrb[0].mxu0
        %829 = vmatprep.mubr.f32.mxu0 0.0
        %830 = vmatmul.mubr.f32.gmra.mrb[0].mxu0 %v660
        %v831 = vpop.f32.mrb[0].mxu0
        %v832 = vadd.f32 %v511, %v831
        %v833 = vpop.f32.mrb[0].mxu0
        %834 = vmatprep.mubr.f32.mxu0 0.0
        %835 = vmatmul.mubr.f32.gmra.mrb[0].mxu0 %v663
        %v836 = vpop.f32.mrb[0].mxu0
        %v837 = vadd.f32 %v516, %v836
        %v838 = vpop.f32.mrb[0].mxu0
        %839 = vmatprep.mubr.f32.mxu0 0.0
        %840 = vmatmul.mubr.f32.gmra.mrb[0].mxu0 %v666
        %v841 = vpop.f32.mrb[0].mxu0
        %v842 = vadd.f32 %v521, %v841
        %v843 = vpop.f32.mrb[0].mxu0
        %844 = vmatprep.mubr.f32.mxu0 0.0
        %845 = vmatmul.mubr.f32.gmra.mrb[0].mxu0 %v669
        %v846 = vpop.f32.mrb[0].mxu0
        %v847 = vadd.f32 %v526, %v846
        %v848 = vpop.f32.mrb[0].mxu0
        %849 = vmatprep.mubr.f32.mxu0 0.0
        %850 = vmatmul.mubr.f32.gmra.mrb[0].mxu0 %v672
        %v851 = vpop.f32.mrb[0].mxu0
        %v852 = vadd.f32 %v531, %v851
        %v853 = vpop.f32.mrb[0].mxu0
        %854 = vmatprep.mubr.f32.mxu0 0.0
        %855 = vmatmul.mubr.f32.gmra.mrb[0].mxu0 %v675
        %v856 = vpop.f32.mrb[0].mxu0
        %v857 = vadd.f32 %v536, %v856
        %v858 = vpop.f32.mrb[0].mxu0
        %859 = vmatprep.mubr.f32.mxu0 0.0
        %860 = vmatmul.mubr.f32.gmra.mrb[0].mxu0 %v678
        %v861 = vpop.f32.mrb[0].mxu0
        %v862 = vadd.f32 %v541, %v861
        %v863 = vpop.f32.mrb[0].mxu0
        %864 = vmatprep.mubr.f32.mxu0 0.0
        %865 = vmatmul.mubr.f32.gmra.mrb[0].mxu0 %v681
        %v866 = vpop.f32.mrb[0].mxu0
        %v867 = vadd.f32 %v546, %v866
        %v868 = vpop.f32.mrb[0].mxu0
        %869 = vmatprep.mubr.f32.mxu0 0.0
        %870 = vmatmul.mubr.f32.gmra.mrb[0].mxu0 %v684
        %v871 = vpop.f32.mrb[0].mxu0
        %v872 = vadd.f32 %v551, %v871
        %v873 = vpop.f32.mrb[0].mxu0
        %874 = vmatprep.mubr.f32.mxu0 0.0
        %875 = vmatmul.mubr.f32.gmra.mrb[0].mxu0 %v687
        %v876 = vpop.f32.mrb[0].mxu0
        %v877 = vadd.f32 %v556, %v876
        %v878 = vpop.f32.mrb[0].mxu0
        %879 = vmatprep.mubr.f32.mxu0 0.0
        %880 = vmatmul.mubr.f32.gmra.mrb[0].mxu0 %v690
        %v881 = vpop.f32.mrb[0].mxu0
        %v882 = vadd.f32 %v561, %v881
        %v883 = vpop.f32.mrb[0].mxu0
        %884 = vmatprep.mubr.f32.mxu0 0.0
        %885 = vmatmul.mubr.f32.gmra.mrb[0].mxu0 %v693
        %v886 = vpop.f32.mrb[0].mxu0
        %v887 = vadd.f32 %v566, %v886
        %v888 = vpop.f32.mrb[0].mxu0
        %889 = vmatprep.mubr.f32.mxu0 0.0
        %890 = vmatmul.mubr.f32.gmra.mrb[0].mxu0 %v696
        %v891 = vpop.f32.mrb[0].mxu0
        %v892 = vadd.f32 %v571, %v891
        %v893 = vpop.f32.mrb[0].mxu0
        %894 = vmatprep.mubr.f32.mxu0 0.0
        %895 = vmatmul.mubr.f32.gmra.mrb[0].mxu0 %v699
        %v896 = vpop.f32.mrb[0].mxu0
        %v897 = vadd.f32 %v576, %v896
        %v898 = vpop.f32.mrb[0].mxu0
        %899 = vmatprep.mubr.f32.mxu0 0.0
        %900 = vmatmul.mubr.f32.gmra.mrb[0].mxu0 %v702
        %v901 = vpop.f32.mrb[0].mxu0
        %v902 = vadd.f32 %v581, %v901
        %v903 = vpop.f32.mrb[0].mxu0
        %904 = vmatprep.mubr.f32.mxu0 0.0
        %905 = vmatmul.mubr.f32.gmra.mrb[0].mxu0 %v705
        %v906 = vpop.f32.mrb[0].mxu0
        %v907 = vadd.f32 %v586, %v906
        %v908 = vpop.f32.mrb[0].mxu0
        %909 = vmatprep.mubr.f32.mxu0 0.0
        %910 = vmatmul.mubr.f32.gmra.mrb[0].mxu0 %v708
        %v911 = vpop.f32.mrb[0].mxu0
        %v912 = vadd.f32 %v591, %v911
        %v913 = vpop.f32.mrb[0].mxu0
        %914 = vmatprep.mubr.f32.mxu0 0.0
        %915 = vmatmul.mubr.f32.gmra.mrb[0].mxu0 %v711
        %v916 = vpop.f32.mrb[0].mxu0
        %v917 = vadd.f32 %v596, %v916
        %v918 = vpop.f32.mrb[0].mxu0
        %919 = vmatprep.mubr.f32.mxu0 0.0
        %920 = vmatmul.mubr.f32.gmra.mrb[0].mxu0 %v714
        %v921 = vpop.f32.mrb[0].mxu0
        %v922 = vadd.f32 %v601, %v921
        %v923 = vpop.f32.mrb[0].mxu0
        %924 = vmatprep.mubr.f32.mxu0 0.0
        %925 = vmatmul.mubr.f32.gmra.mrb[0].mxu0 %v717
        %v926 = vpop.f32.mrb[0].mxu0
        %v927 = vadd.f32 %v606, %v926
        %v928 = vpop.f32.mrb[0].mxu0
        %929 = vmatprep.mubr.f32.mxu0 0.0
        %930 = vmatmul.mubr.f32.gmra.mrb[0].mxu0 %v720
        %v931 = vpop.f32.mrb[0].mxu0
        %v932 = vadd.f32 %v611, %v931
        %v933 = vpop.f32.mrb[0].mxu0
        %934 = vmatprep.mubr.f32.mxu0 0.0
        %935 = vmatmul.mubr.f32.gmra.mrb[0].mxu0 %v723
        %v936 = vpop.f32.mrb[0].mxu0
        %v937 = vadd.f32 %v616, %v936
        %v938 = vpop.f32.mrb[0].mxu0
        %939 = vmatprep.mubr.f32.mxu0 0.0
        %940 = vmatmul.mubr.f32.gmra.mrb[0].mxu0 %v726
        %v941 = vpop.f32.mrb[0].mxu0
        %v942 = vadd.f32 %v621, %v941
        %v943 = vpop.f32.mrb[0].mxu0
        %944 = vmatprep.mubr.f32.mxu0 0.0
        %945 = vmatmul.mubr.f32.gmra.mrb[0].mxu0 %v729
        %v946 = vpop.f32.mrb[0].mxu0
        %v947 = vadd.f32 %v626, %v946
        %v948 = vpop.f32.mrb[0].mxu0
        %949 = vmatprep.mubr.f32.mxu0 0.0
        %950 = vmatmul.mubr.f32.gmra.mrb[0].mxu0 %v732
        %v951 = vpop.f32.mrb[0].mxu0
        %v952 = vadd.f32 %v631, %v951
        %v953 = vpop.f32.mrb[0].mxu0
        %954 = vmatprep.mubr.f32.mxu0 0.0
        %955 = vmatmul.mubr.f32.gmra.mrb[0].mxu0 %v735
        %v956 = vpop.f32.mrb[0].mxu0
        %v957 = vadd.f32 %v636, %v956
        %v958 = vpop.f32.mrb[0].mxu0
        %959 = vmatprep.mubr.f32.mxu0 0.0
        %960 = vmatmul.mubr.f32.gmra.mrb[0].mxu0 %v738
        %v961 = vpop.f32.mrb[0].mxu0
        %v962 = vadd.f32 %v641, %v961
        %v963 = vpop.f32.mrb[0].mxu0
        %964 = vdwg.mxu0
        %v965 = vld [vmem:[%s244 + $0x2] sm:$0xff]
        %v966 = vld [vmem:[%s244 + $0xa] sm:$0xff]
        %v967 = vld [vmem:[%s244 + $0x1a] sm:$0xff]
        %v968 = vld [vmem:[%s244 + $0x22] sm:$0xff]
        %v969 = vld [vmem:[%s244 + $0x32] sm:$0xff]
        %v970 = vld [vmem:[%s244 + $0x3a] sm:$0xff]
        %v971 = vld [vmem:[%s244 + $0x4a] sm:$0xff]
        %v972 = vld [vmem:[%s244 + $0x52] sm:$0xff]
        %v973 = vld [vmem:[%s244 + $0x62] sm:$0xff]
        %v974 = vld [vmem:[%s244 + $0x6a] sm:$0xff]
        %v975 = vld [vmem:[%s244 + $0x7a] sm:$0xff]
        %v976 = vld [vmem:[%s244 + $0x82] sm:$0xff]
        %v977 = vld [vmem:[%s244 + $0x92] sm:$0xff]
        %v978 = vld [vmem:[%s244 + $0x9a] sm:$0xff]
        %v979 = vld [vmem:[%s244 + $0xaa] sm:$0xff]
        %v980 = vld [vmem:[%s244 + $0xb2] sm:$0xff]
        %v981 = vld [vmem:[%s244 + $0xc2] sm:$0xff]
        %v982 = vld [vmem:[%s244 + $0xca] sm:$0xff]
        %v983 = vld [vmem:[%s244 + $0xda] sm:$0xff]
        %v984 = vld [vmem:[%s244 + $0xe2] sm:$0xff]
        %v985 = vld [vmem:[%s244 + $0xf2] sm:$0xff]
        %v986 = vld [vmem:[%s244 + $0xfa] sm:$0xff]
        %v987 = vld [vmem:[%s244 + $0x10a] sm:$0xff]
        %v988 = vld [vmem:[%s244 + $0x112] sm:$0xff]
        %v989 = vld [vmem:[%s244 + $0x122] sm:$0xff]
        %v990 = vld [vmem:[%s244 + $0x12a] sm:$0xff]
        %v991 = vld [vmem:[%s244 + $0x13a] sm:$0xff]
        %v992 = vld [vmem:[%s244 + $0x142] sm:$0xff]
        %v993 = vld [vmem:[%s244 + $0x152] sm:$0xff]
        %v994 = vld [vmem:[%s244 + $0x15a] sm:$0xff]
        %v995 = vld [vmem:[%s244 + $0x16a] sm:$0xff]
        %v996 = vld [vmem:[%s244 + $0x172] sm:$0xff]
        %s997 = scalar_lea.vmem %s248, 16
        %v998 = vld [vmem:[%s997] sm:$0xff]
        %v1000 = vsel %vm322, %v965, 0
        %v1003 = vsel %vm322, %v966, 0
        %v1006 = vsel %vm322, %v967, 0
        %v1009 = vsel %vm322, %v968, 0
        %v1012 = vsel %vm322, %v969, 0
        %v1015 = vsel %vm322, %v970, 0
        %v1018 = vsel %vm322, %v971, 0
        %v1021 = vsel %vm322, %v972, 0
        %v1024 = vsel %vm322, %v973, 0
        %v1027 = vsel %vm322, %v974, 0
        %v1030 = vsel %vm322, %v975, 0
        %v1033 = vsel %vm322, %v976, 0
        %v1036 = vsel %vm322, %v977, 0
        %v1039 = vsel %vm322, %v978, 0
        %v1042 = vsel %vm322, %v979, 0
        %v1045 = vsel %vm322, %v980, 0
        %v1048 = vsel %vm322, %v981, 0
        %v1051 = vsel %vm322, %v982, 0
        %v1054 = vsel %vm322, %v983, 0
        %v1057 = vsel %vm322, %v984, 0
        %v1060 = vsel %vm322, %v985, 0
        %v1063 = vsel %vm322, %v986, 0
        %v1066 = vsel %vm322, %v987, 0
        %v1069 = vsel %vm322, %v988, 0
        %v1072 = vsel %vm322, %v989, 0
        %v1075 = vsel %vm322, %v990, 0
        %v1078 = vsel %vm322, %v991, 0
        %v1081 = vsel %vm322, %v992, 0
        %v1084 = vsel %vm322, %v993, 0
        %v1087 = vsel %vm322, %v994, 0
        %v1090 = vsel %vm322, %v995, 0
        %v1093 = vsel %vm322, %v996, 0
        %1095 = vmatprep.subr.mxu0 0.0
        %1096 = vmatpush1.msra.mxu0 %v998
        %1097 = vmatprep.subr.mxu0 0.0
        %1098 = vmatpush1.msra.mxu0 0.0
        %1099 = vmatprep.subr.mxu0 0.0
        %1100 = vmatpush1.msra.mxu0 0.0
        %1101 = vmatprep.subr.mxu0 0.0
        %1102 = vmatpush1.msra.mxu0 0.0
        %1103 = vmatprep.subr.mxu0 0.0
        %1104 = vmatpush1.msra.mxu0 0.0
        %1105 = vmatprep.subr.mxu0 0.0
        %1106 = vmatpush1.msra.mxu0 0.0
        %1107 = vmatprep.subr.mxu0 0.0
        %1108 = vmatpush1.msra.mxu0 0.0
        %1109 = vmatprep.subr.mxu0 0.0
        %1110 = vmatpush1.msra.mxu0 0.0
        %1111 = vmatprep.subr.mxu0 0.0
        %1112 = vmatpush1.msra.mxu0 0.0
        %1113 = vmatprep.subr.mxu0 0.0
        %1114 = vmatpush1.msra.mxu0 0.0
        %1115 = vmatprep.subr.mxu0 0.0
        %1116 = vmatpush1.msra.mxu0 0.0
        %1117 = vmatprep.subr.mxu0 0.0
        %1118 = vmatpush1.msra.mxu0 0.0
        %1119 = vmatprep.subr.mxu0 0.0
        %1120 = vmatpush1.msra.mxu0 0.0
        %1121 = vmatprep.subr.mxu0 0.0
        %1122 = vmatpush1.msra.mxu0 0.0
        %1123 = vmatprep.subr.mxu0 0.0
        %1124 = vmatpush1.msra.mxu0 0.0
        %1125 = vmatprep.subr.mxu0 0.0
        %1126 = vmatpush1.msra.mxu0 0.0
        %1127 = vmatprep.subr.mxu0 0.0
        %1128 = vmatpush1.msra.mxu0 0.0
        %1129 = vmatprep.subr.mxu0 0.0
        %1130 = vmatpush1.msra.mxu0 0.0
        %1131 = vmatprep.subr.mxu0 0.0
        %1132 = vmatpush1.msra.mxu0 0.0
        %1133 = vmatprep.subr.mxu0 0.0
        %1134 = vmatpush1.msra.mxu0 0.0
        %1135 = vmatprep.subr.mxu0 0.0
        %1136 = vmatpush1.msra.mxu0 0.0
        %1137 = vmatprep.subr.mxu0 0.0
        %1138 = vmatpush1.msra.mxu0 0.0
        %1139 = vmatprep.subr.mxu0 0.0
        %1140 = vmatpush1.msra.mxu0 0.0
        %1141 = vmatprep.subr.mxu0 0.0
        %1142 = vmatpush1.msra.mxu0 0.0
        %1143 = vmatprep.subr.mxu0 0.0
        %1144 = vmatpush1.msra.mxu0 0.0
        %1145 = vmatprep.subr.mxu0 0.0
        %1146 = vmatpush1.msra.mxu0 0.0
        %1147 = vmatprep.subr.mxu0 0.0
        %1148 = vmatpush1.msra.mxu0 0.0
        %1149 = vmatprep.subr.mxu0 0.0
        %1150 = vmatpush1.msra.mxu0 0.0
        %1151 = vmatprep.subr.mxu0 0.0
        %1152 = vmatpush1.msra.mxu0 0.0
        %1153 = vmatprep.subr.mxu0 0.0
        %1154 = vmatpush1.msra.mxu0 0.0
        %1155 = vmatprep.subr.mxu0 0.0
        %1156 = vmatpush1.msra.mxu0 0.0
        %1157 = vmatprep.subr.mxu0 0.0
        %1158 = vmatpush1.msra.mxu0 0.0
        %1159 = vmatprep.mubr.f32.mxu0 0.0
        %1160 = vmatmul.mubr.f32.gmra.mrb[0].mxu0 %v1000
        %v1161 = vpop.f32.mrb[0].mxu0
        %v1162 = vadd.f32 0.0, %v1161
        %v1163 = vpop.f32.mrb[0].mxu0
        %1164 = vmatprep.mubr.f32.mxu0 0.0
        %1165 = vmatmul.mubr.f32.gmra.mrb[0].mxu0 %v1003
        %v1166 = vpop.f32.mrb[0].mxu0
        %v1167 = vadd.f32 0.0, %v1166
        %v1168 = vpop.f32.mrb[0].mxu0
        %1169 = vmatprep.mubr.f32.mxu0 0.0
        %1170 = vmatmul.mubr.f32.gmra.mrb[0].mxu0 %v1006
        %v1171 = vpop.f32.mrb[0].mxu0
        %v1172 = vadd.f32 0.0, %v1171
        %v1173 = vpop.f32.mrb[0].mxu0
        %1174 = vmatprep.mubr.f32.mxu0 0.0
        %1175 = vmatmul.mubr.f32.gmra.mrb[0].mxu0 %v1009
        %v1176 = vpop.f32.mrb[0].mxu0
        %v1177 = vadd.f32 0.0, %v1176
        %v1178 = vpop.f32.mrb[0].mxu0
        %1179 = vmatprep.mubr.f32.mxu0 0.0
        %1180 = vmatmul.mubr.f32.gmra.mrb[0].mxu0 %v1012
        %v1181 = vpop.f32.mrb[0].mxu0
        %v1182 = vadd.f32 0.0, %v1181
        %v1183 = vpop.f32.mrb[0].mxu0
        %1184 = vmatprep.mubr.f32.mxu0 0.0
        %1185 = vmatmul.mubr.f32.gmra.mrb[0].mxu0 %v1015
        %v1186 = vpop.f32.mrb[0].mxu0
        %v1187 = vadd.f32 0.0, %v1186
        %v1188 = vpop.f32.mrb[0].mxu0
        %1189 = vmatprep.mubr.f32.mxu0 0.0
        %1190 = vmatmul.mubr.f32.gmra.mrb[0].mxu0 %v1018
        %v1191 = vpop.f32.mrb[0].mxu0
        %v1192 = vadd.f32 0.0, %v1191
        %v1193 = vpop.f32.mrb[0].mxu0
        %1194 = vmatprep.mubr.f32.mxu0 0.0
        %1195 = vmatmul.mubr.f32.gmra.mrb[0].mxu0 %v1021
        %v1196 = vpop.f32.mrb[0].mxu0
        %v1197 = vadd.f32 0.0, %v1196
        %v1198 = vpop.f32.mrb[0].mxu0
        %1199 = vmatprep.mubr.f32.mxu0 0.0
        %1200 = vmatmul.mubr.f32.gmra.mrb[0].mxu0 %v1024
        %v1201 = vpop.f32.mrb[0].mxu0
        %v1202 = vadd.f32 0.0, %v1201
        %v1203 = vpop.f32.mrb[0].mxu0
        %1204 = vmatprep.mubr.f32.mxu0 0.0
        %1205 = vmatmul.mubr.f32.gmra.mrb[0].mxu0 %v1027
        %v1206 = vpop.f32.mrb[0].mxu0
        %v1207 = vadd.f32 0.0, %v1206
        %v1208 = vpop.f32.mrb[0].mxu0
        %1209 = vmatprep.mubr.f32.mxu0 0.0
        %1210 = vmatmul.mubr.f32.gmra.mrb[0].mxu0 %v1030
        %v1211 = vpop.f32.mrb[0].mxu0
        %v1212 = vadd.f32 0.0, %v1211
        %v1213 = vpop.f32.mrb[0].mxu0
        %1214 = vmatprep.mubr.f32.mxu0 0.0
        %1215 = vmatmul.mubr.f32.gmra.mrb[0].mxu0 %v1033
        %v1216 = vpop.f32.mrb[0].mxu0
        %v1217 = vadd.f32 0.0, %v1216
        %v1218 = vpop.f32.mrb[0].mxu0
        %1219 = vmatprep.mubr.f32.mxu0 0.0
        %1220 = vmatmul.mubr.f32.gmra.mrb[0].mxu0 %v1036
        %v1221 = vpop.f32.mrb[0].mxu0
        %v1222 = vadd.f32 0.0, %v1221
        %v1223 = vpop.f32.mrb[0].mxu0
        %1224 = vmatprep.mubr.f32.mxu0 0.0
        %1225 = vmatmul.mubr.f32.gmra.mrb[0].mxu0 %v1039
        %v1226 = vpop.f32.mrb[0].mxu0
        %v1227 = vadd.f32 0.0, %v1226
        %v1228 = vpop.f32.mrb[0].mxu0
        %1229 = vmatprep.mubr.f32.mxu0 0.0
        %1230 = vmatmul.mubr.f32.gmra.mrb[0].mxu0 %v1042
        %v1231 = vpop.f32.mrb[0].mxu0
        %v1232 = vadd.f32 0.0, %v1231
        %v1233 = vpop.f32.mrb[0].mxu0
        %1234 = vmatprep.mubr.f32.mxu0 0.0
        %1235 = vmatmul.mubr.f32.gmra.mrb[0].mxu0 %v1045
        %v1236 = vpop.f32.mrb[0].mxu0
        %v1237 = vadd.f32 0.0, %v1236
        %v1238 = vpop.f32.mrb[0].mxu0
        %1239 = vmatprep.mubr.f32.mxu0 0.0
        %1240 = vmatmul.mubr.f32.gmra.mrb[0].mxu0 %v1048
        %v1241 = vpop.f32.mrb[0].mxu0
        %v1242 = vadd.f32 0.0, %v1241
        %v1243 = vpop.f32.mrb[0].mxu0
        %1244 = vmatprep.mubr.f32.mxu0 0.0
        %1245 = vmatmul.mubr.f32.gmra.mrb[0].mxu0 %v1051
        %v1246 = vpop.f32.mrb[0].mxu0
        %v1247 = vadd.f32 0.0, %v1246
        %v1248 = vpop.f32.mrb[0].mxu0
        %1249 = vmatprep.mubr.f32.mxu0 0.0
        %1250 = vmatmul.mubr.f32.gmra.mrb[0].mxu0 %v1054
        %v1251 = vpop.f32.mrb[0].mxu0
        %v1252 = vadd.f32 0.0, %v1251
        %v1253 = vpop.f32.mrb[0].mxu0
        %1254 = vmatprep.mubr.f32.mxu0 0.0
        %1255 = vmatmul.mubr.f32.gmra.mrb[0].mxu0 %v1057
        %v1256 = vpop.f32.mrb[0].mxu0
        %v1257 = vadd.f32 0.0, %v1256
        %v1258 = vpop.f32.mrb[0].mxu0
        %1259 = vmatprep.mubr.f32.mxu0 0.0
        %1260 = vmatmul.mubr.f32.gmra.mrb[0].mxu0 %v1060
        %v1261 = vpop.f32.mrb[0].mxu0
        %v1262 = vadd.f32 0.0, %v1261
        %v1263 = vpop.f32.mrb[0].mxu0
        %1264 = vmatprep.mubr.f32.mxu0 0.0
        %1265 = vmatmul.mubr.f32.gmra.mrb[0].mxu0 %v1063
        %v1266 = vpop.f32.mrb[0].mxu0
        %v1267 = vadd.f32 0.0, %v1266
        %v1268 = vpop.f32.mrb[0].mxu0
        %1269 = vmatprep.mubr.f32.mxu0 0.0
        %1270 = vmatmul.mubr.f32.gmra.mrb[0].mxu0 %v1066
        %v1271 = vpop.f32.mrb[0].mxu0
        %v1272 = vadd.f32 0.0, %v1271
        %v1273 = vpop.f32.mrb[0].mxu0
        %1274 = vmatprep.mubr.f32.mxu0 0.0
        %1275 = vmatmul.mubr.f32.gmra.mrb[0].mxu0 %v1069
        %v1276 = vpop.f32.mrb[0].mxu0
        %v1277 = vadd.f32 0.0, %v1276
        %v1278 = vpop.f32.mrb[0].mxu0
        %1279 = vmatprep.mubr.f32.mxu0 0.0
        %1280 = vmatmul.mubr.f32.gmra.mrb[0].mxu0 %v1072
        %v1281 = vpop.f32.mrb[0].mxu0
        %v1282 = vadd.f32 0.0, %v1281
        %v1283 = vpop.f32.mrb[0].mxu0
        %1284 = vmatprep.mubr.f32.mxu0 0.0
        %1285 = vmatmul.mubr.f32.gmra.mrb[0].mxu0 %v1075
        %v1286 = vpop.f32.mrb[0].mxu0
        %v1287 = vadd.f32 0.0, %v1286
        %v1288 = vpop.f32.mrb[0].mxu0
        %1289 = vmatprep.mubr.f32.mxu0 0.0
        %1290 = vmatmul.mubr.f32.gmra.mrb[0].mxu0 %v1078
        %v1291 = vpop.f32.mrb[0].mxu0
        %v1292 = vadd.f32 0.0, %v1291
        %v1293 = vpop.f32.mrb[0].mxu0
        %1294 = vmatprep.mubr.f32.mxu0 0.0
        %1295 = vmatmul.mubr.f32.gmra.mrb[0].mxu0 %v1081
        %v1296 = vpop.f32.mrb[0].mxu0
        %v1297 = vadd.f32 0.0, %v1296
        %v1298 = vpop.f32.mrb[0].mxu0
        %1299 = vmatprep.mubr.f32.mxu0 0.0
        %1300 = vmatmul.mubr.f32.gmra.mrb[0].mxu0 %v1084
        %v1301 = vpop.f32.mrb[0].mxu0
        %v1302 = vadd.f32 0.0, %v1301
        %v1303 = vpop.f32.mrb[0].mxu0
        %1304 = vmatprep.mubr.f32.mxu0 0.0
        %1305 = vmatmul.mubr.f32.gmra.mrb[0].mxu0 %v1087
        %v1306 = vpop.f32.mrb[0].mxu0
        %v1307 = vadd.f32 0.0, %v1306
        %v1308 = vpop.f32.mrb[0].mxu0
        %1309 = vmatprep.mubr.f32.mxu0 0.0
        %1310 = vmatmul.mubr.f32.gmra.mrb[0].mxu0 %v1090
        %v1311 = vpop.f32.mrb[0].mxu0
        %v1312 = vadd.f32 0.0, %v1311
        %v1313 = vpop.f32.mrb[0].mxu0
        %1314 = vmatprep.mubr.f32.mxu0 0.0
        %1315 = vmatmul.mubr.f32.gmra.mrb[0].mxu0 %v1093
        %v1316 = vpop.f32.mrb[0].mxu0
        %v1317 = vadd.f32 0.0, %v1316
        %v1318 = vpop.f32.mrb[0].mxu0
        %1319 = vdwg.mxu0
        %v1320 = vadd.f32 %v807, %v1162
        %v1321 = vadd.f32 %v812, %v1167
        %v1322 = vadd.f32 %v817, %v1172
        %v1323 = vadd.f32 %v822, %v1177
        %v1324 = vadd.f32 %v827, %v1182
        %v1325 = vadd.f32 %v832, %v1187
        %v1326 = vadd.f32 %v837, %v1192
        %v1327 = vadd.f32 %v842, %v1197
        %v1328 = vadd.f32 %v847, %v1202
        %v1329 = vadd.f32 %v852, %v1207
        %v1330 = vadd.f32 %v857, %v1212
        %v1331 = vadd.f32 %v862, %v1217
        %v1332 = vadd.f32 %v867, %v1222
        %v1333 = vadd.f32 %v872, %v1227
        %v1334 = vadd.f32 %v877, %v1232
        %v1335 = vadd.f32 %v882, %v1237
        %v1336 = vadd.f32 %v887, %v1242
        %v1337 = vadd.f32 %v892, %v1247
        %v1338 = vadd.f32 %v897, %v1252
        %v1339 = vadd.f32 %v902, %v1257
        %v1340 = vadd.f32 %v907, %v1262
        %v1341 = vadd.f32 %v912, %v1267
        %v1342 = vadd.f32 %v917, %v1272
        %v1343 = vadd.f32 %v922, %v1277
        %v1344 = vadd.f32 %v927, %v1282
        %v1345 = vadd.f32 %v932, %v1287
        %v1346 = vadd.f32 %v937, %v1292
        %v1347 = vadd.f32 %v942, %v1297
        %v1348 = vadd.f32 %v947, %v1302
        %v1349 = vadd.f32 %v952, %v1307
        %v1350 = vadd.f32 %v957, %v1312
        %v1351 = vadd.f32 %v962, %v1317
        %s1352 = scalar_lea.vmem %s244, 24
        %v1353 = vld [vmem:[%s1352] sm:$0xff]
        %v1354 = vld [vmem:[%s1352 + $0x8] sm:$0xff]
        %v1355 = vld [vmem:[%s1352 + $0x18] sm:$0xff]
        %v1356 = vld [vmem:[%s1352 + $0x20] sm:$0xff]
        %v1357 = vld [vmem:[%s1352 + $0x30] sm:$0xff]
        %v1358 = vld [vmem:[%s1352 + $0x38] sm:$0xff]
        %v1359 = vld [vmem:[%s1352 + $0x48] sm:$0xff]
        %v1360 = vld [vmem:[%s1352 + $0x50] sm:$0xff]
        %v1361 = vld [vmem:[%s1352 + $0x60] sm:$0xff]
        %v1362 = vld [vmem:[%s1352 + $0x68] sm:$0xff]
        %v1363 = vld [vmem:[%s1352 + $0x78] sm:$0xff]
        %v1364 = vld [vmem:[%s1352 + $0x80] sm:$0xff]
        %v1365 = vld [vmem:[%s1352 + $0x90] sm:$0xff]
        %v1366 = vld [vmem:[%s1352 + $0x98] sm:$0xff]
        %v1367 = vld [vmem:[%s1352 + $0xa8] sm:$0xff]
        %v1368 = vld [vmem:[%s1352 + $0xb0] sm:$0xff]
        %v1369 = vld [vmem:[%s1352 + $0xc0] sm:$0xff]
        %v1370 = vld [vmem:[%s1352 + $0xc8] sm:$0xff]
        %v1371 = vld [vmem:[%s1352 + $0xd8] sm:$0xff]
        %v1372 = vld [vmem:[%s1352 + $0xe0] sm:$0xff]
        %v1373 = vld [vmem:[%s1352 + $0xf0] sm:$0xff]
        %v1374 = vld [vmem:[%s1352 + $0xf8] sm:$0xff]
        %v1375 = vld [vmem:[%s1352 + $0x108] sm:$0xff]
        %v1376 = vld [vmem:[%s1352 + $0x110] sm:$0xff]
        %v1377 = vld [vmem:[%s1352 + $0x120] sm:$0xff]
        %v1378 = vld [vmem:[%s1352 + $0x128] sm:$0xff]
        %v1379 = vld [vmem:[%s1352 + $0x138] sm:$0xff]
        %v1380 = vld [vmem:[%s1352 + $0x140] sm:$0xff]
        %v1381 = vld [vmem:[%s1352 + $0x150] sm:$0xff]
        %v1382 = vld [vmem:[%s1352 + $0x158] sm:$0xff]
        %v1383 = vld [vmem:[%s1352 + $0x168] sm:$0xff]
        %v1384 = vld [vmem:[%s1352 + $0x170] sm:$0xff]
        %s1385 = scalar_lea.vmem %s248, 24
        %v1386 = vld [vmem:[%s1385] sm:$0xff]
        %v1388 = vsel %vm322, %v1353, 0
        %v1391 = vsel %vm322, %v1354, 0
        %v1394 = vsel %vm322, %v1355, 0
        %v1397 = vsel %vm322, %v1356, 0
        %v1400 = vsel %vm322, %v1357, 0
        %v1403 = vsel %vm322, %v1358, 0
        %v1406 = vsel %vm322, %v1359, 0
        %v1409 = vsel %vm322, %v1360, 0
        %v1412 = vsel %vm322, %v1361, 0
        %v1415 = vsel %vm322, %v1362, 0
        %v1418 = vsel %vm322, %v1363, 0
        %v1421 = vsel %vm322, %v1364, 0
        %v1424 = vsel %vm322, %v1365, 0
        %v1427 = vsel %vm322, %v1366, 0
        %v1430 = vsel %vm322, %v1367, 0
        %v1433 = vsel %vm322, %v1368, 0
        %v1436 = vsel %vm322, %v1369, 0
        %v1439 = vsel %vm322, %v1370, 0
        %v1442 = vsel %vm322, %v1371, 0
        %v1445 = vsel %vm322, %v1372, 0
        %v1448 = vsel %vm322, %v1373, 0
        %v1451 = vsel %vm322, %v1374, 0
        %v1454 = vsel %vm322, %v1375, 0
        %v1457 = vsel %vm322, %v1376, 0
        %v1460 = vsel %vm322, %v1377, 0
        %v1463 = vsel %vm322, %v1378, 0
        %v1466 = vsel %vm322, %v1379, 0
        %v1469 = vsel %vm322, %v1380, 0
        %v1472 = vsel %vm322, %v1381, 0
        %v1475 = vsel %vm322, %v1382, 0
        %v1478 = vsel %vm322, %v1383, 0
        %v1481 = vsel %vm322, %v1384, 0
        %1483 = vmatprep.subr.mxu0 0.0
        %1484 = vmatpush1.msra.mxu0 %v1386
        %1485 = vmatprep.subr.mxu0 0.0
        %1486 = vmatpush1.msra.mxu0 0.0
        %1487 = vmatprep.subr.mxu0 0.0
        %1488 = vmatpush1.msra.mxu0 0.0
        %1489 = vmatprep.subr.mxu0 0.0
        %1490 = vmatpush1.msra.mxu0 0.0
        %1491 = vmatprep.subr.mxu0 0.0
        %1492 = vmatpush1.msra.mxu0 0.0
        %1493 = vmatprep.subr.mxu0 0.0
        %1494 = vmatpush1.msra.mxu0 0.0
        %1495 = vmatprep.subr.mxu0 0.0
        %1496 = vmatpush1.msra.mxu0 0.0
        %1497 = vmatprep.subr.mxu0 0.0
        %1498 = vmatpush1.msra.mxu0 0.0
        %1499 = vmatprep.subr.mxu0 0.0
        %1500 = vmatpush1.msra.mxu0 0.0
        %1501 = vmatprep.subr.mxu0 0.0
        %1502 = vmatpush1.msra.mxu0 0.0
        %1503 = vmatprep.subr.mxu0 0.0
        %1504 = vmatpush1.msra.mxu0 0.0
        %1505 = vmatprep.subr.mxu0 0.0
        %1506 = vmatpush1.msra.mxu0 0.0
        %1507 = vmatprep.subr.mxu0 0.0
        %1508 = vmatpush1.msra.mxu0 0.0
        %1509 = vmatprep.subr.mxu0 0.0
        %1510 = vmatpush1.msra.mxu0 0.0
        %1511 = vmatprep.subr.mxu0 0.0
        %1512 = vmatpush1.msra.mxu0 0.0
        %1513 = vmatprep.subr.mxu0 0.0
        %1514 = vmatpush1.msra.mxu0 0.0
        %1515 = vmatprep.subr.mxu0 0.0
        %1516 = vmatpush1.msra.mxu0 0.0
        %1517 = vmatprep.subr.mxu0 0.0
        %1518 = vmatpush1.msra.mxu0 0.0
        %1519 = vmatprep.subr.mxu0 0.0
        %1520 = vmatpush1.msra.mxu0 0.0
        %1521 = vmatprep.subr.mxu0 0.0
        %1522 = vmatpush1.msra.mxu0 0.0
        %1523 = vmatprep.subr.mxu0 0.0
        %1524 = vmatpush1.msra.mxu0 0.0
        %1525 = vmatprep.subr.mxu0 0.0
        %1526 = vmatpush1.msra.mxu0 0.0
        %1527 = vmatprep.subr.mxu0 0.0
        %1528 = vmatpush1.msra.mxu0 0.0
        %1529 = vmatprep.subr.mxu0 0.0
        %1530 = vmatpush1.msra.mxu0 0.0
        %1531 = vmatprep.subr.mxu0 0.0
        %1532 = vmatpush1.msra.mxu0 0.0
        %1533 = vmatprep.subr.mxu0 0.0
        %1534 = vmatpush1.msra.mxu0 0.0
        %1535 = vmatprep.subr.mxu0 0.0
        %1536 = vmatpush1.msra.mxu0 0.0
        %1537 = vmatprep.subr.mxu0 0.0
        %1538 = vmatpush1.msra.mxu0 0.0
        %1539 = vmatprep.subr.mxu0 0.0
        %1540 = vmatpush1.msra.mxu0 0.0
        %1541 = vmatprep.subr.mxu0 0.0
        %1542 = vmatpush1.msra.mxu0 0.0
        %1543 = vmatprep.subr.mxu0 0.0
        %1544 = vmatpush1.msra.mxu0 0.0
        %1545 = vmatprep.subr.mxu0 0.0
        %1546 = vmatpush1.msra.mxu0 0.0
        %1547 = vmatprep.mubr.f32.mxu0 0.0
        %1548 = vmatmul.mubr.f32.gmra.mrb[0].mxu0 %v1388
        %v1549 = vpop.f32.mrb[0].mxu0
        %v1550 = vadd.f32 0.0, %v1549
        %v1551 = vpop.f32.mrb[0].mxu0
        %1552 = vmatprep.mubr.f32.mxu0 0.0
        %1553 = vmatmul.mubr.f32.gmra.mrb[0].mxu0 %v1391
        %v1554 = vpop.f32.mrb[0].mxu0
        %v1555 = vadd.f32 0.0, %v1554
        %v1556 = vpop.f32.mrb[0].mxu0
        %1557 = vmatprep.mubr.f32.mxu0 0.0
        %1558 = vmatmul.mubr.f32.gmra.mrb[0].mxu0 %v1394
        %v1559 = vpop.f32.mrb[0].mxu0
        %v1560 = vadd.f32 0.0, %v1559
        %v1561 = vpop.f32.mrb[0].mxu0
        %1562 = vmatprep.mubr.f32.mxu0 0.0
        %1563 = vmatmul.mubr.f32.gmra.mrb[0].mxu0 %v1397
        %v1564 = vpop.f32.mrb[0].mxu0
        %v1565 = vadd.f32 0.0, %v1564
        %v1566 = vpop.f32.mrb[0].mxu0
        %1567 = vmatprep.mubr.f32.mxu0 0.0
        %1568 = vmatmul.mubr.f32.gmra.mrb[0].mxu0 %v1400
        %v1569 = vpop.f32.mrb[0].mxu0
        %v1570 = vadd.f32 0.0, %v1569
        %v1571 = vpop.f32.mrb[0].mxu0
        %1572 = vmatprep.mubr.f32.mxu0 0.0
        %1573 = vmatmul.mubr.f32.gmra.mrb[0].mxu0 %v1403
        %v1574 = vpop.f32.mrb[0].mxu0
        %v1575 = vadd.f32 0.0, %v1574
        %v1576 = vpop.f32.mrb[0].mxu0
        %1577 = vmatprep.mubr.f32.mxu0 0.0
        %1578 = vmatmul.mubr.f32.gmra.mrb[0].mxu0 %v1406
        %v1579 = vpop.f32.mrb[0].mxu0
        %v1580 = vadd.f32 0.0, %v1579
        %v1581 = vpop.f32.mrb[0].mxu0
        %1582 = vmatprep.mubr.f32.mxu0 0.0
        %1583 = vmatmul.mubr.f32.gmra.mrb[0].mxu0 %v1409
        %v1584 = vpop.f32.mrb[0].mxu0
        %v1585 = vadd.f32 0.0, %v1584
        %v1586 = vpop.f32.mrb[0].mxu0
        %1587 = vmatprep.mubr.f32.mxu0 0.0
        %1588 = vmatmul.mubr.f32.gmra.mrb[0].mxu0 %v1412
        %v1589 = vpop.f32.mrb[0].mxu0
        %v1590 = vadd.f32 0.0, %v1589
        %v1591 = vpop.f32.mrb[0].mxu0
        %1592 = vmatprep.mubr.f32.mxu0 0.0
        %1593 = vmatmul.mubr.f32.gmra.mrb[0].mxu0 %v1415
        %v1594 = vpop.f32.mrb[0].mxu0
        %v1595 = vadd.f32 0.0, %v1594
        %v1596 = vpop.f32.mrb[0].mxu0
        %1597 = vmatprep.mubr.f32.mxu0 0.0
        %1598 = vmatmul.mubr.f32.gmra.mrb[0].mxu0 %v1418
        %v1599 = vpop.f32.mrb[0].mxu0
        %v1600 = vadd.f32 0.0, %v1599
        %v1601 = vpop.f32.mrb[0].mxu0
        %1602 = vmatprep.mubr.f32.mxu0 0.0
        %1603 = vmatmul.mubr.f32.gmra.mrb[0].mxu0 %v1421
        %v1604 = vpop.f32.mrb[0].mxu0
        %v1605 = vadd.f32 0.0, %v1604
        %v1606 = vpop.f32.mrb[0].mxu0
        %1607 = vmatprep.mubr.f32.mxu0 0.0
        %1608 = vmatmul.mubr.f32.gmra.mrb[0].mxu0 %v1424
        %v1609 = vpop.f32.mrb[0].mxu0
        %v1610 = vadd.f32 0.0, %v1609
        %v1611 = vpop.f32.mrb[0].mxu0
        %1612 = vmatprep.mubr.f32.mxu0 0.0
        %1613 = vmatmul.mubr.f32.gmra.mrb[0].mxu0 %v1427
        %v1614 = vpop.f32.mrb[0].mxu0
        %v1615 = vadd.f32 0.0, %v1614
        %v1616 = vpop.f32.mrb[0].mxu0
        %1617 = vmatprep.mubr.f32.mxu0 0.0
        %1618 = vmatmul.mubr.f32.gmra.mrb[0].mxu0 %v1430
        %v1619 = vpop.f32.mrb[0].mxu0
        %v1620 = vadd.f32 0.0, %v1619
        %v1621 = vpop.f32.mrb[0].mxu0
        %1622 = vmatprep.mubr.f32.mxu0 0.0
        %1623 = vmatmul.mubr.f32.gmra.mrb[0].mxu0 %v1433
        %v1624 = vpop.f32.mrb[0].mxu0
        %v1625 = vadd.f32 0.0, %v1624
        %v1626 = vpop.f32.mrb[0].mxu0
        %1627 = vmatprep.mubr.f32.mxu0 0.0
        %1628 = vmatmul.mubr.f32.gmra.mrb[0].mxu0 %v1436
        %v1629 = vpop.f32.mrb[0].mxu0
        %v1630 = vadd.f32 0.0, %v1629
        %v1631 = vpop.f32.mrb[0].mxu0
        %1632 = vmatprep.mubr.f32.mxu0 0.0
        %1633 = vmatmul.mubr.f32.gmra.mrb[0].mxu0 %v1439
        %v1634 = vpop.f32.mrb[0].mxu0
        %v1635 = vadd.f32 0.0, %v1634
        %v1636 = vpop.f32.mrb[0].mxu0
        %1637 = vmatprep.mubr.f32.mxu0 0.0
        %1638 = vmatmul.mubr.f32.gmra.mrb[0].mxu0 %v1442
        %v1639 = vpop.f32.mrb[0].mxu0
        %v1640 = vadd.f32 0.0, %v1639
        %v1641 = vpop.f32.mrb[0].mxu0
        %1642 = vmatprep.mubr.f32.mxu0 0.0
        %1643 = vmatmul.mubr.f32.gmra.mrb[0].mxu0 %v1445
        %v1644 = vpop.f32.mrb[0].mxu0
        %v1645 = vadd.f32 0.0, %v1644
        %v1646 = vpop.f32.mrb[0].mxu0
        %1647 = vmatprep.mubr.f32.mxu0 0.0
        %1648 = vmatmul.mubr.f32.gmra.mrb[0].mxu0 %v1448
        %v1649 = vpop.f32.mrb[0].mxu0
        %v1650 = vadd.f32 0.0, %v1649
        %v1651 = vpop.f32.mrb[0].mxu0
        %1652 = vmatprep.mubr.f32.mxu0 0.0
        %1653 = vmatmul.mubr.f32.gmra.mrb[0].mxu0 %v1451
        %v1654 = vpop.f32.mrb[0].mxu0
        %v1655 = vadd.f32 0.0, %v1654
        %v1656 = vpop.f32.mrb[0].mxu0
        %1657 = vmatprep.mubr.f32.mxu0 0.0
        %1658 = vmatmul.mubr.f32.gmra.mrb[0].mxu0 %v1454
        %v1659 = vpop.f32.mrb[0].mxu0
        %v1660 = vadd.f32 0.0, %v1659
        %v1661 = vpop.f32.mrb[0].mxu0
        %1662 = vmatprep.mubr.f32.mxu0 0.0
        %1663 = vmatmul.mubr.f32.gmra.mrb[0].mxu0 %v1457
        %v1664 = vpop.f32.mrb[0].mxu0
        %v1665 = vadd.f32 0.0, %v1664
        %v1666 = vpop.f32.mrb[0].mxu0
        %1667 = vmatprep.mubr.f32.mxu0 0.0
        %1668 = vmatmul.mubr.f32.gmra.mrb[0].mxu0 %v1460
        %v1669 = vpop.f32.mrb[0].mxu0
        %v1670 = vadd.f32 0.0, %v1669
        %v1671 = vpop.f32.mrb[0].mxu0
        %1672 = vmatprep.mubr.f32.mxu0 0.0
        %1673 = vmatmul.mubr.f32.gmra.mrb[0].mxu0 %v1463
        %v1674 = vpop.f32.mrb[0].mxu0
        %v1675 = vadd.f32 0.0, %v1674
        %v1676 = vpop.f32.mrb[0].mxu0
        %1677 = vmatprep.mubr.f32.mxu0 0.0
        %1678 = vmatmul.mubr.f32.gmra.mrb[0].mxu0 %v1466
        %v1679 = vpop.f32.mrb[0].mxu0
        %v1680 = vadd.f32 0.0, %v1679
        %v1681 = vpop.f32.mrb[0].mxu0
        %1682 = vmatprep.mubr.f32.mxu0 0.0
        %1683 = vmatmul.mubr.f32.gmra.mrb[0].mxu0 %v1469
        %v1684 = vpop.f32.mrb[0].mxu0
        %v1685 = vadd.f32 0.0, %v1684
        %v1686 = vpop.f32.mrb[0].mxu0
        %1687 = vmatprep.mubr.f32.mxu0 0.0
        %1688 = vmatmul.mubr.f32.gmra.mrb[0].mxu0 %v1472
        %v1689 = vpop.f32.mrb[0].mxu0
        %v1690 = vadd.f32 0.0, %v1689
        %v1691 = vpop.f32.mrb[0].mxu0
        %1692 = vmatprep.mubr.f32.mxu0 0.0
        %1693 = vmatmul.mubr.f32.gmra.mrb[0].mxu0 %v1475
        %v1694 = vpop.f32.mrb[0].mxu0
        %v1695 = vadd.f32 0.0, %v1694
        %v1696 = vpop.f32.mrb[0].mxu0
        %1697 = vmatprep.mubr.f32.mxu0 0.0
        %1698 = vmatmul.mubr.f32.gmra.mrb[0].mxu0 %v1478
        %v1699 = vpop.f32.mrb[0].mxu0
        %v1700 = vadd.f32 0.0, %v1699
        %v1701 = vpop.f32.mrb[0].mxu0
        %1702 = vmatprep.mubr.f32.mxu0 0.0
        %1703 = vmatmul.mubr.f32.gmra.mrb[0].mxu0 %v1481
        %v1704 = vpop.f32.mrb[0].mxu0
        %v1705 = vadd.f32 0.0, %v1704
        %v1706 = vpop.f32.mrb[0].mxu0
        %1707 = vdwg.mxu0
        %v1708 = vadd.f32 %v1320, %v1550
        %v1709 = vadd.f32 %v1321, %v1555
        %v1710 = vadd.f32 %v1322, %v1560
        %v1711 = vadd.f32 %v1323, %v1565
        %v1712 = vadd.f32 %v1324, %v1570
        %v1713 = vadd.f32 %v1325, %v1575
        %v1714 = vadd.f32 %v1326, %v1580
        %v1715 = vadd.f32 %v1327, %v1585
        %v1716 = vadd.f32 %v1328, %v1590
        %v1717 = vadd.f32 %v1329, %v1595
        %v1718 = vadd.f32 %v1330, %v1600
        %v1719 = vadd.f32 %v1331, %v1605
        %v1720 = vadd.f32 %v1332, %v1610
        %v1721 = vadd.f32 %v1333, %v1615
        %v1722 = vadd.f32 %v1334, %v1620
        %v1723 = vadd.f32 %v1335, %v1625
        %v1724 = vadd.f32 %v1336, %v1630
        %v1725 = vadd.f32 %v1337, %v1635
        %v1726 = vadd.f32 %v1338, %v1640
        %v1727 = vadd.f32 %v1339, %v1645
        %v1728 = vadd.f32 %v1340, %v1650
        %v1729 = vadd.f32 %v1341, %v1655
        %v1730 = vadd.f32 %v1342, %v1660
        %v1731 = vadd.f32 %v1343, %v1665
        %v1732 = vadd.f32 %v1344, %v1670
        %v1733 = vadd.f32 %v1345, %v1675
        %v1734 = vadd.f32 %v1346, %v1680
        %v1735 = vadd.f32 %v1347, %v1685
        %v1736 = vadd.f32 %v1348, %v1690
        %v1737 = vadd.f32 %v1349, %v1695
        %v1738 = vadd.f32 %v1350, %v1700
        %v1739 = vadd.f32 %v1351, %v1705
        %v1740 = vld [vmem:[%s1352 + $0x1] sm:$0xff]
        %v1741 = vld [vmem:[%s1352 + $0x9] sm:$0xff]
        %v1742 = vld [vmem:[%s1352 + $0x19] sm:$0xff]
        %v1743 = vld [vmem:[%s1352 + $0x21] sm:$0xff]
        %v1744 = vld [vmem:[%s1352 + $0x31] sm:$0xff]
        %v1745 = vld [vmem:[%s1352 + $0x39] sm:$0xff]
        %v1746 = vld [vmem:[%s1352 + $0x49] sm:$0xff]
        %v1747 = vld [vmem:[%s1352 + $0x51] sm:$0xff]
        %v1748 = vld [vmem:[%s1352 + $0x61] sm:$0xff]
        %v1749 = vld [vmem:[%s1352 + $0x69] sm:$0xff]
        %v1750 = vld [vmem:[%s1352 + $0x79] sm:$0xff]
        %v1751 = vld [vmem:[%s1352 + $0x81] sm:$0xff]
        %v1752 = vld [vmem:[%s1352 + $0x91] sm:$0xff]
        %v1753 = vld [vmem:[%s1352 + $0x99] sm:$0xff]
        %v1754 = vld [vmem:[%s1352 + $0xa9] sm:$0xff]
        %v1755 = vld [vmem:[%s1352 + $0xb1] sm:$0xff]
        %v1756 = vld [vmem:[%s1352 + $0xc1] sm:$0xff]
        %v1757 = vld [vmem:[%s1352 + $0xc9] sm:$0xff]
        %v1758 = vld [vmem:[%s1352 + $0xd9] sm:$0xff]
        %v1759 = vld [vmem:[%s1352 + $0xe1] sm:$0xff]
        %v1760 = vld [vmem:[%s1352 + $0xf1] sm:$0xff]
        %v1761 = vld [vmem:[%s1352 + $0xf9] sm:$0xff]
        %v1762 = vld [vmem:[%s1352 + $0x109] sm:$0xff]
        %v1763 = vld [vmem:[%s1352 + $0x111] sm:$0xff]
        %v1764 = vld [vmem:[%s1352 + $0x121] sm:$0xff]
        %v1765 = vld [vmem:[%s1352 + $0x129] sm:$0xff]
        %v1766 = vld [vmem:[%s1352 + $0x139] sm:$0xff]
        %v1767 = vld [vmem:[%s1352 + $0x141] sm:$0xff]
        %v1768 = vld [vmem:[%s1352 + $0x151] sm:$0xff]
        %v1769 = vld [vmem:[%s1352 + $0x159] sm:$0xff]
        %v1770 = vld [vmem:[%s1352 + $0x169] sm:$0xff]
        %v1771 = vld [vmem:[%s1352 + $0x171] sm:$0xff]
        %s1772 = scalar_lea.vmem %s248, 32
        %v1773 = vld [vmem:[%s1772] sm:$0xff]
        %v1775 = vsel %vm322, %v1740, 0
        %v1778 = vsel %vm322, %v1741, 0
        %v1781 = vsel %vm322, %v1742, 0
        %v1784 = vsel %vm322, %v1743, 0
        %v1787 = vsel %vm322, %v1744, 0
        %v1790 = vsel %vm322, %v1745, 0
        %v1793 = vsel %vm322, %v1746, 0
        %v1796 = vsel %vm322, %v1747, 0
        %v1799 = vsel %vm322, %v1748, 0
        %v1802 = vsel %vm322, %v1749, 0
        %v1805 = vsel %vm322, %v1750, 0
        %v1808 = vsel %vm322, %v1751, 0
        %v1811 = vsel %vm322, %v1752, 0
        %v1814 = vsel %vm322, %v1753, 0
        %v1817 = vsel %vm322, %v1754, 0
        %v1820 = vsel %vm322, %v1755, 0
        %v1823 = vsel %vm322, %v1756, 0
        %v1826 = vsel %vm322, %v1757, 0
        %v1829 = vsel %vm322, %v1758, 0
        %v1832 = vsel %vm322, %v1759, 0
        %v1835 = vsel %vm322, %v1760, 0
        %v1838 = vsel %vm322, %v1761, 0
        %v1841 = vsel %vm322, %v1762, 0
        %v1844 = vsel %vm322, %v1763, 0
        %v1847 = vsel %vm322, %v1764, 0
        %v1850 = vsel %vm322, %v1765, 0
        %v1853 = vsel %vm322, %v1766, 0
        %v1856 = vsel %vm322, %v1767, 0
        %v1859 = vsel %vm322, %v1768, 0
        %v1862 = vsel %vm322, %v1769, 0
        %v1865 = vsel %vm322, %v1770, 0
        %v1868 = vsel %vm322, %v1771, 0
        %1870 = vmatprep.subr.mxu0 0.0
        %1871 = vmatpush1.msra.mxu0 %v1773
        %1872 = vmatprep.subr.mxu0 0.0
        %1873 = vmatpush1.msra.mxu0 0.0
        %1874 = vmatprep.subr.mxu0 0.0
        %1875 = vmatpush1.msra.mxu0 0.0
        %1876 = vmatprep.subr.mxu0 0.0
        %1877 = vmatpush1.msra.mxu0 0.0
        %1878 = vmatprep.subr.mxu0 0.0
        %1879 = vmatpush1.msra.mxu0 0.0
        %1880 = vmatprep.subr.mxu0 0.0
        %1881 = vmatpush1.msra.mxu0 0.0
        %1882 = vmatprep.subr.mxu0 0.0
        %1883 = vmatpush1.msra.mxu0 0.0
        %1884 = vmatprep.subr.mxu0 0.0
        %1885 = vmatpush1.msra.mxu0 0.0
        %1886 = vmatprep.subr.mxu0 0.0
        %1887 = vmatpush1.msra.mxu0 0.0
        %1888 = vmatprep.subr.mxu0 0.0
        %1889 = vmatpush1.msra.mxu0 0.0
        %1890 = vmatprep.subr.mxu0 0.0
        %1891 = vmatpush1.msra.mxu0 0.0
        %1892 = vmatprep.subr.mxu0 0.0
        %1893 = vmatpush1.msra.mxu0 0.0
        %1894 = vmatprep.subr.mxu0 0.0
        %1895 = vmatpush1.msra.mxu0 0.0
        %1896 = vmatprep.subr.mxu0 0.0
        %1897 = vmatpush1.msra.mxu0 0.0
        %1898 = vmatprep.subr.mxu0 0.0
        %1899 = vmatpush1.msra.mxu0 0.0
        %1900 = vmatprep.subr.mxu0 0.0
        %1901 = vmatpush1.msra.mxu0 0.0
        %1902 = vmatprep.subr.mxu0 0.0
        %1903 = vmatpush1.msra.mxu0 0.0
        %1904 = vmatprep.subr.mxu0 0.0
        %1905 = vmatpush1.msra.mxu0 0.0
        %1906 = vmatprep.subr.mxu0 0.0
        %1907 = vmatpush1.msra.mxu0 0.0
        %1908 = vmatprep.subr.mxu0 0.0
        %1909 = vmatpush1.msra.mxu0 0.0
        %1910 = vmatprep.subr.mxu0 0.0
        %1911 = vmatpush1.msra.mxu0 0.0
        %1912 = vmatprep.subr.mxu0 0.0
        %1913 = vmatpush1.msra.mxu0 0.0
        %1914 = vmatprep.subr.mxu0 0.0
        %1915 = vmatpush1.msra.mxu0 0.0
        %1916 = vmatprep.subr.mxu0 0.0
        %1917 = vmatpush1.msra.mxu0 0.0
        %1918 = vmatprep.subr.mxu0 0.0
        %1919 = vmatpush1.msra.mxu0 0.0
        %1920 = vmatprep.subr.mxu0 0.0
        %1921 = vmatpush1.msra.mxu0 0.0
        %1922 = vmatprep.subr.mxu0 0.0
        %1923 = vmatpush1.msra.mxu0 0.0
        %1924 = vmatprep.subr.mxu0 0.0
        %1925 = vmatpush1.msra.mxu0 0.0
        %1926 = vmatprep.subr.mxu0 0.0
        %1927 = vmatpush1.msra.mxu0 0.0
        %1928 = vmatprep.subr.mxu0 0.0
        %1929 = vmatpush1.msra.mxu0 0.0
        %1930 = vmatprep.subr.mxu0 0.0
        %1931 = vmatpush1.msra.mxu0 0.0
        %1932 = vmatprep.subr.mxu0 0.0
        %1933 = vmatpush1.msra.mxu0 0.0
        %1934 = vmatprep.mubr.f32.mxu0 0.0
        %1935 = vmatmul.mubr.f32.gmra.mrb[0].mxu0 %v1775
        %v1936 = vpop.f32.mrb[0].mxu0
        %v1937 = vadd.f32 0.0, %v1936
        %v1938 = vpop.f32.mrb[0].mxu0
        %1939 = vmatprep.mubr.f32.mxu0 0.0
        %1940 = vmatmul.mubr.f32.gmra.mrb[0].mxu0 %v1778
        %v1941 = vpop.f32.mrb[0].mxu0
        %v1942 = vadd.f32 0.0, %v1941
        %v1943 = vpop.f32.mrb[0].mxu0
        %1944 = vmatprep.mubr.f32.mxu0 0.0
        %1945 = vmatmul.mubr.f32.gmra.mrb[0].mxu0 %v1781
        %v1946 = vpop.f32.mrb[0].mxu0
        %v1947 = vadd.f32 0.0, %v1946
        %v1948 = vpop.f32.mrb[0].mxu0
        %1949 = vmatprep.mubr.f32.mxu0 0.0
        %1950 = vmatmul.mubr.f32.gmra.mrb[0].mxu0 %v1784
        %v1951 = vpop.f32.mrb[0].mxu0
        %v1952 = vadd.f32 0.0, %v1951
        %v1953 = vpop.f32.mrb[0].mxu0
        %1954 = vmatprep.mubr.f32.mxu0 0.0
        %1955 = vmatmul.mubr.f32.gmra.mrb[0].mxu0 %v1787
        %v1956 = vpop.f32.mrb[0].mxu0
        %v1957 = vadd.f32 0.0, %v1956
        %v1958 = vpop.f32.mrb[0].mxu0
        %1959 = vmatprep.mubr.f32.mxu0 0.0
        %1960 = vmatmul.mubr.f32.gmra.mrb[0].mxu0 %v1790
        %v1961 = vpop.f32.mrb[0].mxu0
        %v1962 = vadd.f32 0.0, %v1961
        %v1963 = vpop.f32.mrb[0].mxu0
        %1964 = vmatprep.mubr.f32.mxu0 0.0
        %1965 = vmatmul.mubr.f32.gmra.mrb[0].mxu0 %v1793
        %v1966 = vpop.f32.mrb[0].mxu0
        %v1967 = vadd.f32 0.0, %v1966
        %v1968 = vpop.f32.mrb[0].mxu0
        %1969 = vmatprep.mubr.f32.mxu0 0.0
        %1970 = vmatmul.mubr.f32.gmra.mrb[0].mxu0 %v1796
        %v1971 = vpop.f32.mrb[0].mxu0
        %v1972 = vadd.f32 0.0, %v1971
        %v1973 = vpop.f32.mrb[0].mxu0
        %1974 = vmatprep.mubr.f32.mxu0 0.0
        %1975 = vmatmul.mubr.f32.gmra.mrb[0].mxu0 %v1799
        %v1976 = vpop.f32.mrb[0].mxu0
        %v1977 = vadd.f32 0.0, %v1976
        %v1978 = vpop.f32.mrb[0].mxu0
        %1979 = vmatprep.mubr.f32.mxu0 0.0
        %1980 = vmatmul.mubr.f32.gmra.mrb[0].mxu0 %v1802
        %v1981 = vpop.f32.mrb[0].mxu0
        %v1982 = vadd.f32 0.0, %v1981
        %v1983 = vpop.f32.mrb[0].mxu0
        %1984 = vmatprep.mubr.f32.mxu0 0.0
        %1985 = vmatmul.mubr.f32.gmra.mrb[0].mxu0 %v1805
        %v1986 = vpop.f32.mrb[0].mxu0
        %v1987 = vadd.f32 0.0, %v1986
        %v1988 = vpop.f32.mrb[0].mxu0
        %1989 = vmatprep.mubr.f32.mxu0 0.0
        %1990 = vmatmul.mubr.f32.gmra.mrb[0].mxu0 %v1808
        %v1991 = vpop.f32.mrb[0].mxu0
        %v1992 = vadd.f32 0.0, %v1991
        %v1993 = vpop.f32.mrb[0].mxu0
        %1994 = vmatprep.mubr.f32.mxu0 0.0
        %1995 = vmatmul.mubr.f32.gmra.mrb[0].mxu0 %v1811
        %v1996 = vpop.f32.mrb[0].mxu0
        %v1997 = vadd.f32 0.0, %v1996
        %v1998 = vpop.f32.mrb[0].mxu0
        %1999 = vmatprep.mubr.f32.mxu0 0.0
        %2000 = vmatmul.mubr.f32.gmra.mrb[0].mxu0 %v1814
        %v2001 = vpop.f32.mrb[0].mxu0
        %v2002 = vadd.f32 0.0, %v2001
        %v2003 = vpop.f32.mrb[0].mxu0
        %2004 = vmatprep.mubr.f32.mxu0 0.0
        %2005 = vmatmul.mubr.f32.gmra.mrb[0].mxu0 %v1817
        %v2006 = vpop.f32.mrb[0].mxu0
        %v2007 = vadd.f32 0.0, %v2006
        %v2008 = vpop.f32.mrb[0].mxu0
        %2009 = vmatprep.mubr.f32.mxu0 0.0
        %2010 = vmatmul.mubr.f32.gmra.mrb[0].mxu0 %v1820
        %v2011 = vpop.f32.mrb[0].mxu0
        %v2012 = vadd.f32 0.0, %v2011
        %v2013 = vpop.f32.mrb[0].mxu0
        %2014 = vmatprep.mubr.f32.mxu0 0.0
        %2015 = vmatmul.mubr.f32.gmra.mrb[0].mxu0 %v1823
        %v2016 = vpop.f32.mrb[0].mxu0
        %v2017 = vadd.f32 0.0, %v2016
        %v2018 = vpop.f32.mrb[0].mxu0
        %2019 = vmatprep.mubr.f32.mxu0 0.0
        %2020 = vmatmul.mubr.f32.gmra.mrb[0].mxu0 %v1826
        %v2021 = vpop.f32.mrb[0].mxu0
        %v2022 = vadd.f32 0.0, %v2021
        %v2023 = vpop.f32.mrb[0].mxu0
        %2024 = vmatprep.mubr.f32.mxu0 0.0
        %2025 = vmatmul.mubr.f32.gmra.mrb[0].mxu0 %v1829
        %v2026 = vpop.f32.mrb[0].mxu0
        %v2027 = vadd.f32 0.0, %v2026
        %v2028 = vpop.f32.mrb[0].mxu0
        %2029 = vmatprep.mubr.f32.mxu0 0.0
        %2030 = vmatmul.mubr.f32.gmra.mrb[0].mxu0 %v1832
        %v2031 = vpop.f32.mrb[0].mxu0
        %v2032 = vadd.f32 0.0, %v2031
        %v2033 = vpop.f32.mrb[0].mxu0
        %2034 = vmatprep.mubr.f32.mxu0 0.0
        %2035 = vmatmul.mubr.f32.gmra.mrb[0].mxu0 %v1835
        %v2036 = vpop.f32.mrb[0].mxu0
        %v2037 = vadd.f32 0.0, %v2036
        %v2038 = vpop.f32.mrb[0].mxu0
        %2039 = vmatprep.mubr.f32.mxu0 0.0
        %2040 = vmatmul.mubr.f32.gmra.mrb[0].mxu0 %v1838
        %v2041 = vpop.f32.mrb[0].mxu0
        %v2042 = vadd.f32 0.0, %v2041
        %v2043 = vpop.f32.mrb[0].mxu0
        %2044 = vmatprep.mubr.f32.mxu0 0.0
        %2045 = vmatmul.mubr.f32.gmra.mrb[0].mxu0 %v1841
        %v2046 = vpop.f32.mrb[0].mxu0
        %v2047 = vadd.f32 0.0, %v2046
        %v2048 = vpop.f32.mrb[0].mxu0
        %2049 = vmatprep.mubr.f32.mxu0 0.0
        %2050 = vmatmul.mubr.f32.gmra.mrb[0].mxu0 %v1844
        %v2051 = vpop.f32.mrb[0].mxu0
        %v2052 = vadd.f32 0.0, %v2051
        %v2053 = vpop.f32.mrb[0].mxu0
        %2054 = vmatprep.mubr.f32.mxu0 0.0
        %2055 = vmatmul.mubr.f32.gmra.mrb[0].mxu0 %v1847
        %v2056 = vpop.f32.mrb[0].mxu0
        %v2057 = vadd.f32 0.0, %v2056
        %v2058 = vpop.f32.mrb[0].mxu0
        %2059 = vmatprep.mubr.f32.mxu0 0.0
        %2060 = vmatmul.mubr.f32.gmra.mrb[0].mxu0 %v1850
        %v2061 = vpop.f32.mrb[0].mxu0
        %v2062 = vadd.f32 0.0, %v2061
        %v2063 = vpop.f32.mrb[0].mxu0
        %2064 = vmatprep.mubr.f32.mxu0 0.0
        %2065 = vmatmul.mubr.f32.gmra.mrb[0].mxu0 %v1853
        %v2066 = vpop.f32.mrb[0].mxu0
        %v2067 = vadd.f32 0.0, %v2066
        %v2068 = vpop.f32.mrb[0].mxu0
        %2069 = vmatprep.mubr.f32.mxu0 0.0
        %2070 = vmatmul.mubr.f32.gmra.mrb[0].mxu0 %v1856
        %v2071 = vpop.f32.mrb[0].mxu0
        %v2072 = vadd.f32 0.0, %v2071
        %v2073 = vpop.f32.mrb[0].mxu0
        %2074 = vmatprep.mubr.f32.mxu0 0.0
        %2075 = vmatmul.mubr.f32.gmra.mrb[0].mxu0 %v1859
        %v2076 = vpop.f32.mrb[0].mxu0
        %v2077 = vadd.f32 0.0, %v2076
        %v2078 = vpop.f32.mrb[0].mxu0
        %2079 = vmatprep.mubr.f32.mxu0 0.0
        %2080 = vmatmul.mubr.f32.gmra.mrb[0].mxu0 %v1862
        %v2081 = vpop.f32.mrb[0].mxu0
        %v2082 = vadd.f32 0.0, %v2081
        %v2083 = vpop.f32.mrb[0].mxu0
        %2084 = vmatprep.mubr.f32.mxu0 0.0
        %2085 = vmatmul.mubr.f32.gmra.mrb[0].mxu0 %v1865
        %v2086 = vpop.f32.mrb[0].mxu0
        %v2087 = vadd.f32 0.0, %v2086
        %v2088 = vpop.f32.mrb[0].mxu0
        %2089 = vmatprep.mubr.f32.mxu0 0.0
        %2090 = vmatmul.mubr.f32.gmra.mrb[0].mxu0 %v1868
        %v2091 = vpop.f32.mrb[0].mxu0
        %v2092 = vadd.f32 0.0, %v2091
        %v2093 = vpop.f32.mrb[0].mxu0
        %2094 = vdwg.mxu0
        %v2095 = vadd.f32 %v1708, %v1937
        %v2096 = vadd.f32 %v1709, %v1942
        %v2097 = vadd.f32 %v1710, %v1947
        %v2098 = vadd.f32 %v1711, %v1952
        %v2099 = vadd.f32 %v1712, %v1957
        %v2100 = vadd.f32 %v1713, %v1962
        %v2101 = vadd.f32 %v1714, %v1967
        %v2102 = vadd.f32 %v1715, %v1972
        %v2103 = vadd.f32 %v1716, %v1977
        %v2104 = vadd.f32 %v1717, %v1982
        %v2105 = vadd.f32 %v1718, %v1987
        %v2106 = vadd.f32 %v1719, %v1992
        %v2107 = vadd.f32 %v1720, %v1997
        %v2108 = vadd.f32 %v1721, %v2002
        %v2109 = vadd.f32 %v1722, %v2007
        %v2110 = vadd.f32 %v1723, %v2012
        %v2111 = vadd.f32 %v1724, %v2017
        %v2112 = vadd.f32 %v1725, %v2022
        %v2113 = vadd.f32 %v1726, %v2027
        %v2114 = vadd.f32 %v1727, %v2032
        %v2115 = vadd.f32 %v1728, %v2037
        %v2116 = vadd.f32 %v1729, %v2042
        %v2117 = vadd.f32 %v1730, %v2047
        %v2118 = vadd.f32 %v1731, %v2052
        %v2119 = vadd.f32 %v1732, %v2057
        %v2120 = vadd.f32 %v1733, %v2062
        %v2121 = vadd.f32 %v1734, %v2067
        %v2122 = vadd.f32 %v1735, %v2072
        %v2123 = vadd.f32 %v1736, %v2077
        %v2124 = vadd.f32 %v1737, %v2082
        %v2125 = vadd.f32 %v1738, %v2087
        %v2126 = vadd.f32 %v1739, %v2092
        %v2127 = vld [vmem:[%s1352 + $0x2] sm:$0xff]
        %v2128 = vld [vmem:[%s1352 + $0xa] sm:$0xff]
        %v2129 = vld [vmem:[%s1352 + $0x1a] sm:$0xff]
        %v2130 = vld [vmem:[%s1352 + $0x22] sm:$0xff]
        %v2131 = vld [vmem:[%s1352 + $0x32] sm:$0xff]
        %v2132 = vld [vmem:[%s1352 + $0x3a] sm:$0xff]
        %v2133 = vld [vmem:[%s1352 + $0x4a] sm:$0xff]
        %v2134 = vld [vmem:[%s1352 + $0x52] sm:$0xff]
        %v2135 = vld [vmem:[%s1352 + $0x62] sm:$0xff]
        %v2136 = vld [vmem:[%s1352 + $0x6a] sm:$0xff]
        %v2137 = vld [vmem:[%s1352 + $0x7a] sm:$0xff]
        %v2138 = vld [vmem:[%s1352 + $0x82] sm:$0xff]
        %v2139 = vld [vmem:[%s1352 + $0x92] sm:$0xff]
        %v2140 = vld [vmem:[%s1352 + $0x9a] sm:$0xff]
        %v2141 = vld [vmem:[%s1352 + $0xaa] sm:$0xff]
        %v2142 = vld [vmem:[%s1352 + $0xb2] sm:$0xff]
        %v2143 = vld [vmem:[%s1352 + $0xc2] sm:$0xff]
        %v2144 = vld [vmem:[%s1352 + $0xca] sm:$0xff]
        %v2145 = vld [vmem:[%s1352 + $0xda] sm:$0xff]
        %v2146 = vld [vmem:[%s1352 + $0xe2] sm:$0xff]
        %v2147 = vld [vmem:[%s1352 + $0xf2] sm:$0xff]
        %v2148 = vld [vmem:[%s1352 + $0xfa] sm:$0xff]
        %v2149 = vld [vmem:[%s1352 + $0x10a] sm:$0xff]
        %v2150 = vld [vmem:[%s1352 + $0x112] sm:$0xff]
        %v2151 = vld [vmem:[%s1352 + $0x122] sm:$0xff]
        %v2152 = vld [vmem:[%s1352 + $0x12a] sm:$0xff]
        %v2153 = vld [vmem:[%s1352 + $0x13a] sm:$0xff]
        %v2154 = vld [vmem:[%s1352 + $0x142] sm:$0xff]
        %v2155 = vld [vmem:[%s1352 + $0x152] sm:$0xff]
        %v2156 = vld [vmem:[%s1352 + $0x15a] sm:$0xff]
        %v2157 = vld [vmem:[%s1352 + $0x16a] sm:$0xff]
        %v2158 = vld [vmem:[%s1352 + $0x172] sm:$0xff]
        %s2159 = scalar_lea.vmem %s248, 40
        %v2160 = vld [vmem:[%s2159] sm:$0xff]
        %v2162 = vsel %vm322, %v2127, 0
        %v2165 = vsel %vm322, %v2128, 0
        %v2168 = vsel %vm322, %v2129, 0
        %v2171 = vsel %vm322, %v2130, 0
        %v2174 = vsel %vm322, %v2131, 0
        %v2177 = vsel %vm322, %v2132, 0
        %v2180 = vsel %vm322, %v2133, 0
        %v2183 = vsel %vm322, %v2134, 0
        %v2186 = vsel %vm322, %v2135, 0
        %v2189 = vsel %vm322, %v2136, 0
        %v2192 = vsel %vm322, %v2137, 0
        %v2195 = vsel %vm322, %v2138, 0
        %v2198 = vsel %vm322, %v2139, 0
        %v2201 = vsel %vm322, %v2140, 0
        %v2204 = vsel %vm322, %v2141, 0
        %v2207 = vsel %vm322, %v2142, 0
        %v2210 = vsel %vm322, %v2143, 0
        %v2213 = vsel %vm322, %v2144, 0
        %v2216 = vsel %vm322, %v2145, 0
        %v2219 = vsel %vm322, %v2146, 0
        %v2222 = vsel %vm322, %v2147, 0
        %v2225 = vsel %vm322, %v2148, 0
        %v2228 = vsel %vm322, %v2149, 0
        %v2231 = vsel %vm322, %v2150, 0
        %v2234 = vsel %vm322, %v2151, 0
        %v2237 = vsel %vm322, %v2152, 0
        %v2240 = vsel %vm322, %v2153, 0
        %v2243 = vsel %vm322, %v2154, 0
        %v2246 = vsel %vm322, %v2155, 0
        %v2249 = vsel %vm322, %v2156, 0
        %v2252 = vsel %vm322, %v2157, 0
        %v2255 = vsel %vm322, %v2158, 0
        %2257 = vmatprep.subr.mxu0 0.0
        %2258 = vmatpush1.msra.mxu0 %v2160
        %2259 = vmatprep.subr.mxu0 0.0
        %2260 = vmatpush1.msra.mxu0 0.0
        %2261 = vmatprep.subr.mxu0 0.0
        %2262 = vmatpush1.msra.mxu0 0.0
        %2263 = vmatprep.subr.mxu0 0.0
        %2264 = vmatpush1.msra.mxu0 0.0
        %2265 = vmatprep.subr.mxu0 0.0
        %2266 = vmatpush1.msra.mxu0 0.0
        %2267 = vmatprep.subr.mxu0 0.0
        %2268 = vmatpush1.msra.mxu0 0.0
        %2269 = vmatprep.subr.mxu0 0.0
        %2270 = vmatpush1.msra.mxu0 0.0
        %2271 = vmatprep.subr.mxu0 0.0
        %2272 = vmatpush1.msra.mxu0 0.0
        %2273 = vmatprep.subr.mxu0 0.0
        %2274 = vmatpush1.msra.mxu0 0.0
        %2275 = vmatprep.subr.mxu0 0.0
        %2276 = vmatpush1.msra.mxu0 0.0
        %2277 = vmatprep.subr.mxu0 0.0
        %2278 = vmatpush1.msra.mxu0 0.0
        %2279 = vmatprep.subr.mxu0 0.0
        %2280 = vmatpush1.msra.mxu0 0.0
        %2281 = vmatprep.subr.mxu0 0.0
        %2282 = vmatpush1.msra.mxu0 0.0
        %2283 = vmatprep.subr.mxu0 0.0
        %2284 = vmatpush1.msra.mxu0 0.0
        %2285 = vmatprep.subr.mxu0 0.0
        %2286 = vmatpush1.msra.mxu0 0.0
        %2287 = vmatprep.subr.mxu0 0.0
        %2288 = vmatpush1.msra.mxu0 0.0
        %2289 = vmatprep.subr.mxu0 0.0
        %2290 = vmatpush1.msra.mxu0 0.0
        %2291 = vmatprep.subr.mxu0 0.0
        %2292 = vmatpush1.msra.mxu0 0.0
        %2293 = vmatprep.subr.mxu0 0.0
        %2294 = vmatpush1.msra.mxu0 0.0
        %2295 = vmatprep.subr.mxu0 0.0
        %2296 = vmatpush1.msra.mxu0 0.0
        %2297 = vmatprep.subr.mxu0 0.0
        %2298 = vmatpush1.msra.mxu0 0.0
        %2299 = vmatprep.subr.mxu0 0.0
        %2300 = vmatpush1.msra.mxu0 0.0
        %2301 = vmatprep.subr.mxu0 0.0
        %2302 = vmatpush1.msra.mxu0 0.0
        %2303 = vmatprep.subr.mxu0 0.0
        %2304 = vmatpush1.msra.mxu0 0.0
        %2305 = vmatprep.subr.mxu0 0.0
        %2306 = vmatpush1.msra.mxu0 0.0
        %2307 = vmatprep.subr.mxu0 0.0
        %2308 = vmatpush1.msra.mxu0 0.0
        %2309 = vmatprep.subr.mxu0 0.0
        %2310 = vmatpush1.msra.mxu0 0.0
        %2311 = vmatprep.subr.mxu0 0.0
        %2312 = vmatpush1.msra.mxu0 0.0
        %2313 = vmatprep.subr.mxu0 0.0
        %2314 = vmatpush1.msra.mxu0 0.0
        %2315 = vmatprep.subr.mxu0 0.0
        %2316 = vmatpush1.msra.mxu0 0.0
        %2317 = vmatprep.subr.mxu0 0.0
        %2318 = vmatpush1.msra.mxu0 0.0
        %2319 = vmatprep.subr.mxu0 0.0
        %2320 = vmatpush1.msra.mxu0 0.0
        %2321 = vmatprep.mubr.f32.mxu0 0.0
        %2322 = vmatmul.mubr.f32.gmra.mrb[0].mxu0 %v2162
        %v2323 = vpop.f32.mrb[0].mxu0
        %v2324 = vadd.f32 0.0, %v2323
        %v2325 = vpop.f32.mrb[0].mxu0
        %2326 = vmatprep.mubr.f32.mxu0 0.0
        %2327 = vmatmul.mubr.f32.gmra.mrb[0].mxu0 %v2165
        %v2328 = vpop.f32.mrb[0].mxu0
        %v2329 = vadd.f32 0.0, %v2328
        %v2330 = vpop.f32.mrb[0].mxu0
        %2331 = vmatprep.mubr.f32.mxu0 0.0
        %2332 = vmatmul.mubr.f32.gmra.mrb[0].mxu0 %v2168
        %v2333 = vpop.f32.mrb[0].mxu0
        %v2334 = vadd.f32 0.0, %v2333
        %v2335 = vpop.f32.mrb[0].mxu0
        %2336 = vmatprep.mubr.f32.mxu0 0.0
        %2337 = vmatmul.mubr.f32.gmra.mrb[0].mxu0 %v2171
        %v2338 = vpop.f32.mrb[0].mxu0
        %v2339 = vadd.f32 0.0, %v2338
        %v2340 = vpop.f32.mrb[0].mxu0
        %2341 = vmatprep.mubr.f32.mxu0 0.0
        %2342 = vmatmul.mubr.f32.gmra.mrb[0].mxu0 %v2174
        %v2343 = vpop.f32.mrb[0].mxu0
        %v2344 = vadd.f32 0.0, %v2343
        %v2345 = vpop.f32.mrb[0].mxu0
        %2346 = vmatprep.mubr.f32.mxu0 0.0
        %2347 = vmatmul.mubr.f32.gmra.mrb[0].mxu0 %v2177
        %v2348 = vpop.f32.mrb[0].mxu0
        %v2349 = vadd.f32 0.0, %v2348
        %v2350 = vpop.f32.mrb[0].mxu0
        %2351 = vmatprep.mubr.f32.mxu0 0.0
        %2352 = vmatmul.mubr.f32.gmra.mrb[0].mxu0 %v2180
        %v2353 = vpop.f32.mrb[0].mxu0
        %v2354 = vadd.f32 0.0, %v2353
        %v2355 = vpop.f32.mrb[0].mxu0
        %2356 = vmatprep.mubr.f32.mxu0 0.0
        %2357 = vmatmul.mubr.f32.gmra.mrb[0].mxu0 %v2183
        %v2358 = vpop.f32.mrb[0].mxu0
        %v2359 = vadd.f32 0.0, %v2358
        %v2360 = vpop.f32.mrb[0].mxu0
        %2361 = vmatprep.mubr.f32.mxu0 0.0
        %2362 = vmatmul.mubr.f32.gmra.mrb[0].mxu0 %v2186
        %v2363 = vpop.f32.mrb[0].mxu0
        %v2364 = vadd.f32 0.0, %v2363
        %v2365 = vpop.f32.mrb[0].mxu0
        %2366 = vmatprep.mubr.f32.mxu0 0.0
        %2367 = vmatmul.mubr.f32.gmra.mrb[0].mxu0 %v2189
        %v2368 = vpop.f32.mrb[0].mxu0
        %v2369 = vadd.f32 0.0, %v2368
        %v2370 = vpop.f32.mrb[0].mxu0
        %2371 = vmatprep.mubr.f32.mxu0 0.0
        %2372 = vmatmul.mubr.f32.gmra.mrb[0].mxu0 %v2192
        %v2373 = vpop.f32.mrb[0].mxu0
        %v2374 = vadd.f32 0.0, %v2373
        %v2375 = vpop.f32.mrb[0].mxu0
        %2376 = vmatprep.mubr.f32.mxu0 0.0
        %2377 = vmatmul.mubr.f32.gmra.mrb[0].mxu0 %v2195
        %v2378 = vpop.f32.mrb[0].mxu0
        %v2379 = vadd.f32 0.0, %v2378
        %v2380 = vpop.f32.mrb[0].mxu0
        %2381 = vmatprep.mubr.f32.mxu0 0.0
        %2382 = vmatmul.mubr.f32.gmra.mrb[0].mxu0 %v2198
        %v2383 = vpop.f32.mrb[0].mxu0
        %v2384 = vadd.f32 0.0, %v2383
        %v2385 = vpop.f32.mrb[0].mxu0
        %2386 = vmatprep.mubr.f32.mxu0 0.0
        %2387 = vmatmul.mubr.f32.gmra.mrb[0].mxu0 %v2201
        %v2388 = vpop.f32.mrb[0].mxu0
        %v2389 = vadd.f32 0.0, %v2388
        %v2390 = vpop.f32.mrb[0].mxu0
        %2391 = vmatprep.mubr.f32.mxu0 0.0
        %2392 = vmatmul.mubr.f32.gmra.mrb[0].mxu0 %v2204
        %v2393 = vpop.f32.mrb[0].mxu0
        %v2394 = vadd.f32 0.0, %v2393
        %v2395 = vpop.f32.mrb[0].mxu0
        %2396 = vmatprep.mubr.f32.mxu0 0.0
        %2397 = vmatmul.mubr.f32.gmra.mrb[0].mxu0 %v2207
        %v2398 = vpop.f32.mrb[0].mxu0
        %v2399 = vadd.f32 0.0, %v2398
        %v2400 = vpop.f32.mrb[0].mxu0
        %2401 = vmatprep.mubr.f32.mxu0 0.0
        %2402 = vmatmul.mubr.f32.gmra.mrb[0].mxu0 %v2210
        %v2403 = vpop.f32.mrb[0].mxu0
        %v2404 = vadd.f32 0.0, %v2403
        %v2405 = vpop.f32.mrb[0].mxu0
        %2406 = vmatprep.mubr.f32.mxu0 0.0
        %2407 = vmatmul.mubr.f32.gmra.mrb[0].mxu0 %v2213
        %v2408 = vpop.f32.mrb[0].mxu0
        %v2409 = vadd.f32 0.0, %v2408
        %v2410 = vpop.f32.mrb[0].mxu0
        %2411 = vmatprep.mubr.f32.mxu0 0.0
        %2412 = vmatmul.mubr.f32.gmra.mrb[0].mxu0 %v2216
        %v2413 = vpop.f32.mrb[0].mxu0
        %v2414 = vadd.f32 0.0, %v2413
        %v2415 = vpop.f32.mrb[0].mxu0
        %2416 = vmatprep.mubr.f32.mxu0 0.0
        %2417 = vmatmul.mubr.f32.gmra.mrb[0].mxu0 %v2219
        %v2418 = vpop.f32.mrb[0].mxu0
        %v2419 = vadd.f32 0.0, %v2418
        %v2420 = vpop.f32.mrb[0].mxu0
        %2421 = vmatprep.mubr.f32.mxu0 0.0
        %2422 = vmatmul.mubr.f32.gmra.mrb[0].mxu0 %v2222
        %v2423 = vpop.f32.mrb[0].mxu0
        %v2424 = vadd.f32 0.0, %v2423
        %v2425 = vpop.f32.mrb[0].mxu0
        %2426 = vmatprep.mubr.f32.mxu0 0.0
        %2427 = vmatmul.mubr.f32.gmra.mrb[0].mxu0 %v2225
        %v2428 = vpop.f32.mrb[0].mxu0
        %v2429 = vadd.f32 0.0, %v2428
        %v2430 = vpop.f32.mrb[0].mxu0
        %2431 = vmatprep.mubr.f32.mxu0 0.0
        %2432 = vmatmul.mubr.f32.gmra.mrb[0].mxu0 %v2228
        %v2433 = vpop.f32.mrb[0].mxu0
        %v2434 = vadd.f32 0.0, %v2433
        %v2435 = vpop.f32.mrb[0].mxu0
        %2436 = vmatprep.mubr.f32.mxu0 0.0
        %2437 = vmatmul.mubr.f32.gmra.mrb[0].mxu0 %v2231
        %v2438 = vpop.f32.mrb[0].mxu0
        %v2439 = vadd.f32 0.0, %v2438
        %v2440 = vpop.f32.mrb[0].mxu0
        %2441 = vmatprep.mubr.f32.mxu0 0.0
        %2442 = vmatmul.mubr.f32.gmra.mrb[0].mxu0 %v2234
        %v2443 = vpop.f32.mrb[0].mxu0
        %v2444 = vadd.f32 0.0, %v2443
        %v2445 = vpop.f32.mrb[0].mxu0
        %2446 = vmatprep.mubr.f32.mxu0 0.0
        %2447 = vmatmul.mubr.f32.gmra.mrb[0].mxu0 %v2237
        %v2448 = vpop.f32.mrb[0].mxu0
        %v2449 = vadd.f32 0.0, %v2448
        %v2450 = vpop.f32.mrb[0].mxu0
        %2451 = vmatprep.mubr.f32.mxu0 0.0
        %2452 = vmatmul.mubr.f32.gmra.mrb[0].mxu0 %v2240
        %v2453 = vpop.f32.mrb[0].mxu0
        %v2454 = vadd.f32 0.0, %v2453
        %v2455 = vpop.f32.mrb[0].mxu0
        %2456 = vmatprep.mubr.f32.mxu0 0.0
        %2457 = vmatmul.mubr.f32.gmra.mrb[0].mxu0 %v2243
        %v2458 = vpop.f32.mrb[0].mxu0
        %v2459 = vadd.f32 0.0, %v2458
        %v2460 = vpop.f32.mrb[0].mxu0
        %2461 = vmatprep.mubr.f32.mxu0 0.0
        %2462 = vmatmul.mubr.f32.gmra.mrb[0].mxu0 %v2246
        %v2463 = vpop.f32.mrb[0].mxu0
        %v2464 = vadd.f32 0.0, %v2463
        %v2465 = vpop.f32.mrb[0].mxu0
        %2466 = vmatprep.mubr.f32.mxu0 0.0
        %2467 = vmatmul.mubr.f32.gmra.mrb[0].mxu0 %v2249
        %v2468 = vpop.f32.mrb[0].mxu0
        %v2469 = vadd.f32 0.0, %v2468
        %v2470 = vpop.f32.mrb[0].mxu0
        %2471 = vmatprep.mubr.f32.mxu0 0.0
        %2472 = vmatmul.mubr.f32.gmra.mrb[0].mxu0 %v2252
        %v2473 = vpop.f32.mrb[0].mxu0
        %v2474 = vadd.f32 0.0, %v2473
        %v2475 = vpop.f32.mrb[0].mxu0
        %2476 = vmatprep.mubr.f32.mxu0 0.0
        %2477 = vmatmul.mubr.f32.gmra.mrb[0].mxu0 %v2255
        %v2478 = vpop.f32.mrb[0].mxu0
        %v2479 = vadd.f32 0.0, %v2478
        %v2480 = vpop.f32.mrb[0].mxu0
        %2481 = vdwg.mxu0
        %v2482 = vadd.f32 %v2095, %v2324
        %v2483 = vadd.f32 %v2096, %v2329
        %v2484 = vadd.f32 %v2097, %v2334
        %v2485 = vadd.f32 %v2098, %v2339
        %v2486 = vadd.f32 %v2099, %v2344
        %v2487 = vadd.f32 %v2100, %v2349
        %v2488 = vadd.f32 %v2101, %v2354
        %v2489 = vadd.f32 %v2102, %v2359
        %v2490 = vadd.f32 %v2103, %v2364
        %v2491 = vadd.f32 %v2104, %v2369
        %v2492 = vadd.f32 %v2105, %v2374
        %v2493 = vadd.f32 %v2106, %v2379
        %v2494 = vadd.f32 %v2107, %v2384
        %v2495 = vadd.f32 %v2108, %v2389
        %v2496 = vadd.f32 %v2109, %v2394
        %v2497 = vadd.f32 %v2110, %v2399
        %v2498 = vadd.f32 %v2111, %v2404
        %v2499 = vadd.f32 %v2112, %v2409
        %v2500 = vadd.f32 %v2113, %v2414
        %v2501 = vadd.f32 %v2114, %v2419
        %v2502 = vadd.f32 %v2115, %v2424
        %v2503 = vadd.f32 %v2116, %v2429
        %v2504 = vadd.f32 %v2117, %v2434
        %v2505 = vadd.f32 %v2118, %v2439
        %v2506 = vadd.f32 %v2119, %v2444
        %v2507 = vadd.f32 %v2120, %v2449
        %v2508 = vadd.f32 %v2121, %v2454
        %v2509 = vadd.f32 %v2122, %v2459
        %v2510 = vadd.f32 %v2123, %v2464
        %v2511 = vadd.f32 %v2124, %v2469
        %v2512 = vadd.f32 %v2125, %v2474
        %v2513 = vadd.f32 %v2126, %v2479
        %s2514 = scalar_lea.vmem %s244, 48
        %v2515 = vld [vmem:[%s2514] sm:$0xff]
        %v2516 = vld [vmem:[%s2514 + $0x8] sm:$0xff]
        %v2517 = vld [vmem:[%s2514 + $0x18] sm:$0xff]
        %v2518 = vld [vmem:[%s2514 + $0x20] sm:$0xff]
        %v2519 = vld [vmem:[%s2514 + $0x30] sm:$0xff]
        %v2520 = vld [vmem:[%s2514 + $0x38] sm:$0xff]
        %v2521 = vld [vmem:[%s2514 + $0x48] sm:$0xff]
        %v2522 = vld [vmem:[%s2514 + $0x50] sm:$0xff]
        %v2523 = vld [vmem:[%s2514 + $0x60] sm:$0xff]
        %v2524 = vld [vmem:[%s2514 + $0x68] sm:$0xff]
        %v2525 = vld [vmem:[%s2514 + $0x78] sm:$0xff]
        %v2526 = vld [vmem:[%s2514 + $0x80] sm:$0xff]
        %v2527 = vld [vmem:[%s2514 + $0x90] sm:$0xff]
        %v2528 = vld [vmem:[%s2514 + $0x98] sm:$0xff]
        %v2529 = vld [vmem:[%s2514 + $0xa8] sm:$0xff]
        %v2530 = vld [vmem:[%s2514 + $0xb0] sm:$0xff]
        %v2531 = vld [vmem:[%s2514 + $0xc0] sm:$0xff]
        %v2532 = vld [vmem:[%s2514 + $0xc8] sm:$0xff]
        %v2533 = vld [vmem:[%s2514 + $0xd8] sm:$0xff]
        %v2534 = vld [vmem:[%s2514 + $0xe0] sm:$0xff]
        %v2535 = vld [vmem:[%s2514 + $0xf0] sm:$0xff]
        %v2536 = vld [vmem:[%s2514 + $0xf8] sm:$0xff]
        %v2537 = vld [vmem:[%s2514 + $0x108] sm:$0xff]
        %v2538 = vld [vmem:[%s2514 + $0x110] sm:$0xff]
        %v2539 = vld [vmem:[%s2514 + $0x120] sm:$0xff]
        %v2540 = vld [vmem:[%s2514 + $0x128] sm:$0xff]
        %v2541 = vld [vmem:[%s2514 + $0x138] sm:$0xff]
        %v2542 = vld [vmem:[%s2514 + $0x140] sm:$0xff]
        %v2543 = vld [vmem:[%s2514 + $0x150] sm:$0xff]
        %v2544 = vld [vmem:[%s2514 + $0x158] sm:$0xff]
        %v2545 = vld [vmem:[%s2514 + $0x168] sm:$0xff]
        %v2546 = vld [vmem:[%s2514 + $0x170] sm:$0xff]
        %s2547 = scalar_lea.vmem %s248, 48
        %v2548 = vld [vmem:[%s2547] sm:$0xff]
        %v2550 = vsel %vm322, %v2515, 0
        %v2553 = vsel %vm322, %v2516, 0
        %v2556 = vsel %vm322, %v2517, 0
        %v2559 = vsel %vm322, %v2518, 0
        %v2562 = vsel %vm322, %v2519, 0
        %v2565 = vsel %vm322, %v2520, 0
        %v2568 = vsel %vm322, %v2521, 0
        %v2571 = vsel %vm322, %v2522, 0
        %v2574 = vsel %vm322, %v2523, 0
        %v2577 = vsel %vm322, %v2524, 0
        %v2580 = vsel %vm322, %v2525, 0
        %v2583 = vsel %vm322, %v2526, 0
        %v2586 = vsel %vm322, %v2527, 0
        %v2589 = vsel %vm322, %v2528, 0
        %v2592 = vsel %vm322, %v2529, 0
        %v2595 = vsel %vm322, %v2530, 0
        %v2598 = vsel %vm322, %v2531, 0
        %v2601 = vsel %vm322, %v2532, 0
        %v2604 = vsel %vm322, %v2533, 0
        %v2607 = vsel %vm322, %v2534, 0
        %v2610 = vsel %vm322, %v2535, 0
        %v2613 = vsel %vm322, %v2536, 0
        %v2616 = vsel %vm322, %v2537, 0
        %v2619 = vsel %vm322, %v2538, 0
        %v2622 = vsel %vm322, %v2539, 0
        %v2625 = vsel %vm322, %v2540, 0
        %v2628 = vsel %vm322, %v2541, 0
        %v2631 = vsel %vm322, %v2542, 0
        %v2634 = vsel %vm322, %v2543, 0
        %v2637 = vsel %vm322, %v2544, 0
        %v2640 = vsel %vm322, %v2545, 0
        %v2643 = vsel %vm322, %v2546, 0
        %2645 = vmatprep.subr.mxu0 0.0
        %2646 = vmatpush1.msra.mxu0 %v2548
        %2647 = vmatprep.subr.mxu0 0.0
        %2648 = vmatpush1.msra.mxu0 0.0
        %2649 = vmatprep.subr.mxu0 0.0
        %2650 = vmatpush1.msra.mxu0 0.0
        %2651 = vmatprep.subr.mxu0 0.0
        %2652 = vmatpush1.msra.mxu0 0.0
        %2653 = vmatprep.subr.mxu0 0.0
        %2654 = vmatpush1.msra.mxu0 0.0
        %2655 = vmatprep.subr.mxu0 0.0
        %2656 = vmatpush1.msra.mxu0 0.0
        %2657 = vmatprep.subr.mxu0 0.0
        %2658 = vmatpush1.msra.mxu0 0.0
        %2659 = vmatprep.subr.mxu0 0.0
        %2660 = vmatpush1.msra.mxu0 0.0
        %2661 = vmatprep.subr.mxu0 0.0
        %2662 = vmatpush1.msra.mxu0 0.0
        %2663 = vmatprep.subr.mxu0 0.0
        %2664 = vmatpush1.msra.mxu0 0.0
        %2665 = vmatprep.subr.mxu0 0.0
        %2666 = vmatpush1.msra.mxu0 0.0
        %2667 = vmatprep.subr.mxu0 0.0
        %2668 = vmatpush1.msra.mxu0 0.0
        %2669 = vmatprep.subr.mxu0 0.0
        %2670 = vmatpush1.msra.mxu0 0.0
        %2671 = vmatprep.subr.mxu0 0.0
        %2672 = vmatpush1.msra.mxu0 0.0
        %2673 = vmatprep.subr.mxu0 0.0
        %2674 = vmatpush1.msra.mxu0 0.0
        %2675 = vmatprep.subr.mxu0 0.0
        %2676 = vmatpush1.msra.mxu0 0.0
        %2677 = vmatprep.subr.mxu0 0.0
        %2678 = vmatpush1.msra.mxu0 0.0
        %2679 = vmatprep.subr.mxu0 0.0
        %2680 = vmatpush1.msra.mxu0 0.0
        %2681 = vmatprep.subr.mxu0 0.0
        %2682 = vmatpush1.msra.mxu0 0.0
        %2683 = vmatprep.subr.mxu0 0.0
        %2684 = vmatpush1.msra.mxu0 0.0
        %2685 = vmatprep.subr.mxu0 0.0
        %2686 = vmatpush1.msra.mxu0 0.0
        %2687 = vmatprep.subr.mxu0 0.0
        %2688 = vmatpush1.msra.mxu0 0.0
        %2689 = vmatprep.subr.mxu0 0.0
        %2690 = vmatpush1.msra.mxu0 0.0
        %2691 = vmatprep.subr.mxu0 0.0
        %2692 = vmatpush1.msra.mxu0 0.0
        %2693 = vmatprep.subr.mxu0 0.0
        %2694 = vmatpush1.msra.mxu0 0.0
        %2695 = vmatprep.subr.mxu0 0.0
        %2696 = vmatpush1.msra.mxu0 0.0
        %2697 = vmatprep.subr.mxu0 0.0
        %2698 = vmatpush1.msra.mxu0 0.0
        %2699 = vmatprep.subr.mxu0 0.0
        %2700 = vmatpush1.msra.mxu0 0.0
        %2701 = vmatprep.subr.mxu0 0.0
        %2702 = vmatpush1.msra.mxu0 0.0
        %2703 = vmatprep.subr.mxu0 0.0
        %2704 = vmatpush1.msra.mxu0 0.0
        %2705 = vmatprep.subr.mxu0 0.0
        %2706 = vmatpush1.msra.mxu0 0.0
        %2707 = vmatprep.subr.mxu0 0.0
        %2708 = vmatpush1.msra.mxu0 0.0
        %2709 = vmatprep.mubr.f32.mxu0 0.0
        %2710 = vmatmul.mubr.f32.gmra.mrb[0].mxu0 %v2550
        %v2711 = vpop.f32.mrb[0].mxu0
        %v2712 = vadd.f32 0.0, %v2711
        %v2713 = vpop.f32.mrb[0].mxu0
        %2714 = vmatprep.mubr.f32.mxu0 0.0
        %2715 = vmatmul.mubr.f32.gmra.mrb[0].mxu0 %v2553
        %v2716 = vpop.f32.mrb[0].mxu0
        %v2717 = vadd.f32 0.0, %v2716
        %v2718 = vpop.f32.mrb[0].mxu0
        %2719 = vmatprep.mubr.f32.mxu0 0.0
        %2720 = vmatmul.mubr.f32.gmra.mrb[0].mxu0 %v2556
        %v2721 = vpop.f32.mrb[0].mxu0
        %v2722 = vadd.f32 0.0, %v2721
        %v2723 = vpop.f32.mrb[0].mxu0
        %2724 = vmatprep.mubr.f32.mxu0 0.0
        %2725 = vmatmul.mubr.f32.gmra.mrb[0].mxu0 %v2559
        %v2726 = vpop.f32.mrb[0].mxu0
        %v2727 = vadd.f32 0.0, %v2726
        %v2728 = vpop.f32.mrb[0].mxu0
        %2729 = vmatprep.mubr.f32.mxu0 0.0
        %2730 = vmatmul.mubr.f32.gmra.mrb[0].mxu0 %v2562
        %v2731 = vpop.f32.mrb[0].mxu0
        %v2732 = vadd.f32 0.0, %v2731
        %v2733 = vpop.f32.mrb[0].mxu0
        %2734 = vmatprep.mubr.f32.mxu0 0.0
        %2735 = vmatmul.mubr.f32.gmra.mrb[0].mxu0 %v2565
        %v2736 = vpop.f32.mrb[0].mxu0
        %v2737 = vadd.f32 0.0, %v2736
        %v2738 = vpop.f32.mrb[0].mxu0
        %2739 = vmatprep.mubr.f32.mxu0 0.0
        %2740 = vmatmul.mubr.f32.gmra.mrb[0].mxu0 %v2568
        %v2741 = vpop.f32.mrb[0].mxu0
        %v2742 = vadd.f32 0.0, %v2741
        %v2743 = vpop.f32.mrb[0].mxu0
        %2744 = vmatprep.mubr.f32.mxu0 0.0
        %2745 = vmatmul.mubr.f32.gmra.mrb[0].mxu0 %v2571
        %v2746 = vpop.f32.mrb[0].mxu0
        %v2747 = vadd.f32 0.0, %v2746
        %v2748 = vpop.f32.mrb[0].mxu0
        %2749 = vmatprep.mubr.f32.mxu0 0.0
        %2750 = vmatmul.mubr.f32.gmra.mrb[0].mxu0 %v2574
        %v2751 = vpop.f32.mrb[0].mxu0
        %v2752 = vadd.f32 0.0, %v2751
        %v2753 = vpop.f32.mrb[0].mxu0
        %2754 = vmatprep.mubr.f32.mxu0 0.0
        %2755 = vmatmul.mubr.f32.gmra.mrb[0].mxu0 %v2577
        %v2756 = vpop.f32.mrb[0].mxu0
        %v2757 = vadd.f32 0.0, %v2756
        %v2758 = vpop.f32.mrb[0].mxu0
        %2759 = vmatprep.mubr.f32.mxu0 0.0
        %2760 = vmatmul.mubr.f32.gmra.mrb[0].mxu0 %v2580
        %v2761 = vpop.f32.mrb[0].mxu0
        %v2762 = vadd.f32 0.0, %v2761
        %v2763 = vpop.f32.mrb[0].mxu0
        %2764 = vmatprep.mubr.f32.mxu0 0.0
        %2765 = vmatmul.mubr.f32.gmra.mrb[0].mxu0 %v2583
        %v2766 = vpop.f32.mrb[0].mxu0
        %v2767 = vadd.f32 0.0, %v2766
        %v2768 = vpop.f32.mrb[0].mxu0
        %2769 = vmatprep.mubr.f32.mxu0 0.0
        %2770 = vmatmul.mubr.f32.gmra.mrb[0].mxu0 %v2586
        %v2771 = vpop.f32.mrb[0].mxu0
        %v2772 = vadd.f32 0.0, %v2771
        %v2773 = vpop.f32.mrb[0].mxu0
        %2774 = vmatprep.mubr.f32.mxu0 0.0
        %2775 = vmatmul.mubr.f32.gmra.mrb[0].mxu0 %v2589
        %v2776 = vpop.f32.mrb[0].mxu0
        %v2777 = vadd.f32 0.0, %v2776
        %v2778 = vpop.f32.mrb[0].mxu0
        %2779 = vmatprep.mubr.f32.mxu0 0.0
        %2780 = vmatmul.mubr.f32.gmra.mrb[0].mxu0 %v2592
        %v2781 = vpop.f32.mrb[0].mxu0
        %v2782 = vadd.f32 0.0, %v2781
        %v2783 = vpop.f32.mrb[0].mxu0
        %2784 = vmatprep.mubr.f32.mxu0 0.0
        %2785 = vmatmul.mubr.f32.gmra.mrb[0].mxu0 %v2595
        %v2786 = vpop.f32.mrb[0].mxu0
        %v2787 = vadd.f32 0.0, %v2786
        %v2788 = vpop.f32.mrb[0].mxu0
        %2789 = vmatprep.mubr.f32.mxu0 0.0
        %2790 = vmatmul.mubr.f32.gmra.mrb[0].mxu0 %v2598
        %v2791 = vpop.f32.mrb[0].mxu0
        %v2792 = vadd.f32 0.0, %v2791
        %v2793 = vpop.f32.mrb[0].mxu0
        %2794 = vmatprep.mubr.f32.mxu0 0.0
        %2795 = vmatmul.mubr.f32.gmra.mrb[0].mxu0 %v2601
        %v2796 = vpop.f32.mrb[0].mxu0
        %v2797 = vadd.f32 0.0, %v2796
        %v2798 = vpop.f32.mrb[0].mxu0
        %2799 = vmatprep.mubr.f32.mxu0 0.0
        %2800 = vmatmul.mubr.f32.gmra.mrb[0].mxu0 %v2604
        %v2801 = vpop.f32.mrb[0].mxu0
        %v2802 = vadd.f32 0.0, %v2801
        %v2803 = vpop.f32.mrb[0].mxu0
        %2804 = vmatprep.mubr.f32.mxu0 0.0
        %2805 = vmatmul.mubr.f32.gmra.mrb[0].mxu0 %v2607
        %v2806 = vpop.f32.mrb[0].mxu0
        %v2807 = vadd.f32 0.0, %v2806
        %v2808 = vpop.f32.mrb[0].mxu0
        %2809 = vmatprep.mubr.f32.mxu0 0.0
        %2810 = vmatmul.mubr.f32.gmra.mrb[0].mxu0 %v2610
        %v2811 = vpop.f32.mrb[0].mxu0
        %v2812 = vadd.f32 0.0, %v2811
        %v2813 = vpop.f32.mrb[0].mxu0
        %2814 = vmatprep.mubr.f32.mxu0 0.0
        %2815 = vmatmul.mubr.f32.gmra.mrb[0].mxu0 %v2613
        %v2816 = vpop.f32.mrb[0].mxu0
        %v2817 = vadd.f32 0.0, %v2816
        %v2818 = vpop.f32.mrb[0].mxu0
        %2819 = vmatprep.mubr.f32.mxu0 0.0
        %2820 = vmatmul.mubr.f32.gmra.mrb[0].mxu0 %v2616
        %v2821 = vpop.f32.mrb[0].mxu0
        %v2822 = vadd.f32 0.0, %v2821
        %v2823 = vpop.f32.mrb[0].mxu0
        %2824 = vmatprep.mubr.f32.mxu0 0.0
        %2825 = vmatmul.mubr.f32.gmra.mrb[0].mxu0 %v2619
        %v2826 = vpop.f32.mrb[0].mxu0
        %v2827 = vadd.f32 0.0, %v2826
        %v2828 = vpop.f32.mrb[0].mxu0
        %2829 = vmatprep.mubr.f32.mxu0 0.0
        %2830 = vmatmul.mubr.f32.gmra.mrb[0].mxu0 %v2622
        %v2831 = vpop.f32.mrb[0].mxu0
        %v2832 = vadd.f32 0.0, %v2831
        %v2833 = vpop.f32.mrb[0].mxu0
        %2834 = vmatprep.mubr.f32.mxu0 0.0
        %2835 = vmatmul.mubr.f32.gmra.mrb[0].mxu0 %v2625
        %v2836 = vpop.f32.mrb[0].mxu0
        %v2837 = vadd.f32 0.0, %v2836
        %v2838 = vpop.f32.mrb[0].mxu0
        %2839 = vmatprep.mubr.f32.mxu0 0.0
        %2840 = vmatmul.mubr.f32.gmra.mrb[0].mxu0 %v2628
        %v2841 = vpop.f32.mrb[0].mxu0
        %v2842 = vadd.f32 0.0, %v2841
        %v2843 = vpop.f32.mrb[0].mxu0
        %2844 = vmatprep.mubr.f32.mxu0 0.0
        %2845 = vmatmul.mubr.f32.gmra.mrb[0].mxu0 %v2631
        %v2846 = vpop.f32.mrb[0].mxu0
        %v2847 = vadd.f32 0.0, %v2846
        %v2848 = vpop.f32.mrb[0].mxu0
        %2849 = vmatprep.mubr.f32.mxu0 0.0
        %2850 = vmatmul.mubr.f32.gmra.mrb[0].mxu0 %v2634
        %v2851 = vpop.f32.mrb[0].mxu0
        %v2852 = vadd.f32 0.0, %v2851
        %v2853 = vpop.f32.mrb[0].mxu0
        %2854 = vmatprep.mubr.f32.mxu0 0.0
        %2855 = vmatmul.mubr.f32.gmra.mrb[0].mxu0 %v2637
        %v2856 = vpop.f32.mrb[0].mxu0
        %v2857 = vadd.f32 0.0, %v2856
        %v2858 = vpop.f32.mrb[0].mxu0
        %2859 = vmatprep.mubr.f32.mxu0 0.0
        %2860 = vmatmul.mubr.f32.gmra.mrb[0].mxu0 %v2640
        %v2861 = vpop.f32.mrb[0].mxu0
        %v2862 = vadd.f32 0.0, %v2861
        %v2863 = vpop.f32.mrb[0].mxu0
        %2864 = vmatprep.mubr.f32.mxu0 0.0
        %2865 = vmatmul.mubr.f32.gmra.mrb[0].mxu0 %v2643
        %v2866 = vpop.f32.mrb[0].mxu0
        %v2867 = vadd.f32 0.0, %v2866
        %v2868 = vpop.f32.mrb[0].mxu0
        %2869 = vdwg.mxu0
        %v2870 = vadd.f32 %v2482, %v2712
        %v2871 = vadd.f32 %v2483, %v2717
        %v2872 = vadd.f32 %v2484, %v2722
        %v2873 = vadd.f32 %v2485, %v2727
        %v2874 = vadd.f32 %v2486, %v2732
        %v2875 = vadd.f32 %v2487, %v2737
        %v2876 = vadd.f32 %v2488, %v2742
        %v2877 = vadd.f32 %v2489, %v2747
        %v2878 = vadd.f32 %v2490, %v2752
        %v2879 = vadd.f32 %v2491, %v2757
        %v2880 = vadd.f32 %v2492, %v2762
        %v2881 = vadd.f32 %v2493, %v2767
        %v2882 = vadd.f32 %v2494, %v2772
        %v2883 = vadd.f32 %v2495, %v2777
        %v2884 = vadd.f32 %v2496, %v2782
        %v2885 = vadd.f32 %v2497, %v2787
        %v2886 = vadd.f32 %v2498, %v2792
        %v2887 = vadd.f32 %v2499, %v2797
        %v2888 = vadd.f32 %v2500, %v2802
        %v2889 = vadd.f32 %v2501, %v2807
        %v2890 = vadd.f32 %v2502, %v2812
        %v2891 = vadd.f32 %v2503, %v2817
        %v2892 = vadd.f32 %v2504, %v2822
        %v2893 = vadd.f32 %v2505, %v2827
        %v2894 = vadd.f32 %v2506, %v2832
        %v2895 = vadd.f32 %v2507, %v2837
        %v2896 = vadd.f32 %v2508, %v2842
        %v2897 = vadd.f32 %v2509, %v2847
        %v2898 = vadd.f32 %v2510, %v2852
        %v2899 = vadd.f32 %v2511, %v2857
        %v2900 = vadd.f32 %v2512, %v2862
        %v2901 = vadd.f32 %v2513, %v2867
        %v2902 = vld [vmem:[%s2514 + $0x1] sm:$0xff]
        %v2903 = vld [vmem:[%s2514 + $0x9] sm:$0xff]
        %v2904 = vld [vmem:[%s2514 + $0x19] sm:$0xff]
        %v2905 = vld [vmem:[%s2514 + $0x21] sm:$0xff]
        %v2906 = vld [vmem:[%s2514 + $0x31] sm:$0xff]
        %v2907 = vld [vmem:[%s2514 + $0x39] sm:$0xff]
        %v2908 = vld [vmem:[%s2514 + $0x49] sm:$0xff]
        %v2909 = vld [vmem:[%s2514 + $0x51] sm:$0xff]
        %v2910 = vld [vmem:[%s2514 + $0x61] sm:$0xff]
        %v2911 = vld [vmem:[%s2514 + $0x69] sm:$0xff]
        %v2912 = vld [vmem:[%s2514 + $0x79] sm:$0xff]
        %v2913 = vld [vmem:[%s2514 + $0x81] sm:$0xff]
        %v2914 = vld [vmem:[%s2514 + $0x91] sm:$0xff]
        %v2915 = vld [vmem:[%s2514 + $0x99] sm:$0xff]
        %v2916 = vld [vmem:[%s2514 + $0xa9] sm:$0xff]
        %v2917 = vld [vmem:[%s2514 + $0xb1] sm:$0xff]
        %v2918 = vld [vmem:[%s2514 + $0xc1] sm:$0xff]
        %v2919 = vld [vmem:[%s2514 + $0xc9] sm:$0xff]
        %v2920 = vld [vmem:[%s2514 + $0xd9] sm:$0xff]
        %v2921 = vld [vmem:[%s2514 + $0xe1] sm:$0xff]
        %v2922 = vld [vmem:[%s2514 + $0xf1] sm:$0xff]
        %v2923 = vld [vmem:[%s2514 + $0xf9] sm:$0xff]
        %v2924 = vld [vmem:[%s2514 + $0x109] sm:$0xff]
        %v2925 = vld [vmem:[%s2514 + $0x111] sm:$0xff]
        %v2926 = vld [vmem:[%s2514 + $0x121] sm:$0xff]
        %v2927 = vld [vmem:[%s2514 + $0x129] sm:$0xff]
        %v2928 = vld [vmem:[%s2514 + $0x139] sm:$0xff]
        %v2929 = vld [vmem:[%s2514 + $0x141] sm:$0xff]
        %v2930 = vld [vmem:[%s2514 + $0x151] sm:$0xff]
        %v2931 = vld [vmem:[%s2514 + $0x159] sm:$0xff]
        %v2932 = vld [vmem:[%s2514 + $0x169] sm:$0xff]
        %v2933 = vld [vmem:[%s2514 + $0x171] sm:$0xff]
        %s2934 = scalar_lea.vmem %s248, 56
        %v2935 = vld [vmem:[%s2934] sm:$0xff]
        %v2937 = vsel %vm322, %v2902, 0
        %v2940 = vsel %vm322, %v2903, 0
        %v2943 = vsel %vm322, %v2904, 0
        %v2946 = vsel %vm322, %v2905, 0
        %v2949 = vsel %vm322, %v2906, 0
        %v2952 = vsel %vm322, %v2907, 0
        %v2955 = vsel %vm322, %v2908, 0
        %v2958 = vsel %vm322, %v2909, 0
        %v2961 = vsel %vm322, %v2910, 0
        %v2964 = vsel %vm322, %v2911, 0
        %v2967 = vsel %vm322, %v2912, 0
        %v2970 = vsel %vm322, %v2913, 0
        %v2973 = vsel %vm322, %v2914, 0
        %v2976 = vsel %vm322, %v2915, 0
        %v2979 = vsel %vm322, %v2916, 0
        %v2982 = vsel %vm322, %v2917, 0
        %v2985 = vsel %vm322, %v2918, 0
        %v2988 = vsel %vm322, %v2919, 0
        %v2991 = vsel %vm322, %v2920, 0
        %v2994 = vsel %vm322, %v2921, 0
        %v2997 = vsel %vm322, %v2922, 0
        %v3000 = vsel %vm322, %v2923, 0
        %v3003 = vsel %vm322, %v2924, 0
        %v3006 = vsel %vm322, %v2925, 0
        %v3009 = vsel %vm322, %v2926, 0
        %v3012 = vsel %vm322, %v2927, 0
        %v3015 = vsel %vm322, %v2928, 0
        %v3018 = vsel %vm322, %v2929, 0
        %v3021 = vsel %vm322, %v2930, 0
        %v3024 = vsel %vm322, %v2931, 0
        %v3027 = vsel %vm322, %v2932, 0
        %v3030 = vsel %vm322, %v2933, 0
        %3032 = vmatprep.subr.mxu0 0.0
        %3033 = vmatpush1.msra.mxu0 %v2935
        %3034 = vmatprep.subr.mxu0 0.0
        %3035 = vmatpush1.msra.mxu0 0.0
        %3036 = vmatprep.subr.mxu0 0.0
        %3037 = vmatpush1.msra.mxu0 0.0
        %3038 = vmatprep.subr.mxu0 0.0
        %3039 = vmatpush1.msra.mxu0 0.0
        %3040 = vmatprep.subr.mxu0 0.0
        %3041 = vmatpush1.msra.mxu0 0.0
        %3042 = vmatprep.subr.mxu0 0.0
        %3043 = vmatpush1.msra.mxu0 0.0
        %3044 = vmatprep.subr.mxu0 0.0
        %3045 = vmatpush1.msra.mxu0 0.0
        %3046 = vmatprep.subr.mxu0 0.0
        %3047 = vmatpush1.msra.mxu0 0.0
        %3048 = vmatprep.subr.mxu0 0.0
        %3049 = vmatpush1.msra.mxu0 0.0
        %3050 = vmatprep.subr.mxu0 0.0
        %3051 = vmatpush1.msra.mxu0 0.0
        %3052 = vmatprep.subr.mxu0 0.0
        %3053 = vmatpush1.msra.mxu0 0.0
        %3054 = vmatprep.subr.mxu0 0.0
        %3055 = vmatpush1.msra.mxu0 0.0
        %3056 = vmatprep.subr.mxu0 0.0
        %3057 = vmatpush1.msra.mxu0 0.0
        %3058 = vmatprep.subr.mxu0 0.0
        %3059 = vmatpush1.msra.mxu0 0.0
        %3060 = vmatprep.subr.mxu0 0.0
        %3061 = vmatpush1.msra.mxu0 0.0
        %3062 = vmatprep.subr.mxu0 0.0
        %3063 = vmatpush1.msra.mxu0 0.0
        %3064 = vmatprep.subr.mxu0 0.0
        %3065 = vmatpush1.msra.mxu0 0.0
        %3066 = vmatprep.subr.mxu0 0.0
        %3067 = vmatpush1.msra.mxu0 0.0
        %3068 = vmatprep.subr.mxu0 0.0
        %3069 = vmatpush1.msra.mxu0 0.0
        %3070 = vmatprep.subr.mxu0 0.0
        %3071 = vmatpush1.msra.mxu0 0.0
        %3072 = vmatprep.subr.mxu0 0.0
        %3073 = vmatpush1.msra.mxu0 0.0
        %3074 = vmatprep.subr.mxu0 0.0
        %3075 = vmatpush1.msra.mxu0 0.0
        %3076 = vmatprep.subr.mxu0 0.0
        %3077 = vmatpush1.msra.mxu0 0.0
        %3078 = vmatprep.subr.mxu0 0.0
        %3079 = vmatpush1.msra.mxu0 0.0
        %3080 = vmatprep.subr.mxu0 0.0
        %3081 = vmatpush1.msra.mxu0 0.0
        %3082 = vmatprep.subr.mxu0 0.0
        %3083 = vmatpush1.msra.mxu0 0.0
        %3084 = vmatprep.subr.mxu0 0.0
        %3085 = vmatpush1.msra.mxu0 0.0
        %3086 = vmatprep.subr.mxu0 0.0
        %3087 = vmatpush1.msra.mxu0 0.0
        %3088 = vmatprep.subr.mxu0 0.0
        %3089 = vmatpush1.msra.mxu0 0.0
        %3090 = vmatprep.subr.mxu0 0.0
        %3091 = vmatpush1.msra.mxu0 0.0
        %3092 = vmatprep.subr.mxu0 0.0
        %3093 = vmatpush1.msra.mxu0 0.0
        %3094 = vmatprep.subr.mxu0 0.0
        %3095 = vmatpush1.msra.mxu0 0.0
        %3096 = vmatprep.mubr.f32.mxu0 0.0
        %3097 = vmatmul.mubr.f32.gmra.mrb[0].mxu0 %v2937
        %v3098 = vpop.f32.mrb[0].mxu0
        %v3099 = vadd.f32 0.0, %v3098
        %v3100 = vpop.f32.mrb[0].mxu0
        %3101 = vmatprep.mubr.f32.mxu0 0.0
        %3102 = vmatmul.mubr.f32.gmra.mrb[0].mxu0 %v2940
        %v3103 = vpop.f32.mrb[0].mxu0
        %v3104 = vadd.f32 0.0, %v3103
        %v3105 = vpop.f32.mrb[0].mxu0
        %3106 = vmatprep.mubr.f32.mxu0 0.0
        %3107 = vmatmul.mubr.f32.gmra.mrb[0].mxu0 %v2943
        %v3108 = vpop.f32.mrb[0].mxu0
        %v3109 = vadd.f32 0.0, %v3108
        %v3110 = vpop.f32.mrb[0].mxu0
        %3111 = vmatprep.mubr.f32.mxu0 0.0
        %3112 = vmatmul.mubr.f32.gmra.mrb[0].mxu0 %v2946
        %v3113 = vpop.f32.mrb[0].mxu0
        %v3114 = vadd.f32 0.0, %v3113
        %v3115 = vpop.f32.mrb[0].mxu0
        %3116 = vmatprep.mubr.f32.mxu0 0.0
        %3117 = vmatmul.mubr.f32.gmra.mrb[0].mxu0 %v2949
        %v3118 = vpop.f32.mrb[0].mxu0
        %v3119 = vadd.f32 0.0, %v3118
        %v3120 = vpop.f32.mrb[0].mxu0
        %3121 = vmatprep.mubr.f32.mxu0 0.0
        %3122 = vmatmul.mubr.f32.gmra.mrb[0].mxu0 %v2952
        %v3123 = vpop.f32.mrb[0].mxu0
        %v3124 = vadd.f32 0.0, %v3123
        %v3125 = vpop.f32.mrb[0].mxu0
        %3126 = vmatprep.mubr.f32.mxu0 0.0
        %3127 = vmatmul.mubr.f32.gmra.mrb[0].mxu0 %v2955
        %v3128 = vpop.f32.mrb[0].mxu0
        %v3129 = vadd.f32 0.0, %v3128
        %v3130 = vpop.f32.mrb[0].mxu0
        %3131 = vmatprep.mubr.f32.mxu0 0.0
        %3132 = vmatmul.mubr.f32.gmra.mrb[0].mxu0 %v2958
        %v3133 = vpop.f32.mrb[0].mxu0
        %v3134 = vadd.f32 0.0, %v3133
        %v3135 = vpop.f32.mrb[0].mxu0
        %3136 = vmatprep.mubr.f32.mxu0 0.0
        %3137 = vmatmul.mubr.f32.gmra.mrb[0].mxu0 %v2961
        %v3138 = vpop.f32.mrb[0].mxu0
        %v3139 = vadd.f32 0.0, %v3138
        %v3140 = vpop.f32.mrb[0].mxu0
        %3141 = vmatprep.mubr.f32.mxu0 0.0
        %3142 = vmatmul.mubr.f32.gmra.mrb[0].mxu0 %v2964
        %v3143 = vpop.f32.mrb[0].mxu0
        %v3144 = vadd.f32 0.0, %v3143
        %v3145 = vpop.f32.mrb[0].mxu0
        %3146 = vmatprep.mubr.f32.mxu0 0.0
        %3147 = vmatmul.mubr.f32.gmra.mrb[0].mxu0 %v2967
        %v3148 = vpop.f32.mrb[0].mxu0
        %v3149 = vadd.f32 0.0, %v3148
        %v3150 = vpop.f32.mrb[0].mxu0
        %3151 = vmatprep.mubr.f32.mxu0 0.0
        %3152 = vmatmul.mubr.f32.gmra.mrb[0].mxu0 %v2970
        %v3153 = vpop.f32.mrb[0].mxu0
        %v3154 = vadd.f32 0.0, %v3153
        %v3155 = vpop.f32.mrb[0].mxu0
        %3156 = vmatprep.mubr.f32.mxu0 0.0
        %3157 = vmatmul.mubr.f32.gmra.mrb[0].mxu0 %v2973
        %v3158 = vpop.f32.mrb[0].mxu0
        %v3159 = vadd.f32 0.0, %v3158
        %v3160 = vpop.f32.mrb[0].mxu0
        %3161 = vmatprep.mubr.f32.mxu0 0.0
        %3162 = vmatmul.mubr.f32.gmra.mrb[0].mxu0 %v2976
        %v3163 = vpop.f32.mrb[0].mxu0
        %v3164 = vadd.f32 0.0, %v3163
        %v3165 = vpop.f32.mrb[0].mxu0
        %3166 = vmatprep.mubr.f32.mxu0 0.0
        %3167 = vmatmul.mubr.f32.gmra.mrb[0].mxu0 %v2979
        %v3168 = vpop.f32.mrb[0].mxu0
        %v3169 = vadd.f32 0.0, %v3168
        %v3170 = vpop.f32.mrb[0].mxu0
        %3171 = vmatprep.mubr.f32.mxu0 0.0
        %3172 = vmatmul.mubr.f32.gmra.mrb[0].mxu0 %v2982
        %v3173 = vpop.f32.mrb[0].mxu0
        %v3174 = vadd.f32 0.0, %v3173
        %v3175 = vpop.f32.mrb[0].mxu0
        %3176 = vmatprep.mubr.f32.mxu0 0.0
        %3177 = vmatmul.mubr.f32.gmra.mrb[0].mxu0 %v2985
        %v3178 = vpop.f32.mrb[0].mxu0
        %v3179 = vadd.f32 0.0, %v3178
        %v3180 = vpop.f32.mrb[0].mxu0
        %3181 = vmatprep.mubr.f32.mxu0 0.0
        %3182 = vmatmul.mubr.f32.gmra.mrb[0].mxu0 %v2988
        %v3183 = vpop.f32.mrb[0].mxu0
        %v3184 = vadd.f32 0.0, %v3183
        %v3185 = vpop.f32.mrb[0].mxu0
        %3186 = vmatprep.mubr.f32.mxu0 0.0
        %3187 = vmatmul.mubr.f32.gmra.mrb[0].mxu0 %v2991
        %v3188 = vpop.f32.mrb[0].mxu0
        %v3189 = vadd.f32 0.0, %v3188
        %v3190 = vpop.f32.mrb[0].mxu0
        %3191 = vmatprep.mubr.f32.mxu0 0.0
        %3192 = vmatmul.mubr.f32.gmra.mrb[0].mxu0 %v2994
        %v3193 = vpop.f32.mrb[0].mxu0
        %v3194 = vadd.f32 0.0, %v3193
        %v3195 = vpop.f32.mrb[0].mxu0
        %3196 = vmatprep.mubr.f32.mxu0 0.0
        %3197 = vmatmul.mubr.f32.gmra.mrb[0].mxu0 %v2997
        %v3198 = vpop.f32.mrb[0].mxu0
        %v3199 = vadd.f32 0.0, %v3198
        %v3200 = vpop.f32.mrb[0].mxu0
        %3201 = vmatprep.mubr.f32.mxu0 0.0
        %3202 = vmatmul.mubr.f32.gmra.mrb[0].mxu0 %v3000
        %v3203 = vpop.f32.mrb[0].mxu0
        %v3204 = vadd.f32 0.0, %v3203
        %v3205 = vpop.f32.mrb[0].mxu0
        %3206 = vmatprep.mubr.f32.mxu0 0.0
        %3207 = vmatmul.mubr.f32.gmra.mrb[0].mxu0 %v3003
        %v3208 = vpop.f32.mrb[0].mxu0
        %v3209 = vadd.f32 0.0, %v3208
        %v3210 = vpop.f32.mrb[0].mxu0
        %3211 = vmatprep.mubr.f32.mxu0 0.0
        %3212 = vmatmul.mubr.f32.gmra.mrb[0].mxu0 %v3006
        %v3213 = vpop.f32.mrb[0].mxu0
        %v3214 = vadd.f32 0.0, %v3213
        %v3215 = vpop.f32.mrb[0].mxu0
        %3216 = vmatprep.mubr.f32.mxu0 0.0
        %3217 = vmatmul.mubr.f32.gmra.mrb[0].mxu0 %v3009
        %v3218 = vpop.f32.mrb[0].mxu0
        %v3219 = vadd.f32 0.0, %v3218
        %v3220 = vpop.f32.mrb[0].mxu0
        %3221 = vmatprep.mubr.f32.mxu0 0.0
        %3222 = vmatmul.mubr.f32.gmra.mrb[0].mxu0 %v3012
        %v3223 = vpop.f32.mrb[0].mxu0
        %v3224 = vadd.f32 0.0, %v3223
        %v3225 = vpop.f32.mrb[0].mxu0
        %3226 = vmatprep.mubr.f32.mxu0 0.0
        %3227 = vmatmul.mubr.f32.gmra.mrb[0].mxu0 %v3015
        %v3228 = vpop.f32.mrb[0].mxu0
        %v3229 = vadd.f32 0.0, %v3228
        %v3230 = vpop.f32.mrb[0].mxu0
        %3231 = vmatprep.mubr.f32.mxu0 0.0
        %3232 = vmatmul.mubr.f32.gmra.mrb[0].mxu0 %v3018
        %v3233 = vpop.f32.mrb[0].mxu0
        %v3234 = vadd.f32 0.0, %v3233
        %v3235 = vpop.f32.mrb[0].mxu0
        %3236 = vmatprep.mubr.f32.mxu0 0.0
        %3237 = vmatmul.mubr.f32.gmra.mrb[0].mxu0 %v3021
        %v3238 = vpop.f32.mrb[0].mxu0
        %v3239 = vadd.f32 0.0, %v3238
        %v3240 = vpop.f32.mrb[0].mxu0
        %3241 = vmatprep.mubr.f32.mxu0 0.0
        %3242 = vmatmul.mubr.f32.gmra.mrb[0].mxu0 %v3024
        %v3243 = vpop.f32.mrb[0].mxu0
        %v3244 = vadd.f32 0.0, %v3243
        %v3245 = vpop.f32.mrb[0].mxu0
        %3246 = vmatprep.mubr.f32.mxu0 0.0
        %3247 = vmatmul.mubr.f32.gmra.mrb[0].mxu0 %v3027
        %v3248 = vpop.f32.mrb[0].mxu0
        %v3249 = vadd.f32 0.0, %v3248
        %v3250 = vpop.f32.mrb[0].mxu0
        %3251 = vmatprep.mubr.f32.mxu0 0.0
        %3252 = vmatmul.mubr.f32.gmra.mrb[0].mxu0 %v3030
        %v3253 = vpop.f32.mrb[0].mxu0
        %v3254 = vadd.f32 0.0, %v3253
        %v3255 = vpop.f32.mrb[0].mxu0
        %3256 = vdwg.mxu0
        %v3257 = vadd.f32 %v2870, %v3099
        %v3258 = vadd.f32 %v2871, %v3104
        %v3259 = vadd.f32 %v2872, %v3109
        %v3260 = vadd.f32 %v2873, %v3114
        %v3261 = vadd.f32 %v2874, %v3119
        %v3262 = vadd.f32 %v2875, %v3124
        %v3263 = vadd.f32 %v2876, %v3129
        %v3264 = vadd.f32 %v2877, %v3134
        %v3265 = vadd.f32 %v2878, %v3139
        %v3266 = vadd.f32 %v2879, %v3144
        %v3267 = vadd.f32 %v2880, %v3149
        %v3268 = vadd.f32 %v2881, %v3154
        %v3269 = vadd.f32 %v2882, %v3159
        %v3270 = vadd.f32 %v2883, %v3164
        %v3271 = vadd.f32 %v2884, %v3169
        %v3272 = vadd.f32 %v2885, %v3174
        %v3273 = vadd.f32 %v2886, %v3179
        %v3274 = vadd.f32 %v2887, %v3184
        %v3275 = vadd.f32 %v2888, %v3189
        %v3276 = vadd.f32 %v2889, %v3194
        %v3277 = vadd.f32 %v2890, %v3199
        %v3278 = vadd.f32 %v2891, %v3204
        %v3279 = vadd.f32 %v2892, %v3209
        %v3280 = vadd.f32 %v2893, %v3214
        %v3281 = vadd.f32 %v2894, %v3219
        %v3282 = vadd.f32 %v2895, %v3224
        %v3283 = vadd.f32 %v2896, %v3229
        %v3284 = vadd.f32 %v2897, %v3234
        %v3285 = vadd.f32 %v2898, %v3239
        %v3286 = vadd.f32 %v2899, %v3244
        %v3287 = vadd.f32 %v2900, %v3249
        %v3288 = vadd.f32 %v2901, %v3254
        %v3289 = vld [vmem:[%s2514 + $0x2] sm:$0xff]
        %v3290 = vld [vmem:[%s2514 + $0xa] sm:$0xff]
        %v3291 = vld [vmem:[%s2514 + $0x1a] sm:$0xff]
        %v3292 = vld [vmem:[%s2514 + $0x22] sm:$0xff]
        %v3293 = vld [vmem:[%s2514 + $0x32] sm:$0xff]
        %v3294 = vld [vmem:[%s2514 + $0x3a] sm:$0xff]
        %v3295 = vld [vmem:[%s2514 + $0x4a] sm:$0xff]
        %v3296 = vld [vmem:[%s2514 + $0x52] sm:$0xff]
        %v3297 = vld [vmem:[%s2514 + $0x62] sm:$0xff]
        %v3298 = vld [vmem:[%s2514 + $0x6a] sm:$0xff]
        %v3299 = vld [vmem:[%s2514 + $0x7a] sm:$0xff]
        %v3300 = vld [vmem:[%s2514 + $0x82] sm:$0xff]
        %v3301 = vld [vmem:[%s2514 + $0x92] sm:$0xff]
        %v3302 = vld [vmem:[%s2514 + $0x9a] sm:$0xff]
        %v3303 = vld [vmem:[%s2514 + $0xaa] sm:$0xff]
        %v3304 = vld [vmem:[%s2514 + $0xb2] sm:$0xff]
        %v3305 = vld [vmem:[%s2514 + $0xc2] sm:$0xff]
        %v3306 = vld [vmem:[%s2514 + $0xca] sm:$0xff]
        %v3307 = vld [vmem:[%s2514 + $0xda] sm:$0xff]
        %v3308 = vld [vmem:[%s2514 + $0xe2] sm:$0xff]
        %v3309 = vld [vmem:[%s2514 + $0xf2] sm:$0xff]
        %v3310 = vld [vmem:[%s2514 + $0xfa] sm:$0xff]
        %v3311 = vld [vmem:[%s2514 + $0x10a] sm:$0xff]
        %v3312 = vld [vmem:[%s2514 + $0x112] sm:$0xff]
        %v3313 = vld [vmem:[%s2514 + $0x122] sm:$0xff]
        %v3314 = vld [vmem:[%s2514 + $0x12a] sm:$0xff]
        %v3315 = vld [vmem:[%s2514 + $0x13a] sm:$0xff]
        %v3316 = vld [vmem:[%s2514 + $0x142] sm:$0xff]
        %v3317 = vld [vmem:[%s2514 + $0x152] sm:$0xff]
        %v3318 = vld [vmem:[%s2514 + $0x15a] sm:$0xff]
        %v3319 = vld [vmem:[%s2514 + $0x16a] sm:$0xff]
        %v3320 = vld [vmem:[%s2514 + $0x172] sm:$0xff]
        %s3321 = scalar_lea.vmem %s248, 64
        %v3322 = vld [vmem:[%s3321] sm:$0xff]
        %v3324 = vsel %vm322, %v3289, 0
        %v3327 = vsel %vm322, %v3290, 0
        %v3330 = vsel %vm322, %v3291, 0
        %v3333 = vsel %vm322, %v3292, 0
        %v3336 = vsel %vm322, %v3293, 0
        %v3339 = vsel %vm322, %v3294, 0
        %v3342 = vsel %vm322, %v3295, 0
        %v3345 = vsel %vm322, %v3296, 0
        %v3348 = vsel %vm322, %v3297, 0
        %v3351 = vsel %vm322, %v3298, 0
        %v3354 = vsel %vm322, %v3299, 0
        %v3357 = vsel %vm322, %v3300, 0
        %v3360 = vsel %vm322, %v3301, 0
        %v3363 = vsel %vm322, %v3302, 0
        %v3366 = vsel %vm322, %v3303, 0
        %v3369 = vsel %vm322, %v3304, 0
        %v3372 = vsel %vm322, %v3305, 0
        %v3375 = vsel %vm322, %v3306, 0
        %v3378 = vsel %vm322, %v3307, 0
        %v3381 = vsel %vm322, %v3308, 0
        %v3384 = vsel %vm322, %v3309, 0
        %v3387 = vsel %vm322, %v3310, 0
        %v3390 = vsel %vm322, %v3311, 0
        %v3393 = vsel %vm322, %v3312, 0
        %v3396 = vsel %vm322, %v3313, 0
        %v3399 = vsel %vm322, %v3314, 0
        %v3402 = vsel %vm322, %v3315, 0
        %v3405 = vsel %vm322, %v3316, 0
        %v3408 = vsel %vm322, %v3317, 0
        %v3411 = vsel %vm322, %v3318, 0
        %v3414 = vsel %vm322, %v3319, 0
        %v3417 = vsel %vm322, %v3320, 0
        %3419 = vmatprep.subr.mxu0 0.0
        %3420 = vmatpush1.msra.mxu0 %v3322
        %3421 = vmatprep.subr.mxu0 0.0
        %3422 = vmatpush1.msra.mxu0 0.0
        %3423 = vmatprep.subr.mxu0 0.0
        %3424 = vmatpush1.msra.mxu0 0.0
        %3425 = vmatprep.subr.mxu0 0.0
        %3426 = vmatpush1.msra.mxu0 0.0
        %3427 = vmatprep.subr.mxu0 0.0
        %3428 = vmatpush1.msra.mxu0 0.0
        %3429 = vmatprep.subr.mxu0 0.0
        %3430 = vmatpush1.msra.mxu0 0.0
        %3431 = vmatprep.subr.mxu0 0.0
        %3432 = vmatpush1.msra.mxu0 0.0
        %3433 = vmatprep.subr.mxu0 0.0
        %3434 = vmatpush1.msra.mxu0 0.0
        %3435 = vmatprep.subr.mxu0 0.0
        %3436 = vmatpush1.msra.mxu0 0.0
        %3437 = vmatprep.subr.mxu0 0.0
        %3438 = vmatpush1.msra.mxu0 0.0
        %3439 = vmatprep.subr.mxu0 0.0
        %3440 = vmatpush1.msra.mxu0 0.0
        %3441 = vmatprep.subr.mxu0 0.0
        %3442 = vmatpush1.msra.mxu0 0.0
        %3443 = vmatprep.subr.mxu0 0.0
        %3444 = vmatpush1.msra.mxu0 0.0
        %3445 = vmatprep.subr.mxu0 0.0
        %3446 = vmatpush1.msra.mxu0 0.0
        %3447 = vmatprep.subr.mxu0 0.0
        %3448 = vmatpush1.msra.mxu0 0.0
        %3449 = vmatprep.subr.mxu0 0.0
        %3450 = vmatpush1.msra.mxu0 0.0
        %3451 = vmatprep.subr.mxu0 0.0
        %3452 = vmatpush1.msra.mxu0 0.0
        %3453 = vmatprep.subr.mxu0 0.0
        %3454 = vmatpush1.msra.mxu0 0.0
        %3455 = vmatprep.subr.mxu0 0.0
        %3456 = vmatpush1.msra.mxu0 0.0
        %3457 = vmatprep.subr.mxu0 0.0
        %3458 = vmatpush1.msra.mxu0 0.0
        %3459 = vmatprep.subr.mxu0 0.0
        %3460 = vmatpush1.msra.mxu0 0.0
        %3461 = vmatprep.subr.mxu0 0.0
        %3462 = vmatpush1.msra.mxu0 0.0
        %3463 = vmatprep.subr.mxu0 0.0
        %3464 = vmatpush1.msra.mxu0 0.0
        %3465 = vmatprep.subr.mxu0 0.0
        %3466 = vmatpush1.msra.mxu0 0.0
        %3467 = vmatprep.subr.mxu0 0.0
        %3468 = vmatpush1.msra.mxu0 0.0
        %3469 = vmatprep.subr.mxu0 0.0
        %3470 = vmatpush1.msra.mxu0 0.0
        %3471 = vmatprep.subr.mxu0 0.0
        %3472 = vmatpush1.msra.mxu0 0.0
        %3473 = vmatprep.subr.mxu0 0.0
        %3474 = vmatpush1.msra.mxu0 0.0
        %3475 = vmatprep.subr.mxu0 0.0
        %3476 = vmatpush1.msra.mxu0 0.0
        %3477 = vmatprep.subr.mxu0 0.0
        %3478 = vmatpush1.msra.mxu0 0.0
        %3479 = vmatprep.subr.mxu0 0.0
        %3480 = vmatpush1.msra.mxu0 0.0
        %3481 = vmatprep.subr.mxu0 0.0
        %3482 = vmatpush1.msra.mxu0 0.0
        %3483 = vmatprep.mubr.f32.mxu0 0.0
        %3484 = vmatmul.mubr.f32.gmra.mrb[0].mxu0 %v3324
        %v3485 = vpop.f32.mrb[0].mxu0
        %v3486 = vadd.f32 0.0, %v3485
        %v3487 = vpop.f32.mrb[0].mxu0
        %3488 = vmatprep.mubr.f32.mxu0 0.0
        %3489 = vmatmul.mubr.f32.gmra.mrb[0].mxu0 %v3327
        %v3490 = vpop.f32.mrb[0].mxu0
        %v3491 = vadd.f32 0.0, %v3490
        %v3492 = vpop.f32.mrb[0].mxu0
        %3493 = vmatprep.mubr.f32.mxu0 0.0
        %3494 = vmatmul.mubr.f32.gmra.mrb[0].mxu0 %v3330
        %v3495 = vpop.f32.mrb[0].mxu0
        %v3496 = vadd.f32 0.0, %v3495
        %v3497 = vpop.f32.mrb[0].mxu0
        %3498 = vmatprep.mubr.f32.mxu0 0.0
        %3499 = vmatmul.mubr.f32.gmra.mrb[0].mxu0 %v3333
        %v3500 = vpop.f32.mrb[0].mxu0
        %v3501 = vadd.f32 0.0, %v3500
        %v3502 = vpop.f32.mrb[0].mxu0
        %3503 = vmatprep.mubr.f32.mxu0 0.0
        %3504 = vmatmul.mubr.f32.gmra.mrb[0].mxu0 %v3336
        %v3505 = vpop.f32.mrb[0].mxu0
        %v3506 = vadd.f32 0.0, %v3505
        %v3507 = vpop.f32.mrb[0].mxu0
        %3508 = vmatprep.mubr.f32.mxu0 0.0
        %3509 = vmatmul.mubr.f32.gmra.mrb[0].mxu0 %v3339
        %v3510 = vpop.f32.mrb[0].mxu0
        %v3511 = vadd.f32 0.0, %v3510
        %v3512 = vpop.f32.mrb[0].mxu0
        %3513 = vmatprep.mubr.f32.mxu0 0.0
        %3514 = vmatmul.mubr.f32.gmra.mrb[0].mxu0 %v3342
        %v3515 = vpop.f32.mrb[0].mxu0
        %v3516 = vadd.f32 0.0, %v3515
        %v3517 = vpop.f32.mrb[0].mxu0
        %3518 = vmatprep.mubr.f32.mxu0 0.0
        %3519 = vmatmul.mubr.f32.gmra.mrb[0].mxu0 %v3345
        %v3520 = vpop.f32.mrb[0].mxu0
        %v3521 = vadd.f32 0.0, %v3520
        %v3522 = vpop.f32.mrb[0].mxu0
        %3523 = vmatprep.mubr.f32.mxu0 0.0
        %3524 = vmatmul.mubr.f32.gmra.mrb[0].mxu0 %v3348
        %v3525 = vpop.f32.mrb[0].mxu0
        %v3526 = vadd.f32 0.0, %v3525
        %v3527 = vpop.f32.mrb[0].mxu0
        %3528 = vmatprep.mubr.f32.mxu0 0.0
        %3529 = vmatmul.mubr.f32.gmra.mrb[0].mxu0 %v3351
        %v3530 = vpop.f32.mrb[0].mxu0
        %v3531 = vadd.f32 0.0, %v3530
        %v3532 = vpop.f32.mrb[0].mxu0
        %3533 = vmatprep.mubr.f32.mxu0 0.0
        %3534 = vmatmul.mubr.f32.gmra.mrb[0].mxu0 %v3354
        %v3535 = vpop.f32.mrb[0].mxu0
        %v3536 = vadd.f32 0.0, %v3535
        %v3537 = vpop.f32.mrb[0].mxu0
        %3538 = vmatprep.mubr.f32.mxu0 0.0
        %3539 = vmatmul.mubr.f32.gmra.mrb[0].mxu0 %v3357
        %v3540 = vpop.f32.mrb[0].mxu0
        %v3541 = vadd.f32 0.0, %v3540
        %v3542 = vpop.f32.mrb[0].mxu0
        %3543 = vmatprep.mubr.f32.mxu0 0.0
        %3544 = vmatmul.mubr.f32.gmra.mrb[0].mxu0 %v3360
        %v3545 = vpop.f32.mrb[0].mxu0
        %v3546 = vadd.f32 0.0, %v3545
        %v3547 = vpop.f32.mrb[0].mxu0
        %3548 = vmatprep.mubr.f32.mxu0 0.0
        %3549 = vmatmul.mubr.f32.gmra.mrb[0].mxu0 %v3363
        %v3550 = vpop.f32.mrb[0].mxu0
        %v3551 = vadd.f32 0.0, %v3550
        %v3552 = vpop.f32.mrb[0].mxu0
        %3553 = vmatprep.mubr.f32.mxu0 0.0
        %3554 = vmatmul.mubr.f32.gmra.mrb[0].mxu0 %v3366
        %v3555 = vpop.f32.mrb[0].mxu0
        %v3556 = vadd.f32 0.0, %v3555
        %v3557 = vpop.f32.mrb[0].mxu0
        %3558 = vmatprep.mubr.f32.mxu0 0.0
        %3559 = vmatmul.mubr.f32.gmra.mrb[0].mxu0 %v3369
        %v3560 = vpop.f32.mrb[0].mxu0
        %v3561 = vadd.f32 0.0, %v3560
        %v3562 = vpop.f32.mrb[0].mxu0
        %3563 = vmatprep.mubr.f32.mxu0 0.0
        %3564 = vmatmul.mubr.f32.gmra.mrb[0].mxu0 %v3372
        %v3565 = vpop.f32.mrb[0].mxu0
        %v3566 = vadd.f32 0.0, %v3565
        %v3567 = vpop.f32.mrb[0].mxu0
        %3568 = vmatprep.mubr.f32.mxu0 0.0
        %3569 = vmatmul.mubr.f32.gmra.mrb[0].mxu0 %v3375
        %v3570 = vpop.f32.mrb[0].mxu0
        %v3571 = vadd.f32 0.0, %v3570
        %v3572 = vpop.f32.mrb[0].mxu0
        %3573 = vmatprep.mubr.f32.mxu0 0.0
        %3574 = vmatmul.mubr.f32.gmra.mrb[0].mxu0 %v3378
        %v3575 = vpop.f32.mrb[0].mxu0
        %v3576 = vadd.f32 0.0, %v3575
        %v3577 = vpop.f32.mrb[0].mxu0
        %3578 = vmatprep.mubr.f32.mxu0 0.0
        %3579 = vmatmul.mubr.f32.gmra.mrb[0].mxu0 %v3381
        %v3580 = vpop.f32.mrb[0].mxu0
        %v3581 = vadd.f32 0.0, %v3580
        %v3582 = vpop.f32.mrb[0].mxu0
        %3583 = vmatprep.mubr.f32.mxu0 0.0
        %3584 = vmatmul.mubr.f32.gmra.mrb[0].mxu0 %v3384
        %v3585 = vpop.f32.mrb[0].mxu0
        %v3586 = vadd.f32 0.0, %v3585
        %v3587 = vpop.f32.mrb[0].mxu0
        %3588 = vmatprep.mubr.f32.mxu0 0.0
        %3589 = vmatmul.mubr.f32.gmra.mrb[0].mxu0 %v3387
        %v3590 = vpop.f32.mrb[0].mxu0
        %v3591 = vadd.f32 0.0, %v3590
        %v3592 = vpop.f32.mrb[0].mxu0
        %3593 = vmatprep.mubr.f32.mxu0 0.0
        %3594 = vmatmul.mubr.f32.gmra.mrb[0].mxu0 %v3390
        %v3595 = vpop.f32.mrb[0].mxu0
        %v3596 = vadd.f32 0.0, %v3595
        %v3597 = vpop.f32.mrb[0].mxu0
        %3598 = vmatprep.mubr.f32.mxu0 0.0
        %3599 = vmatmul.mubr.f32.gmra.mrb[0].mxu0 %v3393
        %v3600 = vpop.f32.mrb[0].mxu0
        %v3601 = vadd.f32 0.0, %v3600
        %v3602 = vpop.f32.mrb[0].mxu0
        %3603 = vmatprep.mubr.f32.mxu0 0.0
        %3604 = vmatmul.mubr.f32.gmra.mrb[0].mxu0 %v3396
        %v3605 = vpop.f32.mrb[0].mxu0
        %v3606 = vadd.f32 0.0, %v3605
        %v3607 = vpop.f32.mrb[0].mxu0
        %3608 = vmatprep.mubr.f32.mxu0 0.0
        %3609 = vmatmul.mubr.f32.gmra.mrb[0].mxu0 %v3399
        %v3610 = vpop.f32.mrb[0].mxu0
        %v3611 = vadd.f32 0.0, %v3610
        %v3612 = vpop.f32.mrb[0].mxu0
        %3613 = vmatprep.mubr.f32.mxu0 0.0
        %3614 = vmatmul.mubr.f32.gmra.mrb[0].mxu0 %v3402
        %v3615 = vpop.f32.mrb[0].mxu0
        %v3616 = vadd.f32 0.0, %v3615
        %v3617 = vpop.f32.mrb[0].mxu0
        %3618 = vmatprep.mubr.f32.mxu0 0.0
        %3619 = vmatmul.mubr.f32.gmra.mrb[0].mxu0 %v3405
        %v3620 = vpop.f32.mrb[0].mxu0
        %v3621 = vadd.f32 0.0, %v3620
        %v3622 = vpop.f32.mrb[0].mxu0
        %3623 = vmatprep.mubr.f32.mxu0 0.0
        %3624 = vmatmul.mubr.f32.gmra.mrb[0].mxu0 %v3408
        %v3625 = vpop.f32.mrb[0].mxu0
        %v3626 = vadd.f32 0.0, %v3625
        %v3627 = vpop.f32.mrb[0].mxu0
        %3628 = vmatprep.mubr.f32.mxu0 0.0
        %3629 = vmatmul.mubr.f32.gmra.mrb[0].mxu0 %v3411
        %v3630 = vpop.f32.mrb[0].mxu0
        %v3631 = vadd.f32 0.0, %v3630
        %v3632 = vpop.f32.mrb[0].mxu0
        %3633 = vmatprep.mubr.f32.mxu0 0.0
        %3634 = vmatmul.mubr.f32.gmra.mrb[0].mxu0 %v3414
        %v3635 = vpop.f32.mrb[0].mxu0
        %v3636 = vadd.f32 0.0, %v3635
        %v3637 = vpop.f32.mrb[0].mxu0
        %3638 = vmatprep.mubr.f32.mxu0 0.0
        %3639 = vmatmul.mubr.f32.gmra.mrb[0].mxu0 %v3417
        %v3640 = vpop.f32.mrb[0].mxu0
        %v3641 = vadd.f32 0.0, %v3640
        %v3642 = vpop.f32.mrb[0].mxu0
        %3643 = vdwg.mxu0
        %v3644 = vadd.f32 %v3257, %v3486
        %v3645 = vadd.f32 %v3258, %v3491
        %v3646 = vadd.f32 %v3259, %v3496
        %v3647 = vadd.f32 %v3260, %v3501
        %v3648 = vadd.f32 %v3261, %v3506
        %v3649 = vadd.f32 %v3262, %v3511
        %v3650 = vadd.f32 %v3263, %v3516
        %v3651 = vadd.f32 %v3264, %v3521
        %v3652 = vadd.f32 %v3265, %v3526
        %v3653 = vadd.f32 %v3266, %v3531
        %v3654 = vadd.f32 %v3267, %v3536
        %v3655 = vadd.f32 %v3268, %v3541
        %v3656 = vadd.f32 %v3269, %v3546
        %v3657 = vadd.f32 %v3270, %v3551
        %v3658 = vadd.f32 %v3271, %v3556
        %v3659 = vadd.f32 %v3272, %v3561
        %v3660 = vadd.f32 %v3273, %v3566
        %v3661 = vadd.f32 %v3274, %v3571
        %v3662 = vadd.f32 %v3275, %v3576
        %v3663 = vadd.f32 %v3276, %v3581
        %v3664 = vadd.f32 %v3277, %v3586
        %v3665 = vadd.f32 %v3278, %v3591
        %v3666 = vadd.f32 %v3279, %v3596
        %v3667 = vadd.f32 %v3280, %v3601
        %v3668 = vadd.f32 %v3281, %v3606
        %v3669 = vadd.f32 %v3282, %v3611
        %v3670 = vadd.f32 %v3283, %v3616
        %v3671 = vadd.f32 %v3284, %v3621
        %v3672 = vadd.f32 %v3285, %v3626
        %v3673 = vadd.f32 %v3286, %v3631
        %v3674 = vadd.f32 %v3287, %v3636
        %v3675 = vadd.f32 %v3288, %v3641
        %v3676 = vld [vmem:[%s251] sm:$0x1]
        %v3678 = vlaneseq
        %v3679 = vshrl.u32 %v3678, 7
        %v3680 = vsub.s32 0, %v3679
        %v3681 = vrot.slane %v3676, %v3680
        %v3683 = vmul.f32 %v3644, %v3681
        %v3684 = vmul.f32 %v3645, %v3681
        %v3685 = vmul.f32 %v3646, %v3681
        %v3686 = vmul.f32 %v3647, %v3681
        %v3687 = vmul.f32 %v3648, %v3681
        %v3688 = vmul.f32 %v3649, %v3681
        %v3689 = vmul.f32 %v3650, %v3681
        %v3690 = vmul.f32 %v3651, %v3681
        %v3691 = vmul.f32 %v3652, %v3681
        %v3692 = vmul.f32 %v3653, %v3681
        %v3693 = vmul.f32 %v3654, %v3681
        %v3694 = vmul.f32 %v3655, %v3681
        %v3695 = vmul.f32 %v3656, %v3681
        %v3696 = vmul.f32 %v3657, %v3681
        %v3697 = vmul.f32 %v3658, %v3681
        %v3698 = vmul.f32 %v3659, %v3681
        %v3699 = vmul.f32 %v3660, %v3681
        %v3700 = vmul.f32 %v3661, %v3681
        %v3701 = vmul.f32 %v3662, %v3681
        %v3702 = vmul.f32 %v3663, %v3681
        %v3703 = vmul.f32 %v3664, %v3681
        %v3704 = vmul.f32 %v3665, %v3681
        %v3705 = vmul.f32 %v3666, %v3681
        %v3706 = vmul.f32 %v3667, %v3681
        %v3707 = vmul.f32 %v3668, %v3681
        %v3708 = vmul.f32 %v3669, %v3681
        %v3709 = vmul.f32 %v3670, %v3681
        %v3710 = vmul.f32 %v3671, %v3681
        %v3711 = vmul.f32 %v3672, %v3681
        %v3712 = vmul.f32 %v3673, %v3681
        %v3713 = vmul.f32 %v3674, %v3681
        %v3714 = vmul.f32 %v3675, %v3681
        %v3715 = vld [vmem:[%s254] sm:$0x1]
        %v3717 = vlaneseq
        %v3718 = vshrl.u32 %v3717, 7
        %v3719 = vsub.s32 0, %v3718
        %v3720 = vrot.slane %v3715, %v3719
        %v3722 = vadd.f32 %v3683, %v3720
        %v3723 = vadd.f32 %v3684, %v3720
        %v3724 = vadd.f32 %v3685, %v3720
        %v3725 = vadd.f32 %v3686, %v3720
        %v3726 = vadd.f32 %v3687, %v3720
        %v3727 = vadd.f32 %v3688, %v3720
        %v3728 = vadd.f32 %v3689, %v3720
        %v3729 = vadd.f32 %v3690, %v3720
        %v3730 = vadd.f32 %v3691, %v3720
        %v3731 = vadd.f32 %v3692, %v3720
        %v3732 = vadd.f32 %v3693, %v3720
        %v3733 = vadd.f32 %v3694, %v3720
        %v3734 = vadd.f32 %v3695, %v3720
        %v3735 = vadd.f32 %v3696, %v3720
        %v3736 = vadd.f32 %v3697, %v3720
        %v3737 = vadd.f32 %v3698, %v3720
        %v3738 = vadd.f32 %v3699, %v3720
        %v3739 = vadd.f32 %v3700, %v3720
        %v3740 = vadd.f32 %v3701, %v3720
        %v3741 = vadd.f32 %v3702, %v3720
        %v3742 = vadd.f32 %v3703, %v3720
        %v3743 = vadd.f32 %v3704, %v3720
        %v3744 = vadd.f32 %v3705, %v3720
        %v3745 = vadd.f32 %v3706, %v3720
        %v3746 = vadd.f32 %v3707, %v3720
        %v3747 = vadd.f32 %v3708, %v3720
        %v3748 = vadd.f32 %v3709, %v3720
        %v3749 = vadd.f32 %v3710, %v3720
        %v3750 = vadd.f32 %v3711, %v3720
        %v3751 = vadd.f32 %v3712, %v3720
        %v3752 = vadd.f32 %v3713, %v3720
        %v3753 = vadd.f32 %v3714, %v3720
        %v3754 = vmax.f32 %v3722, 0.0
        %v3755 = vmax.f32 %v3723, 0.0
        %v3756 = vmax.f32 %v3724, 0.0
        %v3757 = vmax.f32 %v3725, 0.0
        %v3758 = vmax.f32 %v3726, 0.0
        %v3759 = vmax.f32 %v3727, 0.0
        %v3760 = vmax.f32 %v3728, 0.0
        %v3761 = vmax.f32 %v3729, 0.0
        %v3762 = vmax.f32 %v3730, 0.0
        %v3763 = vmax.f32 %v3731, 0.0
        %v3764 = vmax.f32 %v3732, 0.0
        %v3765 = vmax.f32 %v3733, 0.0
        %v3766 = vmax.f32 %v3734, 0.0
        %v3767 = vmax.f32 %v3735, 0.0
        %v3768 = vmax.f32 %v3736, 0.0
        %v3769 = vmax.f32 %v3737, 0.0
        %v3770 = vmax.f32 %v3738, 0.0
        %v3771 = vmax.f32 %v3739, 0.0
        %v3772 = vmax.f32 %v3740, 0.0
        %v3773 = vmax.f32 %v3741, 0.0
        %v3774 = vmax.f32 %v3742, 0.0
        %v3775 = vmax.f32 %v3743, 0.0
        %v3776 = vmax.f32 %v3744, 0.0
        %v3777 = vmax.f32 %v3745, 0.0
        %v3778 = vmax.f32 %v3746, 0.0
        %v3779 = vmax.f32 %v3747, 0.0
        %v3780 = vmax.f32 %v3748, 0.0
        %v3781 = vmax.f32 %v3749, 0.0
        %v3782 = vmax.f32 %v3750, 0.0
        %v3783 = vmax.f32 %v3751, 0.0
        %v3784 = vmax.f32 %v3752, 0.0
        %v3785 = vmax.f32 %v3753, 0.0
        %3786 = vst [vmem:[%s239] sm:$0xff] %v3754
        %3787 = vst [vmem:[%s239 + $0x8] sm:$0xff] %v3755
        %3788 = vst [vmem:[%s239 + $0x10] sm:$0xff] %v3756
        %3789 = vst [vmem:[%s239 + $0x18] sm:$0xff] %v3757
        %3790 = vst [vmem:[%s239 + $0x20] sm:$0xff] %v3758
        %3791 = vst [vmem:[%s239 + $0x28] sm:$0xff] %v3759
        %3792 = vst [vmem:[%s239 + $0x30] sm:$0xff] %v3760
        %3793 = vst [vmem:[%s239 + $0x38] sm:$0xff] %v3761
        %3794 = vst [vmem:[%s239 + $0x40] sm:$0xff] %v3762
        %3795 = vst [vmem:[%s239 + $0x48] sm:$0xff] %v3763
        %3796 = vst [vmem:[%s239 + $0x50] sm:$0xff] %v3764
        %3797 = vst [vmem:[%s239 + $0x58] sm:$0xff] %v3765
        %3798 = vst [vmem:[%s239 + $0x60] sm:$0xff] %v3766
        %3799 = vst [vmem:[%s239 + $0x68] sm:$0xff] %v3767
        %3800 = vst [vmem:[%s239 + $0x70] sm:$0xff] %v3768
        %3801 = vst [vmem:[%s239 + $0x78] sm:$0xff] %v3769
        %3802 = vst [vmem:[%s239 + $0x80] sm:$0xff] %v3770
        %3803 = vst [vmem:[%s239 + $0x88] sm:$0xff] %v3771
        %3804 = vst [vmem:[%s239 + $0x90] sm:$0xff] %v3772
        %3805 = vst [vmem:[%s239 + $0x98] sm:$0xff] %v3773
        %3806 = vst [vmem:[%s239 + $0xa0] sm:$0xff] %v3774
        %3807 = vst [vmem:[%s239 + $0xa8] sm:$0xff] %v3775
        %3808 = vst [vmem:[%s239 + $0xb0] sm:$0xff] %v3776
        %3809 = vst [vmem:[%s239 + $0xb8] sm:$0xff] %v3777
        %3810 = vst [vmem:[%s239 + $0xc0] sm:$0xff] %v3778
        %3811 = vst [vmem:[%s239 + $0xc8] sm:$0xff] %v3779
        %3812 = vst [vmem:[%s239 + $0xd0] sm:$0xff] %v3780
        %3813 = vst [vmem:[%s239 + $0xd8] sm:$0xff] %v3781
        %3814 = vst [vmem:[%s239 + $0xe0] sm:$0xff] %v3782
        %3815 = vst [vmem:[%s239 + $0xe8] sm:$0xff] %v3783
        %3816 = vst [vmem:[%s239 + $0xf0] sm:$0xff] %v3784
        %3817 = vst [vmem:[%s239 + $0xf8] sm:$0xff] %v3785
        %s3818 = sand.u32 %s144, 1
        %s3819 = scalar_lea.sflag [#allocation3], %s3818
        %s3820 = sand.u32 %s144, 1
        %s3821 = smul.addr %s3820, 256
        %s3822 = scalar_lea.vmem [#allocation2], %s3821
        // Predicated region
        $region37: #{tpu_custom_call.1} parent=35 // pred_check
          %p3823 = pneg %p154
        $region38: #{tpu_custom_call.1} parent=35 // pred_check_branch
          %3825 = sbr.rel (%p3823) target = $region40
        $region39: #{tpu_custom_call.1} parent=35 // pred_region
          %s3827 = ssub.s32 4096, 4096
          %3828 = vsyncadd %s3819, %s3827
          %s3829 = smul.addr %s22, 32
          %s3830 = sadd.s32 %s23, %s3829
          %s3831 = smul.addr %s3830, 128
          %s3832 = scalar_lea.hbm %s4, %s3831
          %s3833 = sshll.u32 %s3822, 4
          %s3834 = int_to_ptr.vmem [resolvable:$true] %s3833
          %3839 = dma.vmem_to_hbm [thread:$0]  %s3834, 4096, %s3832, %s3819, 128, 128, 8
        $region40: #{tpu_custom_call.1} parent=35 // pred_fallthru
          _
      $region36: #{tpu_custom_call.1} parent=5 // pred_fallthru
        _
      %p3840 = scmp.le.s32.totalorder 2, %s13
      // Predicated region
      $region41: #{tpu_custom_call.1} parent=5 // pred_check
        %p3841 = pneg %p3840
      $region42: #{tpu_custom_call.1} parent=5 // pred_check_branch
        %3843 = sbr.rel (%p3841) target = $region44
      $region43: #{tpu_custom_call.1} parent=5 // pred_region
        %s3844 = ssub.s32 %s13, 2
        // Predicated region
        $region45: #{tpu_custom_call.1} parent=43 // pred_check
          %p3845 = pneg %p160
        $region46: #{tpu_custom_call.1} parent=43 // pred_check_branch
          %3847 = sbr.rel (%p3845) target = $region48
        $region47: #{tpu_custom_call.1} parent=43 // pred_region
          %s3848 = sand.u32 %s145, 1
          %s3849 = scalar_lea.sflag [#allocation3], %s3848
          %s3850 = sand.u32 %s145, 1
          %s3851 = smul.addr %s3850, 256
          %s3852 = scalar_lea.vmem [#allocation2], %s3851
          %3853 = dma.done %s3849, 4096
        $region48: #{tpu_custom_call.1} parent=43 // pred_fallthru
          _
      $region44: #{tpu_custom_call.1} parent=5 // pred_fallthru
        _
    $region6: #{tpu_custom_call.1} parent=1 // loop_footer
      %s17 = sadd.s32 1, %s13
    $region7: #{tpu_custom_call.1} parent=1 // loop_footer_branch
      %12 = sbr.rel target = $region3
    $region8: #{tpu_custom_call.1} parent=1 // loop_exit
      _
    %3854 = vsyncpa [#allocation3], 1
    %s3855 = scalar_lea.sflag [#allocation3], 1
    %3856 = vsyncpa %s3855, 1

</llo_original>
